<compile_context>
chip_gen: v7x
topology: tpu7x:2x2x1
jax: 0.10.0
libtpu: 0.0.40
codegen_flags: <defaults>
</compile_context>

<pallas_src>
import functools

import jax
import jax.numpy as jnp
from jax import lax
from jax.experimental import pallas as pl
from jax.experimental.pallas import tpu as pltpu


# ----------------------------------------------------------------------------
# Fused attention kernel: one grid step == one batch element.
# ----------------------------------------------------------------------------
def _attention_kernel(x_ref, wqkv_ref, wo_ref, bo_ref, o_ref, qkv_ref, ctx_ref, *,
                      heads: int, dim_head: int):
    # x_ref   : (1, n, dim)          activations for this batch element (f32)
    # wqkv_ref: (3*inner, dim) bf16  to_qkv.weight, Q rows pre-scaled by n**-0.5
    # wo_ref  : (dim, inner)   bf16  to_out.weight (nn.Linear "out x in", lane-dense)
    # bo_ref  : (1, dim)       f32   to_out.bias
    # o_ref   : (1, n, dim)          output
    # qkv_ref : (n, 3*inner)   bf16  VMEM scratch holding the fused QKV projection
    # ctx_ref : (n, inner)     bf16  VMEM scratch holding all per-head contexts
    d = dim_head
    inner = heads * d

    # Contract last-with-last: A @ B^T without an explicit transpose op.
    dn_t = (((1,), (1,)), ((), ()))

    xb = x_ref[0].astype(jnp.bfloat16)                                   # (n, dim)

    # ---- fused Q/K/V projections: three full-width K=dim matmuls --------------
    for idx in range(3):                                                 # q, k, v
        w = wqkv_ref[idx * inner:(idx + 1) * inner, :]                   # (inner, dim)
        proj = lax.dot_general(xb, w, dn_t,
                               preferred_element_type=jnp.float32)       # (n, inner)
        # 128-lane aligned, unmasked full-width store into the scratch slab.
        qkv_ref[:, idx * inner:(idx + 1) * inner] = proj.astype(jnp.bfloat16)

    # ---- per-head attention (heads is small -> static unroll) ------------------
    for h in range(heads):
        q = qkv_ref[:, h * d:(h + 1) * d]                                # (n, d) bf16
        k = qkv_ref[:, inner + h * d: inner + (h + 1) * d]               # (n, d) bf16
        v = qkv_ref[:, 2 * inner + h * d: 2 * inner + (h + 1) * d]       # (n, d) bf16

        # Scale already folded into Q weights -> sim is the scaled score matrix.
        sim = lax.dot_general(q, k, dn_t,
                              preferred_element_type=jnp.float32)        # (n, n) f32
        p = jnp.exp(sim - jnp.max(sim, axis=-1, keepdims=True))          # f32
        inv_l = pl.reciprocal(jnp.sum(p, axis=-1, keepdims=True),
                              approx=True)                               # (n, 1) f32

        ctx = jnp.dot(p.astype(jnp.bfloat16), v,
                      preferred_element_type=jnp.float32)                # (n, d) f32
        # Normalise AFTER attn@v (n*d multiplies instead of n*n).
        ctx_ref[:, h * d:(h + 1) * d] = (ctx * inv_l).astype(jnp.bfloat16)

    # ---- fused output projection: one K=inner matmul + bias --------------------
    out = lax.dot_general(ctx_ref[...], wo_ref[...], dn_t,
                          preferred_element_type=jnp.float32)            # (n, dim) f32
    o_ref[0] = (out + bo_ref[...]).astype(o_ref.dtype)


# ----------------------------------------------------------------------------
# Wrapper: one-time weight prep (scale fold + bf16 cast) + pallas_call.
# ----------------------------------------------------------------------------
def attention_pallas(x, w_qkv, w_out, b_out, *, heads: int):
    """Forward of the PyTorch Attention module.

    x     : (B, n, dim) float32
    w_qkv : (3*heads*dim_head, dim)   to_qkv.weight (nn.Linear layout, no bias)
    w_out : (dim, heads*dim_head)     to_out.weight
    b_out : (dim,)                    to_out.bias
    """
    B, n, dim = x.shape
    three_inner, dim_in = w_qkv.shape
    assert dim_in == dim, (dim_in, dim)
    inner = three_inner // 3
    assert 3 * inner == three_inner
    d = inner // heads
    assert heads * d == inner
    assert w_out.shape == (dim, inner), w_out.shape

    # Reference-forward quirk: scale = seq_len ** -0.5 (self.scale is unused).
    # Fold it into the Q rows (one-time, parameter-sized op) so the kernel never
    # multiplies the (n, n) score matrix by a scalar.
    scale = float(n) ** -0.5
    w_qkv_b = w_qkv.at[:inner].multiply(scale).astype(jnp.bfloat16)   # (3*inner, dim)
    w_out_b = w_out.astype(jnp.bfloat16)                              # (dim, inner)
    b_o = b_out.reshape(1, dim).astype(jnp.float32)

    kernel = functools.partial(_attention_kernel, heads=heads, dim_head=d)

    flops = B * (2 * n * dim * (3 * inner)      # QKV projection
                 + heads * 4 * n * n * d        # sim + attn@v
                 + 2 * n * inner * dim)         # output projection
    transcendentals = B * heads * n * n         # exp (reciprocals are negligible)
    bytes_accessed = (4 * B * n * dim * 2                      # x in + out (f32)
                      + 2 * (three_inner * dim + dim * inner)  # bf16 weights
                      + 4 * dim)                               # bias

    return pl.pallas_call(
        kernel,
        out_shape=jax.ShapeDtypeStruct((B, n, dim), x.dtype),
        grid_spec=pltpu.PrefetchScalarGridSpec(
            num_scalar_prefetch=0,
            grid=(B,),
            in_specs=[
                pl.BlockSpec((1, n, dim), lambda b: (b, 0, 0)),           # x: per-batch slab
                pl.BlockSpec((three_inner, dim), lambda b: (0, 0)),       # Wqkv (resident)
                pl.BlockSpec((dim, inner), lambda b: (0, 0)),             # Wout (resident)
                pl.BlockSpec((1, dim), lambda b: (0, 0)),                 # bias (resident)
            ],
            out_specs=pl.BlockSpec((1, n, dim), lambda b: (b, 0, 0)),
            scratch_shapes=[
                pltpu.VMEM((n, three_inner), jnp.bfloat16),               # fused QKV
                pltpu.VMEM((n, inner), jnp.bfloat16),                     # all-head ctx
            ],
        ),
        compiler_params=pltpu.CompilerParams(
            dimension_semantics=("parallel",),
        ),
        cost_estimate=pl.CostEstimate(flops=flops,
                                      transcendentals=transcendentals,
                                      bytes_accessed=bytes_accessed),
    )(x, w_qkv_b, w_out_b, b_o)


# ----------------------------------------------------------------------------
# Pure-JAX reference (mirrors the PyTorch forward exactly, incl. the scale quirk).
# ----------------------------------------------------------------------------
def attention_reference(x, w_qkv, w_out, b_out, *, heads: int):
    B, n, dim = x.shape
    inner = w_qkv.shape[0] // 3
    d = inner // heads
    scale = float(n) ** -0.5

    qkv = x @ w_qkv.T                                   # (B, n, 3*inner)
    q, k, v = jnp.split(qkv, 3, axis=-1)

    def split_heads(t):                                 # 'b n (h d) -> b h n d'
        return t.reshape(B, n, heads, d).transpose(0, 2, 1, 3)

    q, k, v = map(split_heads, (q, k, v))
    sim = jnp.einsum('bhid,bhjd->bhij', q, k) * scale
    attn = jax.nn.softmax(sim, axis=-1)
    out = jnp.einsum('bhij,bhjd->bhid', attn, v)
    out = out.transpose(0, 2, 1, 3).reshape(B, n, inner)  # 'b h n d -> b n (h d)'
    return out @ w_out.T + b_out


# ----------------------------------------------------------------------------
if __name__ == "__main__":
    key = jax.random.PRNGKey(0)
    kx, kqkv, kwo, kbo = jax.random.split(key, 4)

    # Small but lane-dense demo shapes: Attention(dim=128, heads=8, dim_head=16)
    # applied to x of shape (batch=2, seq=128, dim=128).
    batch, seq, dim = 2, 128, 128
    heads, dim_head = 8, 16
    inner = heads * dim_head

    x = jax.random.normal(kx, (batch, seq, dim), jnp.float32)

    # nn.Linear-style init: U(-1/sqrt(fan_in), 1/sqrt(fan_in)).
    bnd_qkv = dim ** -0.5
    w_qkv = jax.random.uniform(kqkv, (3 * inner, dim), jnp.float32, -bnd_qkv, bnd_qkv)
    bnd_out = inner ** -0.5
    w_out = jax.random.uniform(kwo, (dim, inner), jnp.float32, -bnd_out, bnd_out)
    b_out = jax.random.uniform(kbo, (dim,), jnp.float32, -bnd_out, bnd_out)

    out = attention_pallas(x, w_qkv, w_out, b_out, heads=heads)
    out = jax.block_until_ready(out)

    ref = attention_reference(x, w_qkv, w_out, b_out, heads=heads)
    assert out.shape == (batch, seq, dim), out.shape
    # bf16 MXU operands with f32 accumulation vs. the all-f32 reference.
    assert jnp.allclose(out, ref, atol=1e-2, rtol=1e-2), (
        "mismatch, max abs err = %g" % float(jnp.max(jnp.abs(out - ref))))

    print("KERNEL_OK")
</pallas_src>

<mosaic_0001>
module attributes {stable_mosaic.version = 11 : i64} {
  func.func @_attention_kernel(%arg0: i32, %arg1: memref<1x128x128xf32, #tpu.memory_space<vmem>>, %arg2: memref<384x128xbf16, #tpu.memory_space<vmem>>, %arg3: memref<128x128xbf16, #tpu.memory_space<vmem>>, %arg4: memref<1x128xf32, #tpu.memory_space<vmem>>, %arg5: memref<1x128x128xf32, #tpu.memory_space<vmem>>, %arg6: memref<128x384xbf16, #tpu.memory_space<vmem>>, %arg7: memref<128x128xbf16, #tpu.memory_space<vmem>>) attributes {dimension_semantics = [#tpu.dimension_semantics<parallel>], iteration_bounds = array<i64: 2>, scalar_prefetch = 0 : i64, scratch_operands = 2 : i64, tpu.core_type = #tpu.core_type<tc>, window_params = [{transform_indices = @transform_0, window_bounds = array<i64: 1, 128, 128>}, {pipeline_mode = #tpu.pipeline_mode<synchronous>, transform_indices = @transform_1, window_bounds = array<i64: 384, 128>}, {pipeline_mode = #tpu.pipeline_mode<synchronous>, transform_indices = @transform_2, window_bounds = array<i64: 128, 128>}, {pipeline_mode = #tpu.pipeline_mode<synchronous>, transform_indices = @transform_3, window_bounds = array<i64: 1, 128>}, {transform_indices = @transform_4, window_bounds = array<i64: 1, 128, 128>}]} {
    %c0 = arith.constant 0 : index
    %c0_0 = arith.constant 0 : index
    %c0_1 = arith.constant 0 : index
    %0 = vector.load %arg1[%c0, %c0_0, %c0_1] : memref<1x128x128xf32, #tpu.memory_space<vmem>>, vector<1x128x128xf32>
    %1 = vector.shape_cast %0 : vector<1x128x128xf32> to vector<128x128xf32>
    %2 = arith.truncf %1 : vector<128x128xf32> to vector<128x128xbf16>
    %c0_2 = arith.constant 0 : index
    %c0_3 = arith.constant 0 : index
    %3 = vector.load %arg2[%c0_2, %c0_3] : memref<384x128xbf16, #tpu.memory_space<vmem>>, vector<128x128xbf16>
    %cst = arith.constant dense<0.000000e+00> : vector<128x128xf32>
    %4 = tpu.matmul %2, %3, %cst {dimension_numbers = #tpu.dot_dimension_numbers<[1], [1], [0], [0], [0, 0, 1, 0], [], []>} : vector<128x128xbf16>, vector<128x128xbf16>, vector<128x128xf32> -> vector<128x128xf32>
    %5 = arith.truncf %4 : vector<128x128xf32> to vector<128x128xbf16>
    %c0_4 = arith.constant 0 : index
    %c0_5 = arith.constant 0 : index
    %6 = vector.load %arg6[%c0_4, %c0_5] : memref<128x384xbf16, #tpu.memory_space<vmem>>, vector<128x128xbf16>
    tpu.vector_store %arg6[%c0_4, %c0_5], %5 {strides = array<i32>} : memref<128x384xbf16, #tpu.memory_space<vmem>>, vector<128x128xbf16>,
    %c128 = arith.constant 128 : index
    %c0_6 = arith.constant 0 : index
    %7 = vector.load %arg2[%c128, %c0_6] : memref<384x128xbf16, #tpu.memory_space<vmem>>, vector<128x128xbf16>
    %cst_7 = arith.constant dense<0.000000e+00> : vector<128x128xf32>
    %8 = tpu.matmul %2, %7, %cst_7 {dimension_numbers = #tpu.dot_dimension_numbers<[1], [1], [0], [0], [0, 0, 1, 0], [], []>} : vector<128x128xbf16>, vector<128x128xbf16>, vector<128x128xf32> -> vector<128x128xf32>
    %9 = arith.truncf %8 : vector<128x128xf32> to vector<128x128xbf16>
    %c0_8 = arith.constant 0 : index
    %c128_9 = arith.constant 128 : index
    %10 = vector.load %arg6[%c0_8, %c128_9] : memref<128x384xbf16, #tpu.memory_space<vmem>>, vector<128x128xbf16>
    tpu.vector_store %arg6[%c0_8, %c128_9], %9 {strides = array<i32>} : memref<128x384xbf16, #tpu.memory_space<vmem>>, vector<128x128xbf16>,
    %c256 = arith.constant 256 : index
    %c0_10 = arith.constant 0 : index
    %11 = vector.load %arg2[%c256, %c0_10] : memref<384x128xbf16, #tpu.memory_space<vmem>>, vector<128x128xbf16>
    %cst_11 = arith.constant dense<0.000000e+00> : vector<128x128xf32>
    %12 = tpu.matmul %2, %11, %cst_11 {dimension_numbers = #tpu.dot_dimension_numbers<[1], [1], [0], [0], [0, 0, 1, 0], [], []>} : vector<128x128xbf16>, vector<128x128xbf16>, vector<128x128xf32> -> vector<128x128xf32>
    %13 = arith.truncf %12 : vector<128x128xf32> to vector<128x128xbf16>
    %c0_12 = arith.constant 0 : index
    %c256_13 = arith.constant 256 : index
    %14 = vector.load %arg6[%c0_12, %c256_13] : memref<128x384xbf16, #tpu.memory_space<vmem>>, vector<128x128xbf16>
    tpu.vector_store %arg6[%c0_12, %c256_13], %13 {strides = array<i32>} : memref<128x384xbf16, #tpu.memory_space<vmem>>, vector<128x128xbf16>,
    %c0_14 = arith.constant 0 : index
    %c0_15 = arith.constant 0 : index
    %15 = vector.load %arg6[%c0_14, %c0_15] : memref<128x384xbf16, #tpu.memory_space<vmem>>, vector<128x16xbf16>
    %c0_16 = arith.constant 0 : index
    %c128_17 = arith.constant 128 : index
    %16 = vector.load %arg6[%c0_16, %c128_17] : memref<128x384xbf16, #tpu.memory_space<vmem>>, vector<128x16xbf16>
    %c0_18 = arith.constant 0 : index
    %c256_19 = arith.constant 256 : index
    %17 = vector.load %arg6[%c0_18, %c256_19] : memref<128x384xbf16, #tpu.memory_space<vmem>>, vector<128x16xbf16>
    %cst_20 = arith.constant dense<0.000000e+00> : vector<128x128xf32>
    %18 = tpu.matmul %15, %16, %cst_20 {dimension_numbers = #tpu.dot_dimension_numbers<[1], [1], [0], [0], [0, 0, 1, 0], [], []>} : vector<128x16xbf16>, vector<128x16xbf16>, vector<128x128xf32> -> vector<128x128xf32>
    %cst_21 = arith.constant dense<0xFF800000> : vector<128xf32>
    %19 = vector.multi_reduction <maximumf>, %18, %cst_21 [1] : vector<128x128xf32> to vector<128xf32>
    %20 = vector.shape_cast %19 : vector<128xf32> to vector<128x1xf32>
    %21 = vector.broadcast %20 : vector<128x1xf32> to vector<128x128xf32>
    %22 = arith.subf %18, %21 : vector<128x128xf32>
    %23 = math.exp %22 : vector<128x128xf32>
    %cst_22 = arith.constant dense<0.000000e+00> : vector<128xf32>
    %24 = vector.multi_reduction <add>, %23, %cst_22 [1] : vector<128x128xf32> to vector<128xf32>
    %25 = vector.shape_cast %24 : vector<128xf32> to vector<128x1xf32>
    %26 = tpu.reciprocal %25 {approx = true} : vector<128x1xf32> -> vector<128x1xf32>
    %27 = arith.truncf %23 : vector<128x128xf32> to vector<128x128xbf16>
    %cst_23 = arith.constant dense<0.000000e+00> : vector<128x16xf32>
    %28 = tpu.matmul %27, %17, %cst_23 {dimension_numbers = #tpu.dot_dimension_numbers<[1], [0], [0], [1], [0, 0, 1, 1], [], []>} : vector<128x128xbf16>, vector<128x16xbf16>, vector<128x16xf32> -> vector<128x16xf32>
    %29 = vector.broadcast %26 : vector<128x1xf32> to vector<128x16xf32>
    %30 = arith.mulf %28, %29 : vector<128x16xf32>
    %31 = arith.truncf %30 : vector<128x16xf32> to vector<128x16xbf16>
    %c0_24 = arith.constant 0 : index
    %c0_25 = arith.constant 0 : index
    %32 = vector.load %arg7[%c0_24, %c0_25] : memref<128x128xbf16, #tpu.memory_space<vmem>>, vector<128x16xbf16>
    tpu.vector_store %arg7[%c0_24, %c0_25], %31 {strides = array<i32>} : memref<128x128xbf16, #tpu.memory_space<vmem>>, vector<128x16xbf16>,
    %c0_26 = arith.constant 0 : index
    %c16 = arith.constant 16 : index
    %33 = vector.load %arg6[%c0_26, %c16] : memref<128x384xbf16, #tpu.memory_space<vmem>>, vector<128x16xbf16>
    %c0_27 = arith.constant 0 : index
    %c144 = arith.constant 144 : index
    %34 = vector.load %arg6[%c0_27, %c144] : memref<128x384xbf16, #tpu.memory_space<vmem>>, vector<128x16xbf16>
    %c0_28 = arith.constant 0 : index
    %c272 = arith.constant 272 : index
    %35 = vector.load %arg6[%c0_28, %c272] : memref<128x384xbf16, #tpu.memory_space<vmem>>, vector<128x16xbf16>
    %cst_29 = arith.constant dense<0.000000e+00> : vector<128x128xf32>
    %36 = tpu.matmul %33, %34, %cst_29 {dimension_numbers = #tpu.dot_dimension_numbers<[1], [1], [0], [0], [0, 0, 1, 0], [], []>} : vector<128x16xbf16>, vector<128x16xbf16>, vector<128x128xf32> -> vector<128x128xf32>
    %cst_30 = arith.constant dense<0xFF800000> : vector<128xf32>
    %37 = vector.multi_reduction <maximumf>, %36, %cst_30 [1] : vector<128x128xf32> to vector<128xf32>
    %38 = vector.shape_cast %37 : vector<128xf32> to vector<128x1xf32>
    %39 = vector.broadcast %38 : vector<128x1xf32> to vector<128x128xf32>
    %40 = arith.subf %36, %39 : vector<128x128xf32>
    %41 = math.exp %40 : vector<128x128xf32>
    %cst_31 = arith.constant dense<0.000000e+00> : vector<128xf32>
    %42 = vector.multi_reduction <add>, %41, %cst_31 [1] : vector<128x128xf32> to vector<128xf32>
    %43 = vector.shape_cast %42 : vector<128xf32> to vector<128x1xf32>
    %44 = tpu.reciprocal %43 {approx = true} : vector<128x1xf32> -> vector<128x1xf32>
    %45 = arith.truncf %41 : vector<128x128xf32> to vector<128x128xbf16>
    %cst_32 = arith.constant dense<0.000000e+00> : vector<128x16xf32>
    %46 = tpu.matmul %45, %35, %cst_32 {dimension_numbers = #tpu.dot_dimension_numbers<[1], [0], [0], [1], [0, 0, 1, 1], [], []>} : vector<128x128xbf16>, vector<128x16xbf16>, vector<128x16xf32> -> vector<128x16xf32>
    %47 = vector.broadcast %44 : vector<128x1xf32> to vector<128x16xf32>
    %48 = arith.mulf %46, %47 : vector<128x16xf32>
    %49 = arith.truncf %48 : vector<128x16xf32> to vector<128x16xbf16>
    %c0_33 = arith.constant 0 : index
    %c16_34 = arith.constant 16 : index
    %50 = vector.load %arg7[%c0_33, %c16_34] : memref<128x128xbf16, #tpu.memory_space<vmem>>, vector<128x16xbf16>
    tpu.vector_store %arg7[%c0_33, %c16_34], %49 {strides = array<i32>} : memref<128x128xbf16, #tpu.memory_space<vmem>>, vector<128x16xbf16>,
    %c0_35 = arith.constant 0 : index
    %c32 = arith.constant 32 : index
    %51 = vector.load %arg6[%c0_35, %c32] : memref<128x384xbf16, #tpu.memory_space<vmem>>, vector<128x16xbf16>
    %c0_36 = arith.constant 0 : index
    %c160 = arith.constant 160 : index
    %52 = vector.load %arg6[%c0_36, %c160] : memref<128x384xbf16, #tpu.memory_space<vmem>>, vector<128x16xbf16>
    %c0_37 = arith.constant 0 : index
    %c288 = arith.constant 288 : index
    %53 = vector.load %arg6[%c0_37, %c288] : memref<128x384xbf16, #tpu.memory_space<vmem>>, vector<128x16xbf16>
    %cst_38 = arith.constant dense<0.000000e+00> : vector<128x128xf32>
    %54 = tpu.matmul %51, %52, %cst_38 {dimension_numbers = #tpu.dot_dimension_numbers<[1], [1], [0], [0], [0, 0, 1, 0], [], []>} : vector<128x16xbf16>, vector<128x16xbf16>, vector<128x128xf32> -> vector<128x128xf32>
    %cst_39 = arith.constant dense<0xFF800000> : vector<128xf32>
    %55 = vector.multi_reduction <maximumf>, %54, %cst_39 [1] : vector<128x128xf32> to vector<128xf32>
    %56 = vector.shape_cast %55 : vector<128xf32> to vector<128x1xf32>
    %57 = vector.broadcast %56 : vector<128x1xf32> to vector<128x128xf32>
    %58 = arith.subf %54, %57 : vector<128x128xf32>
    %59 = math.exp %58 : vector<128x128xf32>
    %cst_40 = arith.constant dense<0.000000e+00> : vector<128xf32>
    %60 = vector.multi_reduction <add>, %59, %cst_40 [1] : vector<128x128xf32> to vector<128xf32>
    %61 = vector.shape_cast %60 : vector<128xf32> to vector<128x1xf32>
    %62 = tpu.reciprocal %61 {approx = true} : vector<128x1xf32> -> vector<128x1xf32>
    %63 = arith.truncf %59 : vector<128x128xf32> to vector<128x128xbf16>
    %cst_41 = arith.constant dense<0.000000e+00> : vector<128x16xf32>
    %64 = tpu.matmul %63, %53, %cst_41 {dimension_numbers = #tpu.dot_dimension_numbers<[1], [0], [0], [1], [0, 0, 1, 1], [], []>} : vector<128x128xbf16>, vector<128x16xbf16>, vector<128x16xf32> -> vector<128x16xf32>
    %65 = vector.broadcast %62 : vector<128x1xf32> to vector<128x16xf32>
    %66 = arith.mulf %64, %65 : vector<128x16xf32>
    %67 = arith.truncf %66 : vector<128x16xf32> to vector<128x16xbf16>
    %c0_42 = arith.constant 0 : index
    %c32_43 = arith.constant 32 : index
    %68 = vector.load %arg7[%c0_42, %c32_43] : memref<128x128xbf16, #tpu.memory_space<vmem>>, vector<128x16xbf16>
    tpu.vector_store %arg7[%c0_42, %c32_43], %67 {strides = array<i32>} : memref<128x128xbf16, #tpu.memory_space<vmem>>, vector<128x16xbf16>,
    %c0_44 = arith.constant 0 : index
    %c48 = arith.constant 48 : index
    %69 = vector.load %arg6[%c0_44, %c48] : memref<128x384xbf16, #tpu.memory_space<vmem>>, vector<128x16xbf16>
    %c0_45 = arith.constant 0 : index
    %c176 = arith.constant 176 : index
    %70 = vector.load %arg6[%c0_45, %c176] : memref<128x384xbf16, #tpu.memory_space<vmem>>, vector<128x16xbf16>
    %c0_46 = arith.constant 0 : index
    %c304 = arith.constant 304 : index
    %71 = vector.load %arg6[%c0_46, %c304] : memref<128x384xbf16, #tpu.memory_space<vmem>>, vector<128x16xbf16>
    %cst_47 = arith.constant dense<0.000000e+00> : vector<128x128xf32>
    %72 = tpu.matmul %69, %70, %cst_47 {dimension_numbers = #tpu.dot_dimension_numbers<[1], [1], [0], [0], [0, 0, 1, 0], [], []>} : vector<128x16xbf16>, vector<128x16xbf16>, vector<128x128xf32> -> vector<128x128xf32>
    %cst_48 = arith.constant dense<0xFF800000> : vector<128xf32>
    %73 = vector.multi_reduction <maximumf>, %72, %cst_48 [1] : vector<128x128xf32> to vector<128xf32>
    %74 = vector.shape_cast %73 : vector<128xf32> to vector<128x1xf32>
    %75 = vector.broadcast %74 : vector<128x1xf32> to vector<128x128xf32>
    %76 = arith.subf %72, %75 : vector<128x128xf32>
    %77 = math.exp %76 : vector<128x128xf32>
    %cst_49 = arith.constant dense<0.000000e+00> : vector<128xf32>
    %78 = vector.multi_reduction <add>, %77, %cst_49 [1] : vector<128x128xf32> to vector<128xf32>
    %79 = vector.shape_cast %78 : vector<128xf32> to vector<128x1xf32>
    %80 = tpu.reciprocal %79 {approx = true} : vector<128x1xf32> -> vector<128x1xf32>
    %81 = arith.truncf %77 : vector<128x128xf32> to vector<128x128xbf16>
    %cst_50 = arith.constant dense<0.000000e+00> : vector<128x16xf32>
    %82 = tpu.matmul %81, %71, %cst_50 {dimension_numbers = #tpu.dot_dimension_numbers<[1], [0], [0], [1], [0, 0, 1, 1], [], []>} : vector<128x128xbf16>, vector<128x16xbf16>, vector<128x16xf32> -> vector<128x16xf32>
    %83 = vector.broadcast %80 : vector<128x1xf32> to vector<128x16xf32>
    %84 = arith.mulf %82, %83 : vector<128x16xf32>
    %85 = arith.truncf %84 : vector<128x16xf32> to vector<128x16xbf16>
    %c0_51 = arith.constant 0 : index
    %c48_52 = arith.constant 48 : index
    %86 = vector.load %arg7[%c0_51, %c48_52] : memref<128x128xbf16, #tpu.memory_space<vmem>>, vector<128x16xbf16>
    tpu.vector_store %arg7[%c0_51, %c48_52], %85 {strides = array<i32>} : memref<128x128xbf16, #tpu.memory_space<vmem>>, vector<128x16xbf16>,
    %c0_53 = arith.constant 0 : index
    %c64 = arith.constant 64 : index
    %87 = vector.load %arg6[%c0_53, %c64] : memref<128x384xbf16, #tpu.memory_space<vmem>>, vector<128x16xbf16>
    %c0_54 = arith.constant 0 : index
    %c192 = arith.constant 192 : index
    %88 = vector.load %arg6[%c0_54, %c192] : memref<128x384xbf16, #tpu.memory_space<vmem>>, vector<128x16xbf16>
    %c0_55 = arith.constant 0 : index
    %c320 = arith.constant 320 : index
    %89 = vector.load %arg6[%c0_55, %c320] : memref<128x384xbf16, #tpu.memory_space<vmem>>, vector<128x16xbf16>
    %cst_56 = arith.constant dense<0.000000e+00> : vector<128x128xf32>
    %90 = tpu.matmul %87, %88, %cst_56 {dimension_numbers = #tpu.dot_dimension_numbers<[1], [1], [0], [0], [0, 0, 1, 0], [], []>} : vector<128x16xbf16>, vector<128x16xbf16>, vector<128x128xf32> -> vector<128x128xf32>
    %cst_57 = arith.constant dense<0xFF800000> : vector<128xf32>
    %91 = vector.multi_reduction <maximumf>, %90, %cst_57 [1] : vector<128x128xf32> to vector<128xf32>
    %92 = vector.shape_cast %91 : vector<128xf32> to vector<128x1xf32>
    %93 = vector.broadcast %92 : vector<128x1xf32> to vector<128x128xf32>
    %94 = arith.subf %90, %93 : vector<128x128xf32>
    %95 = math.exp %94 : vector<128x128xf32>
    %cst_58 = arith.constant dense<0.000000e+00> : vector<128xf32>
    %96 = vector.multi_reduction <add>, %95, %cst_58 [1] : vector<128x128xf32> to vector<128xf32>
    %97 = vector.shape_cast %96 : vector<128xf32> to vector<128x1xf32>
    %98 = tpu.reciprocal %97 {approx = true} : vector<128x1xf32> -> vector<128x1xf32>
    %99 = arith.truncf %95 : vector<128x128xf32> to vector<128x128xbf16>
    %cst_59 = arith.constant dense<0.000000e+00> : vector<128x16xf32>
    %100 = tpu.matmul %99, %89, %cst_59 {dimension_numbers = #tpu.dot_dimension_numbers<[1], [0], [0], [1], [0, 0, 1, 1], [], []>} : vector<128x128xbf16>, vector<128x16xbf16>, vector<128x16xf32> -> vector<128x16xf32>
    %101 = vector.broadcast %98 : vector<128x1xf32> to vector<128x16xf32>
    %102 = arith.mulf %100, %101 : vector<128x16xf32>
    %103 = arith.truncf %102 : vector<128x16xf32> to vector<128x16xbf16>
    %c0_60 = arith.constant 0 : index
    %c64_61 = arith.constant 64 : index
    %104 = vector.load %arg7[%c0_60, %c64_61] : memref<128x128xbf16, #tpu.memory_space<vmem>>, vector<128x16xbf16>
    tpu.vector_store %arg7[%c0_60, %c64_61], %103 {strides = array<i32>} : memref<128x128xbf16, #tpu.memory_space<vmem>>, vector<128x16xbf16>,
    %c0_62 = arith.constant 0 : index
    %c80 = arith.constant 80 : index
    %105 = vector.load %arg6[%c0_62, %c80] : memref<128x384xbf16, #tpu.memory_space<vmem>>, vector<128x16xbf16>
    %c0_63 = arith.constant 0 : index
    %c208 = arith.constant 208 : index
    %106 = vector.load %arg6[%c0_63, %c208] : memref<128x384xbf16, #tpu.memory_space<vmem>>, vector<128x16xbf16>
    %c0_64 = arith.constant 0 : index
    %c336 = arith.constant 336 : index
    %107 = vector.load %arg6[%c0_64, %c336] : memref<128x384xbf16, #tpu.memory_space<vmem>>, vector<128x16xbf16>
    %cst_65 = arith.constant dense<0.000000e+00> : vector<128x128xf32>
    %108 = tpu.matmul %105, %106, %cst_65 {dimension_numbers = #tpu.dot_dimension_numbers<[1], [1], [0], [0], [0, 0, 1, 0], [], []>} : vector<128x16xbf16>, vector<128x16xbf16>, vector<128x128xf32> -> vector<128x128xf32>
    %cst_66 = arith.constant dense<0xFF800000> : vector<128xf32>
    %109 = vector.multi_reduction <maximumf>, %108, %cst_66 [1] : vector<128x128xf32> to vector<128xf32>
    %110 = vector.shape_cast %109 : vector<128xf32> to vector<128x1xf32>
    %111 = vector.broadcast %110 : vector<128x1xf32> to vector<128x128xf32>
    %112 = arith.subf %108, %111 : vector<128x128xf32>
    %113 = math.exp %112 : vector<128x128xf32>
    %cst_67 = arith.constant dense<0.000000e+00> : vector<128xf32>
    %114 = vector.multi_reduction <add>, %113, %cst_67 [1] : vector<128x128xf32> to vector<128xf32>
    %115 = vector.shape_cast %114 : vector<128xf32> to vector<128x1xf32>
    %116 = tpu.reciprocal %115 {approx = true} : vector<128x1xf32> -> vector<128x1xf32>
    %117 = arith.truncf %113 : vector<128x128xf32> to vector<128x128xbf16>
    %cst_68 = arith.constant dense<0.000000e+00> : vector<128x16xf32>
    %118 = tpu.matmul %117, %107, %cst_68 {dimension_numbers = #tpu.dot_dimension_numbers<[1], [0], [0], [1], [0, 0, 1, 1], [], []>} : vector<128x128xbf16>, vector<128x16xbf16>, vector<128x16xf32> -> vector<128x16xf32>
    %119 = vector.broadcast %116 : vector<128x1xf32> to vector<128x16xf32>
    %120 = arith.mulf %118, %119 : vector<128x16xf32>
    %121 = arith.truncf %120 : vector<128x16xf32> to vector<128x16xbf16>
    %c0_69 = arith.constant 0 : index
    %c80_70 = arith.constant 80 : index
    %122 = vector.load %arg7[%c0_69, %c80_70] : memref<128x128xbf16, #tpu.memory_space<vmem>>, vector<128x16xbf16>
    tpu.vector_store %arg7[%c0_69, %c80_70], %121 {strides = array<i32>} : memref<128x128xbf16, #tpu.memory_space<vmem>>, vector<128x16xbf16>,
    %c0_71 = arith.constant 0 : index
    %c96 = arith.constant 96 : index
    %123 = vector.load %arg6[%c0_71, %c96] : memref<128x384xbf16, #tpu.memory_space<vmem>>, vector<128x16xbf16>
    %c0_72 = arith.constant 0 : index
    %c224 = arith.constant 224 : index
    %124 = vector.load %arg6[%c0_72, %c224] : memref<128x384xbf16, #tpu.memory_space<vmem>>, vector<128x16xbf16>
    %c0_73 = arith.constant 0 : index
    %c352 = arith.constant 352 : index
    %125 = vector.load %arg6[%c0_73, %c352] : memref<128x384xbf16, #tpu.memory_space<vmem>>, vector<128x16xbf16>
    %cst_74 = arith.constant dense<0.000000e+00> : vector<128x128xf32>
    %126 = tpu.matmul %123, %124, %cst_74 {dimension_numbers = #tpu.dot_dimension_numbers<[1], [1], [0], [0], [0, 0, 1, 0], [], []>} : vector<128x16xbf16>, vector<128x16xbf16>, vector<128x128xf32> -> vector<128x128xf32>
    %cst_75 = arith.constant dense<0xFF800000> : vector<128xf32>
    %127 = vector.multi_reduction <maximumf>, %126, %cst_75 [1] : vector<128x128xf32> to vector<128xf32>
    %128 = vector.shape_cast %127 : vector<128xf32> to vector<128x1xf32>
    %129 = vector.broadcast %128 : vector<128x1xf32> to vector<128x128xf32>
    %130 = arith.subf %126, %129 : vector<128x128xf32>
    %131 = math.exp %130 : vector<128x128xf32>
    %cst_76 = arith.constant dense<0.000000e+00> : vector<128xf32>
    %132 = vector.multi_reduction <add>, %131, %cst_76 [1] : vector<128x128xf32> to vector<128xf32>
    %133 = vector.shape_cast %132 : vector<128xf32> to vector<128x1xf32>
    %134 = tpu.reciprocal %133 {approx = true} : vector<128x1xf32> -> vector<128x1xf32>
    %135 = arith.truncf %131 : vector<128x128xf32> to vector<128x128xbf16>
    %cst_77 = arith.constant dense<0.000000e+00> : vector<128x16xf32>
    %136 = tpu.matmul %135, %125, %cst_77 {dimension_numbers = #tpu.dot_dimension_numbers<[1], [0], [0], [1], [0, 0, 1, 1], [], []>} : vector<128x128xbf16>, vector<128x16xbf16>, vector<128x16xf32> -> vector<128x16xf32>
    %137 = vector.broadcast %134 : vector<128x1xf32> to vector<128x16xf32>
    %138 = arith.mulf %136, %137 : vector<128x16xf32>
    %139 = arith.truncf %138 : vector<128x16xf32> to vector<128x16xbf16>
    %c0_78 = arith.constant 0 : index
    %c96_79 = arith.constant 96 : index
    %140 = vector.load %arg7[%c0_78, %c96_79] : memref<128x128xbf16, #tpu.memory_space<vmem>>, vector<128x16xbf16>
    tpu.vector_store %arg7[%c0_78, %c96_79], %139 {strides = array<i32>} : memref<128x128xbf16, #tpu.memory_space<vmem>>, vector<128x16xbf16>,
    %c0_80 = arith.constant 0 : index
    %c112 = arith.constant 112 : index
    %141 = vector.load %arg6[%c0_80, %c112] : memref<128x384xbf16, #tpu.memory_space<vmem>>, vector<128x16xbf16>
    %c0_81 = arith.constant 0 : index
    %c240 = arith.constant 240 : index
    %142 = vector.load %arg6[%c0_81, %c240] : memref<128x384xbf16, #tpu.memory_space<vmem>>, vector<128x16xbf16>
    %c0_82 = arith.constant 0 : index
    %c368 = arith.constant 368 : index
    %143 = vector.load %arg6[%c0_82, %c368] : memref<128x384xbf16, #tpu.memory_space<vmem>>, vector<128x16xbf16>
    %cst_83 = arith.constant dense<0.000000e+00> : vector<128x128xf32>
    %144 = tpu.matmul %141, %142, %cst_83 {dimension_numbers = #tpu.dot_dimension_numbers<[1], [1], [0], [0], [0, 0, 1, 0], [], []>} : vector<128x16xbf16>, vector<128x16xbf16>, vector<128x128xf32> -> vector<128x128xf32>
    %cst_84 = arith.constant dense<0xFF800000> : vector<128xf32>
    %145 = vector.multi_reduction <maximumf>, %144, %cst_84 [1] : vector<128x128xf32> to vector<128xf32>
    %146 = vector.shape_cast %145 : vector<128xf32> to vector<128x1xf32>
    %147 = vector.broadcast %146 : vector<128x1xf32> to vector<128x128xf32>
    %148 = arith.subf %144, %147 : vector<128x128xf32>
    %149 = math.exp %148 : vector<128x128xf32>
    %cst_85 = arith.constant dense<0.000000e+00> : vector<128xf32>
    %150 = vector.multi_reduction <add>, %149, %cst_85 [1] : vector<128x128xf32> to vector<128xf32>
    %151 = vector.shape_cast %150 : vector<128xf32> to vector<128x1xf32>
    %152 = tpu.reciprocal %151 {approx = true} : vector<128x1xf32> -> vector<128x1xf32>
    %153 = arith.truncf %149 : vector<128x128xf32> to vector<128x128xbf16>
    %cst_86 = arith.constant dense<0.000000e+00> : vector<128x16xf32>
    %154 = tpu.matmul %153, %143, %cst_86 {dimension_numbers = #tpu.dot_dimension_numbers<[1], [0], [0], [1], [0, 0, 1, 1], [], []>} : vector<128x128xbf16>, vector<128x16xbf16>, vector<128x16xf32> -> vector<128x16xf32>
    %155 = vector.broadcast %152 : vector<128x1xf32> to vector<128x16xf32>
    %156 = arith.mulf %154, %155 : vector<128x16xf32>
    %157 = arith.truncf %156 : vector<128x16xf32> to vector<128x16xbf16>
    %c0_87 = arith.constant 0 : index
    %c112_88 = arith.constant 112 : index
    %158 = vector.load %arg7[%c0_87, %c112_88] : memref<128x128xbf16, #tpu.memory_space<vmem>>, vector<128x16xbf16>
    tpu.vector_store %arg7[%c0_87, %c112_88], %157 {strides = array<i32>} : memref<128x128xbf16, #tpu.memory_space<vmem>>, vector<128x16xbf16>,
    %c0_89 = arith.constant 0 : index
    %c0_90 = arith.constant 0 : index
    %159 = vector.load %arg7[%c0_89, %c0_90] : memref<128x128xbf16, #tpu.memory_space<vmem>>, vector<128x128xbf16>
    %c0_91 = arith.constant 0 : index
    %c0_92 = arith.constant 0 : index
    %160 = vector.load %arg3[%c0_91, %c0_92] : memref<128x128xbf16, #tpu.memory_space<vmem>>, vector<128x128xbf16>
    %cst_93 = arith.constant dense<0.000000e+00> : vector<128x128xf32>
    %161 = tpu.matmul %159, %160, %cst_93 {dimension_numbers = #tpu.dot_dimension_numbers<[1], [1], [0], [0], [0, 0, 1, 0], [], []>} : vector<128x128xbf16>, vector<128x128xbf16>, vector<128x128xf32> -> vector<128x128xf32>
    %c0_94 = arith.constant 0 : index
    %c0_95 = arith.constant 0 : index
    %162 = vector.load %arg4[%c0_94, %c0_95] : memref<1x128xf32, #tpu.memory_space<vmem>>, vector<1x128xf32>
    %163 = vector.broadcast %162 : vector<1x128xf32> to vector<128x128xf32>
    %164 = arith.addf %161, %163 : vector<128x128xf32>
    %c0_96 = arith.constant 0 : index
    %c0_97 = arith.constant 0 : index
    %c0_98 = arith.constant 0 : index
    %165 = vector.load %arg5[%c0_96, %c0_97, %c0_98] : memref<1x128x128xf32, #tpu.memory_space<vmem>>, vector<1x128x128xf32>
    %166 = vector.shape_cast %165 : vector<1x128x128xf32> to vector<128x128xf32>
    %167 = vector.shape_cast %164 : vector<128x128xf32> to vector<1x128x128xf32>
    tpu.vector_store %arg5[%c0_96, %c0_97, %c0_98], %167 {strides = array<i32>} : memref<1x128x128xf32, #tpu.memory_space<vmem>>, vector<1x128x128xf32>,
    return
  }
  func.func @transform_0(%arg0: i32) -> (i32, i32, i32) {
    %c0_i32 = arith.constant 0 : i32
    %c0_i32_0 = arith.constant 0 : i32
    %c0_i32_1 = arith.constant 0 : i32
    return %arg0, %c0_i32, %c0_i32_0 : i32, i32, i32
  }
  func.func @transform_1(%arg0: i32) -> (i32, i32) {
    %c0_i32 = arith.constant 0 : i32
    %c0_i32_0 = arith.constant 0 : i32
    %c0_i32_1 = arith.constant 0 : i32
    return %c0_i32, %c0_i32_0 : i32, i32
  }
  func.func @transform_2(%arg0: i32) -> (i32, i32) {
    %c0_i32 = arith.constant 0 : i32
    %c0_i32_0 = arith.constant 0 : i32
    %c0_i32_1 = arith.constant 0 : i32
    return %c0_i32, %c0_i32_0 : i32, i32
  }
  func.func @transform_3(%arg0: i32) -> (i32, i32) {
    %c0_i32 = arith.constant 0 : i32
    %c0_i32_0 = arith.constant 0 : i32
    %c0_i32_1 = arith.constant 0 : i32
    return %c0_i32, %c0_i32_0 : i32, i32
  }
  func.func @transform_4(%arg0: i32) -> (i32, i32, i32) {
    %c0_i32 = arith.constant 0 : i32
    %c0_i32_0 = arith.constant 0 : i32
    %c0_i32_1 = arith.constant 0 : i32
    return %arg0, %c0_i32, %c0_i32_0 : i32, i32, i32
  }
}

</mosaic_0001>

<llo_original>
// kernel: tpu_custom_call.1
$region0: #{tpu_custom_call.1}
  #allocation0 [shape = 'u32[]', space=smem, size = 0x4, offset = 0x4, fixed_abs, tag = 'smem constant byte address 0x4 - core index']
  #allocation1 [shape = 'u32[144,128]{1,0:T(1,128)}', space=vmem, size = 0x12000, scoped, tag = 'internal scratch']
  #allocation2 [shape = 'bf16[128,384]{1,0:T(16,128)(2,1)}', space=vmem, size = 0x18000, scoped, tag = 'scratch operand']
  #allocation3 [shape = 'bf16[128,128]{1,0:T(16,128)(2,1)}', space=vmem, size = 0x8000, scoped, tag = 'scratch operand']
  %s0 = inlined_call_operand.hbm [shape: f32[2,128,128], index: 0, kind: input, shape index: {}]
  %s1 = inlined_call_operand.hbm [shape: bf16[384,128], index: 1, kind: input, shape index: {}]
  %s2 = inlined_call_operand.hbm [shape: bf16[128,128], index: 2, kind: input, shape index: {}]
  %s3 = inlined_call_operand.vmem [shape: f32[1,128], index: 3, kind: input, shape index: {}]
  %s4 = inlined_call_operand.hbm [shape: f32[2,128,128], index: 4, kind: output, shape index: {}]
  %s5 = sld [smem:[#allocation0]]
  $region61: #{tpu_custom_call.1} parent=0
    _
  %s7 = ssub.s32 1, %s5
  %s8 = scalar_select 0, %s7, %s5
  $region1: #{tpu_custom_call.1} parent=0
    #allocation4 [shape = 'u8[131072]{0}', space=vmem, size = 0x20000, scoped, tag = 'input window, operand 0']
    #allocation5 [shape = 's32[2]{0}', space=sflag, size = 0x8, scoped, tag = 'scoped memory for tpu_custom_call.1']
    #allocation6 [shape = 's32[2]{0}', space=sflag, size = 0x8, scoped, tag = 'scoped memory for tpu_custom_call.1']
    #allocation7 [shape = 'u8[98304]{0}', space=vmem, size = 0x18000, scoped, tag = 'input window, operand 1, single buffered']
    #allocation8 [shape = 's32[1]{0}', space=sflag, size = 0x4, scoped, tag = 'scoped memory for tpu_custom_call.1']
    #allocation9 [shape = 'u8[32768]{0}', space=vmem, size = 0x8000, scoped, tag = 'input window, operand 2, single buffered']
    #allocation10 [shape = 'u8[131072]{0}', space=vmem, size = 0x20000, scoped, tag = 'output window, operand 0']
    %9 = vsyncpa [#allocation5], 0
    %s10 = scalar_lea.sflag [#allocation5], 1
    %11 = vsyncpa %s10, 0
    %12 = vsyncpa [#allocation8], 0
    %13 = vsyncpa [#allocation6], 0
    %s14 = scalar_lea.sflag [#allocation6], 1
    %15 = vsyncpa %s14, 0
    loop: start=0, step=1, limit=4
    $region2: #{tpu_custom_call.1} parent=1 // loop_pre_header
      _
    $region3: #{tpu_custom_call.1} parent=1 // loop_header
      %s17 = sphi 0, %s21
      %p18 = scmp.ge.s32.totalorder %s17, 4
      %s27 = sphi 0, %s29
      %s30 = sphi 0, %s27
      %s31 = sphi 0, %s30
      %s47 = sphi 0, %s31
      %s51 = sphi 0, %s51
      %s53 = sphi 0, %s51
      %s54 = sphi 0, %s53
      %s68 = sphi 0, %s54
      %s72 = sphi 0, %s72
      %s74 = sphi 0, %s72
      %s75 = sphi 0, %s74
      %s89 = sphi 0, %s75
      %s93 = sphi 0, %s93
      %s95 = sphi 0, %s93
      %s96 = sphi 0, %s95
      %s110 = sphi 0, %s96
      %s116 = sphi 0, %s118
      %s119 = sphi 0, %s116
      %s120 = sphi 0, %s119
      %s136 = sphi 0, %s120
    $region4: #{tpu_custom_call.1} parent=1 // loop_header_branch
      %20 = sbr.rel (%p18) target = $region8
    $region5: #{tpu_custom_call.1} parent=1 // loop_body
      %s22 = ssub.s32 %s17, 1
      %s23 = ssub.s32 %s17, 2
      %s24 = sadd.s32 %s17, 1
      %s25 = ssub.s32 %s17, %s24
      %p26 = scmp.eq.s32.totalorder %s25, 0
      %s28 = sadd.s32 %s27, 1
      %s29 = scalar_select %p26, %s27, %s28
      %p32 = pneg %p26
      %p33 = scmp.eq.s32.totalorder %s17, 1
      %p34 = por %p32, %p33
      %p35 = scmp.ne.s32.totalorder %s27, %s30
      %p36 = scmp.eq.s32.totalorder %s17, 0
      %p37 = por %p35, %p36
      %p38 = scmp.ne.s32.totalorder %s27, %s30
      %p39 = scmp.eq.s32.totalorder %s22, 1
      %p40 = por %p38, %p39
      %p41 = scmp.ne.s32.totalorder %s30, %s31
      %p42 = scmp.eq.s32.totalorder %s22, 0
      %p43 = por %p41, %p42
      %p44 = scmp.ne.s32.totalorder %s30, %s31
      %p45 = scmp.eq.s32.totalorder %s23, 1
      %p46 = por %p44, %p45
      %p48 = scmp.ne.s32.totalorder %s31, %s47
      %p49 = scmp.eq.s32.totalorder %s23, 0
      %p50 = por %p48, %p49
      %s52 = sadd.s32 %s51, 1
      %p55 = scmp.eq.s32.totalorder %s17, 1
      %p56 = scmp.ne.s32.totalorder %s51, %s53
      %p57 = scmp.eq.s32.totalorder %s17, 0
      %p58 = por %p56, %p57
      %p59 = scmp.ne.s32.totalorder %s51, %s53
      %p60 = scmp.eq.s32.totalorder %s22, 1
      %p61 = por %p59, %p60
      %p62 = scmp.ne.s32.totalorder %s53, %s54
      %p63 = scmp.eq.s32.totalorder %s22, 0
      %p64 = por %p62, %p63
      %p65 = scmp.ne.s32.totalorder %s53, %s54
      %p66 = scmp.eq.s32.totalorder %s23, 1
      %p67 = por %p65, %p66
      %p69 = scmp.ne.s32.totalorder %s54, %s68
      %p70 = scmp.eq.s32.totalorder %s23, 0
      %p71 = por %p69, %p70
      %s73 = sadd.s32 %s72, 1
      %p76 = scmp.eq.s32.totalorder %s17, 1
      %p77 = scmp.ne.s32.totalorder %s72, %s74
      %p78 = scmp.eq.s32.totalorder %s17, 0
      %p79 = por %p77, %p78
      %p80 = scmp.ne.s32.totalorder %s72, %s74
      %p81 = scmp.eq.s32.totalorder %s22, 1
      %p82 = por %p80, %p81
      %p83 = scmp.ne.s32.totalorder %s74, %s75
      %p84 = scmp.eq.s32.totalorder %s22, 0
      %p85 = por %p83, %p84
      %p86 = scmp.ne.s32.totalorder %s74, %s75
      %p87 = scmp.eq.s32.totalorder %s23, 1
      %p88 = por %p86, %p87
      %p90 = scmp.ne.s32.totalorder %s75, %s89
      %p91 = scmp.eq.s32.totalorder %s23, 0
      %p92 = por %p90, %p91
      %s94 = sadd.s32 %s93, 1
      %p97 = scmp.eq.s32.totalorder %s17, 1
      %p98 = scmp.ne.s32.totalorder %s93, %s95
      %p99 = scmp.eq.s32.totalorder %s17, 0
      %p100 = por %p98, %p99
      %p101 = scmp.ne.s32.totalorder %s93, %s95
      %p102 = scmp.eq.s32.totalorder %s22, 1
      %p103 = por %p101, %p102
      %p104 = scmp.ne.s32.totalorder %s95, %s96
      %p105 = scmp.eq.s32.totalorder %s22, 0
      %p106 = por %p104, %p105
      %p107 = scmp.ne.s32.totalorder %s95, %s96
      %p108 = scmp.eq.s32.totalorder %s23, 1
      %p109 = por %p107, %p108
      %p111 = scmp.ne.s32.totalorder %s96, %s110
      %p112 = scmp.eq.s32.totalorder %s23, 0
      %p113 = por %p111, %p112
      %s114 = ssub.s32 %s17, %s24
      %p115 = scmp.eq.s32.totalorder %s114, 0
      %s117 = sadd.s32 %s116, 1
      %s118 = scalar_select %p115, %s116, %s117
      %p121 = pneg %p115
      %p122 = scmp.eq.s32.totalorder %s17, 1
      %p123 = por %p121, %p122
      %p124 = scmp.ne.s32.totalorder %s116, %s119
      %p125 = scmp.eq.s32.totalorder %s17, 0
      %p126 = por %p124, %p125
      %p127 = scmp.ne.s32.totalorder %s116, %s119
      %p128 = scmp.eq.s32.totalorder %s22, 1
      %p129 = por %p127, %p128
      %p130 = scmp.ne.s32.totalorder %s119, %s120
      %p131 = scmp.eq.s32.totalorder %s22, 0
      %p132 = por %p130, %p131
      %p133 = scmp.ne.s32.totalorder %s119, %s120
      %p134 = scmp.eq.s32.totalorder %s23, 1
      %p135 = por %p133, %p134
      %p137 = scmp.ne.s32.totalorder %s120, %s136
      %p138 = scmp.eq.s32.totalorder %s23, 0
      %p139 = por %p137, %p138
      %p140 = scmp.le.s32.totalorder 1, %s17
      %p141 = scmp.lt.s32.totalorder %s17, 3
      %p142 = pnand %p140, %p141
      %p143 = pneg %p142
      // Predicated region
      $region9: #{tpu_custom_call.1} parent=5 // pred_check
        _
      $region10: #{tpu_custom_call.1} parent=5 // pred_check_branch
        %145 = sbr.rel (%p142) target = $region12
      $region11: #{tpu_custom_call.1} parent=5 // pred_region
        %s146 = ssub.s32 %s17, 1
        // Predicated region
        $region13: #{tpu_custom_call.1} parent=11 // pred_check
          %p147 = pneg %p64
        $region14: #{tpu_custom_call.1} parent=11 // pred_check_branch
          %149 = sbr.rel (%p147) target = $region16
        $region15: #{tpu_custom_call.1} parent=11 // pred_region
          %s151 = ssub.s32 3072, 3072
          %152 = vsyncadd [#allocation8], %s151
          %s153 = sshll.u32 [#allocation7], 4
          %s154 = int_to_ptr.vmem [resolvable:$true] %s153
          %159 = dma.hbm_to_vmem [thread:$0]  %s1, 3072, %s154, [#allocation8], 64, 64, 4
        $region16: #{tpu_custom_call.1} parent=11 // pred_fallthru
          _
        // Predicated region
        $region17: #{tpu_custom_call.1} parent=11 // pred_check
          %p160 = pneg %p85
        $region18: #{tpu_custom_call.1} parent=11 // pred_check_branch
          %162 = sbr.rel (%p160) target = $region20
        $region19: #{tpu_custom_call.1} parent=11 // pred_region
          %s164 = ssub.s32 1024, 1024
          %165 = vsyncadd [#allocation8], %s164
          %s166 = sshll.u32 [#allocation9], 4
          %s167 = int_to_ptr.vmem [resolvable:$true] %s166
          %172 = dma.hbm_to_vmem [thread:$0]  %s2, 1024, %s167, [#allocation8], 64, 64, 4
        $region20: #{tpu_custom_call.1} parent=11 // pred_fallthru
          _
        // Predicated region
        $region21: #{tpu_custom_call.1} parent=11 // pred_check
          %p173 = pneg %p106
        $region22: #{tpu_custom_call.1} parent=11 // pred_check_branch
          %175 = sbr.rel (%p173) target = $region24
        $region23: #{tpu_custom_call.1} parent=11 // pred_region
          _
        $region24: #{tpu_custom_call.1} parent=11 // pred_fallthru
          _
      $region12: #{tpu_custom_call.1} parent=5 // pred_fallthru
        _
      %p176 = scmp.lt.s32.totalorder %s17, 2
      // Predicated region
      $region25: #{tpu_custom_call.1} parent=5 // pred_check
        %p177 = pneg %p176
      $region26: #{tpu_custom_call.1} parent=5 // pred_check_branch
        %179 = sbr.rel (%p177) target = $region28
      $region27: #{tpu_custom_call.1} parent=5 // pred_region
        // Predicated region
        $region29: #{tpu_custom_call.1} parent=27 // pred_check
          %p180 = pneg %p37
        $region30: #{tpu_custom_call.1} parent=27 // pred_check_branch
          %182 = sbr.rel (%p180) target = $region32
        $region31: #{tpu_custom_call.1} parent=27 // pred_region
          %s183 = sand.u32 %s27, 1
          %s184 = scalar_lea.sflag [#allocation5], %s183
          %s185 = sand.u32 %s27, 1
          %s186 = smul.addr %s185, 128
          %s187 = scalar_lea.vmem [#allocation4], %s186
          %s189 = ssub.s32 2048, 2048
          %190 = vsyncadd %s184, %s189
          %s191 = smul.addr %s17, 16
          %s192 = smul.addr %s191, 128
          %s193 = scalar_lea.hbm %s0, %s192
          %s194 = sshll.u32 %s187, 4
          %s195 = int_to_ptr.vmem [resolvable:$true] %s194
          %200 = dma.hbm_to_vmem [thread:$0]  %s193, 2048, %s195, %s184, 128, 128, 8
        $region32: #{tpu_custom_call.1} parent=27 // pred_fallthru
          _
      $region28: #{tpu_custom_call.1} parent=5 // pred_fallthru
        _
      %p201 = scmp.le.s32.totalorder 1, %s17
      %p202 = scmp.lt.s32.totalorder %s17, 3
      %p203 = pnand %p201, %p202
      %p204 = pneg %p203
      // Predicated region
      $region33: #{tpu_custom_call.1} parent=5 // pred_check
        _
      $region34: #{tpu_custom_call.1} parent=5 // pred_check_branch
        %206 = sbr.rel (%p203) target = $region36
      $region35: #{tpu_custom_call.1} parent=5 // pred_region
        %s207 = ssub.s32 %s17, 1
        %s208 = sand.u32 %s30, 1
        %s209 = scalar_lea.sflag [#allocation5], %s208
        %s210 = sand.u32 %s30, 1
        %s211 = smul.addr %s210, 128
        %s212 = scalar_lea.vmem [#allocation4], %s211
        // Predicated region
        $region37: #{tpu_custom_call.1} parent=35 // pred_check
          %p213 = pneg %p43
        $region38: #{tpu_custom_call.1} parent=35 // pred_check_branch
          %215 = sbr.rel (%p213) target = $region40
        $region39: #{tpu_custom_call.1} parent=35 // pred_region
          %216 = dma.done %s209, 2048
        $region40: #{tpu_custom_call.1} parent=35 // pred_fallthru
          _
        // Predicated region
        $region41: #{tpu_custom_call.1} parent=35 // pred_check
          %p217 = pneg %p64
        $region42: #{tpu_custom_call.1} parent=35 // pred_check_branch
          %219 = sbr.rel (%p217) target = $region44
        $region43: #{tpu_custom_call.1} parent=35 // pred_region
          %220 = dma.done [#allocation8], 3072
        $region44: #{tpu_custom_call.1} parent=35 // pred_fallthru
          _
        // Predicated region
        $region45: #{tpu_custom_call.1} parent=35 // pred_check
          %p221 = pneg %p85
        $region46: #{tpu_custom_call.1} parent=35 // pred_check_branch
          %223 = sbr.rel (%p221) target = $region48
        $region47: #{tpu_custom_call.1} parent=35 // pred_region
          %224 = dma.done [#allocation8], 1024
        $region48: #{tpu_custom_call.1} parent=35 // pred_fallthru
          _
        %s225 = sand.u32 %s30, 1
        %s226 = scalar_lea.sflag [#allocation5], %s225
        %s227 = sand.u32 %s30, 1
        %s228 = smul.addr %s227, 128
        %s229 = scalar_lea.vmem [#allocation4], %s228
        %p230 = pneg %p43
        %p231 = pneg %p40
        %p232 = pneg %p64
        %p233 = pneg %p61
        %p234 = pneg %p85
        %p235 = pneg %p82
        %p236 = pneg %p106
        %p237 = pneg %p103
        %p238 = pneg %p132
        %p239 = pneg %p129
        %s240 = sand.u32 %s119, 1
        %s241 = scalar_lea.sflag [#allocation6], %s240
        %s242 = sand.u32 %s119, 1
        %s243 = smul.addr %s242, 128
        %s244 = scalar_lea.vmem [#allocation10], %s243
        %v246 = vld [vmem:[%s212] sm:$0xff]
        %v247 = vld [vmem:[%s212 + $0x8] sm:$0xff]
        %v248 = vld [vmem:[%s212 + $0x10] sm:$0xff]
        %v249 = vld [vmem:[%s212 + $0x18] sm:$0xff]
        %v250 = vld [vmem:[%s212 + $0x20] sm:$0xff]
        %v251 = vld [vmem:[%s212 + $0x28] sm:$0xff]
        %v252 = vld [vmem:[%s212 + $0x30] sm:$0xff]
        %v253 = vld [vmem:[%s212 + $0x38] sm:$0xff]
        %v254 = vld [vmem:[%s212 + $0x40] sm:$0xff]
        %v255 = vld [vmem:[%s212 + $0x48] sm:$0xff]
        %v256 = vld [vmem:[%s212 + $0x50] sm:$0xff]
        %v257 = vld [vmem:[%s212 + $0x58] sm:$0xff]
        %v258 = vld [vmem:[%s212 + $0x60] sm:$0xff]
        %v259 = vld [vmem:[%s212 + $0x68] sm:$0xff]
        %v260 = vld [vmem:[%s212 + $0x70] sm:$0xff]
        %v261 = vld [vmem:[%s212 + $0x78] sm:$0xff]
        %v262 = vpack.c.bf16 %v247, %v246
        %v263 = vpack.c.bf16 %v249, %v248
        %v264 = vpack.c.bf16 %v251, %v250
        %v265 = vpack.c.bf16 %v253, %v252
        %v266 = vpack.c.bf16 %v255, %v254
        %v267 = vpack.c.bf16 %v257, %v256
        %v268 = vpack.c.bf16 %v259, %v258
        %v269 = vpack.c.bf16 %v261, %v260
        %v270 = vld [vmem:[#allocation7] sm:$0xf]
        %v271 = vld [vmem:[#allocation7 + $0x4] sm:$0xf]
        %v272 = vld [vmem:[#allocation7 + $0x8] sm:$0xf]
        %v273 = vld [vmem:[#allocation7 + $0xc] sm:$0xf]
        %v274 = vld [vmem:[#allocation7 + $0x10] sm:$0xf]
        %v275 = vld [vmem:[#allocation7 + $0x14] sm:$0xf]
        %v276 = vld [vmem:[#allocation7 + $0x18] sm:$0xf]
        %v277 = vld [vmem:[#allocation7 + $0x1c] sm:$0xf]
        %v278 = vld [vmem:[#allocation7 + $0x20] sm:$0xf]
        %v279 = vld [vmem:[#allocation7 + $0x24] sm:$0xf]
        %v280 = vld [vmem:[#allocation7 + $0x28] sm:$0xf]
        %v281 = vld [vmem:[#allocation7 + $0x2c] sm:$0xf]
        %v282 = vld [vmem:[#allocation7 + $0x30] sm:$0xf]
        %v283 = vld [vmem:[#allocation7 + $0x34] sm:$0xf]
        %v284 = vld [vmem:[#allocation7 + $0x38] sm:$0xf]
        %v285 = vld [vmem:[#allocation7 + $0x3c] sm:$0xf]
        %v302 = vunpack.c.l.b16 %v270
        %v303 = vunpack.c.l.b16 %v271
        %v304 = vunpack.c.l.b16 %v272
        %v305 = vunpack.c.l.b16 %v273
        %v306 = vunpack.c.l.b16 %v274
        %v307 = vunpack.c.l.b16 %v275
        %v308 = vunpack.c.l.b16 %v276
        %v309 = vunpack.c.l.b16 %v277
        %v310 = vunpack.c.l.b16 %v278
        %v311 = vunpack.c.l.b16 %v279
        %v312 = vunpack.c.l.b16 %v280
        %v313 = vunpack.c.l.b16 %v281
        %v314 = vunpack.c.l.b16 %v282
        %v315 = vunpack.c.l.b16 %v283
        %v316 = vunpack.c.l.b16 %v284
        %v317 = vunpack.c.l.b16 %v285
        %v318 = vpack.c.b16 %v303, %v302
        %v319 = vpack.c.b16 %v305, %v304
        %v320 = vpack.c.b16 %v307, %v306
        %v321 = vpack.c.b16 %v309, %v308
        %v322 = vpack.c.b16 %v311, %v310
        %v323 = vpack.c.b16 %v313, %v312
        %v324 = vpack.c.b16 %v315, %v314
        %v325 = vpack.c.b16 %v317, %v316
        %334 = vmatprep.subr.bf16.mxu0 0
        %335 = vmatpush1.bf16.xpose.msra.mxu0 %v318
        %336 = vmatprep.subr.bf16.mxu0 0
        %337 = vmatpush1.bf16.xpose.msra.mxu0 %v319
        %338 = vmatprep.subr.bf16.mxu0 0
        %339 = vmatpush1.bf16.xpose.msra.mxu0 %v320
        %340 = vmatprep.subr.bf16.mxu0 0
        %341 = vmatpush1.bf16.xpose.msra.mxu0 %v321
        %342 = vmatprep.subr.bf16.mxu0 0
        %343 = vmatpush1.bf16.xpose.msra.mxu0 %v322
        %344 = vmatprep.subr.bf16.mxu0 0
        %345 = vmatpush1.bf16.xpose.msra.mxu0 %v323
        %346 = vmatprep.subr.bf16.mxu0 0
        %347 = vmatpush1.bf16.xpose.msra.mxu0 %v324
        %348 = vmatprep.subr.bf16.mxu0 0
        %349 = vmatpush1.bf16.xpose.msra.mxu0 %v325
        %350 = vmatprep.subr.bf16.mxu0 0
        %351 = vmatpush1.bf16.xpose.msra.mxu0 0
        %352 = vmatprep.subr.bf16.mxu0 0
        %353 = vmatpush1.bf16.xpose.msra.mxu0 0
        %354 = vmatprep.subr.bf16.mxu0 0
        %355 = vmatpush1.bf16.xpose.msra.mxu0 0
        %356 = vmatprep.subr.bf16.mxu0 0
        %357 = vmatpush1.bf16.xpose.msra.mxu0 0
        %358 = vmatprep.subr.bf16.mxu0 0
        %359 = vmatpush1.bf16.xpose.msra.mxu0 0
        %360 = vmatprep.subr.bf16.mxu0 0
        %361 = vmatpush1.bf16.xpose.msra.mxu0 0
        %362 = vmatprep.subr.bf16.mxu0 0
        %363 = vmatpush1.bf16.xpose.msra.mxu0 0
        %364 = vmatprep.subr.bf16.mxu0 0
        %365 = vmatpush1.bf16.xpose.msra.mxu0 0
        %366 = vmatprep.mubr.bf16.mxu0 0
        %367 = vmatmul.mubr.bf16.gmra.mrb[0].mxu0 %v262
        %v368 = vpop.f32.mrb[0].mxu0
        %v369 = vadd.f32 0.0, %v368
        %v370 = vpop.f32.mrb[0].mxu0
        %v371 = vpop.f32.mrb[0].mxu0
        %v372 = vadd.f32 0.0, %v371
        %v373 = vpop.f32.mrb[0].mxu0
        %374 = vmatprep.mubr.bf16.mxu0 0
        %375 = vmatmul.mubr.bf16.gmra.mrb[0].mxu0 %v263
        %v376 = vpop.f32.mrb[0].mxu0
        %v377 = vadd.f32 0.0, %v376
        %v378 = vpop.f32.mrb[0].mxu0
        %v379 = vpop.f32.mrb[0].mxu0
        %v380 = vadd.f32 0.0, %v379
        %v381 = vpop.f32.mrb[0].mxu0
        %382 = vmatprep.mubr.bf16.mxu0 0
        %383 = vmatmul.mubr.bf16.gmra.mrb[0].mxu0 %v264
        %v384 = vpop.f32.mrb[0].mxu0
        %v385 = vadd.f32 0.0, %v384
        %v386 = vpop.f32.mrb[0].mxu0
        %v387 = vpop.f32.mrb[0].mxu0
        %v388 = vadd.f32 0.0, %v387
        %v389 = vpop.f32.mrb[0].mxu0
        %390 = vmatprep.mubr.bf16.mxu0 0
        %391 = vmatmul.mubr.bf16.gmra.mrb[0].mxu0 %v265
        %v392 = vpop.f32.mrb[0].mxu0
        %v393 = vadd.f32 0.0, %v392
        %v394 = vpop.f32.mrb[0].mxu0
        %v395 = vpop.f32.mrb[0].mxu0
        %v396 = vadd.f32 0.0, %v395
        %v397 = vpop.f32.mrb[0].mxu0
        %398 = vmatprep.mubr.bf16.mxu0 0
        %399 = vmatmul.mubr.bf16.gmra.mrb[0].mxu0 %v266
        %v400 = vpop.f32.mrb[0].mxu0
        %v401 = vadd.f32 0.0, %v400
        %v402 = vpop.f32.mrb[0].mxu0
        %v403 = vpop.f32.mrb[0].mxu0
        %v404 = vadd.f32 0.0, %v403
        %v405 = vpop.f32.mrb[0].mxu0
        %406 = vmatprep.mubr.bf16.mxu0 0
        %407 = vmatmul.mubr.bf16.gmra.mrb[0].mxu0 %v267
        %v408 = vpop.f32.mrb[0].mxu0
        %v409 = vadd.f32 0.0, %v408
        %v410 = vpop.f32.mrb[0].mxu0
        %v411 = vpop.f32.mrb[0].mxu0
        %v412 = vadd.f32 0.0, %v411
        %v413 = vpop.f32.mrb[0].mxu0
        %414 = vmatprep.mubr.bf16.mxu0 0
        %415 = vmatmul.mubr.bf16.gmra.mrb[0].mxu0 %v268
        %v416 = vpop.f32.mrb[0].mxu0
        %v417 = vadd.f32 0.0, %v416
        %v418 = vpop.f32.mrb[0].mxu0
        %v419 = vpop.f32.mrb[0].mxu0
        %v420 = vadd.f32 0.0, %v419
        %v421 = vpop.f32.mrb[0].mxu0
        %422 = vmatprep.mubr.bf16.mxu0 0
        %423 = vmatmul.mubr.bf16.gmra.mrb[0].mxu0 %v269
        %v424 = vpop.f32.mrb[0].mxu0
        %v425 = vadd.f32 0.0, %v424
        %v426 = vpop.f32.mrb[0].mxu0
        %v427 = vpop.f32.mrb[0].mxu0
        %v428 = vadd.f32 0.0, %v427
        %v429 = vpop.f32.mrb[0].mxu0
        %430 = vdwg.mxu0
        %v431 = vpack.c.bf16 %v372, %v369
        %v432 = vpack.c.bf16 %v380, %v377
        %v433 = vpack.c.bf16 %v388, %v385
        %v434 = vpack.c.bf16 %v396, %v393
        %v435 = vpack.c.bf16 %v404, %v401
        %v436 = vpack.c.bf16 %v412, %v409
        %v437 = vpack.c.bf16 %v420, %v417
        %v438 = vpack.c.bf16 %v428, %v425
        %439 = vst [vmem:[#allocation2] sm:$0xff] %v431
        %440 = vst [vmem:[#allocation2 + $0x18] sm:$0xff] %v432
        %441 = vst [vmem:[#allocation2 + $0x30] sm:$0xff] %v433
        %442 = vst [vmem:[#allocation2 + $0x48] sm:$0xff] %v434
        %443 = vst [vmem:[#allocation2 + $0x60] sm:$0xff] %v435
        %444 = vst [vmem:[#allocation2 + $0x78] sm:$0xff] %v436
        %445 = vst [vmem:[#allocation2 + $0x90] sm:$0xff] %v437
        %446 = vst [vmem:[#allocation2 + $0xa8] sm:$0xff] %v438
        %v447 = vld [vmem:[#allocation7 + $0x40] sm:$0xf]
        %v448 = vld [vmem:[#allocation7 + $0x44] sm:$0xf]
        %v449 = vld [vmem:[#allocation7 + $0x48] sm:$0xf]
        %v450 = vld [vmem:[#allocation7 + $0x4c] sm:$0xf]
        %v451 = vld [vmem:[#allocation7 + $0x50] sm:$0xf]
        %v452 = vld [vmem:[#allocation7 + $0x54] sm:$0xf]
        %v453 = vld [vmem:[#allocation7 + $0x58] sm:$0xf]
        %v454 = vld [vmem:[#allocation7 + $0x5c] sm:$0xf]
        %v455 = vld [vmem:[#allocation7 + $0x60] sm:$0xf]
        %v456 = vld [vmem:[#allocation7 + $0x64] sm:$0xf]
        %v457 = vld [vmem:[#allocation7 + $0x68] sm:$0xf]
        %v458 = vld [vmem:[#allocation7 + $0x6c] sm:$0xf]
        %v459 = vld [vmem:[#allocation7 + $0x70] sm:$0xf]
        %v460 = vld [vmem:[#allocation7 + $0x74] sm:$0xf]
        %v461 = vld [vmem:[#allocation7 + $0x78] sm:$0xf]
        %v462 = vld [vmem:[#allocation7 + $0x7c] sm:$0xf]
        %v479 = vunpack.c.l.b16 %v447
        %v480 = vunpack.c.l.b16 %v448
        %v481 = vunpack.c.l.b16 %v449
        %v482 = vunpack.c.l.b16 %v450
        %v483 = vunpack.c.l.b16 %v451
        %v484 = vunpack.c.l.b16 %v452
        %v485 = vunpack.c.l.b16 %v453
        %v486 = vunpack.c.l.b16 %v454
        %v487 = vunpack.c.l.b16 %v455
        %v488 = vunpack.c.l.b16 %v456
        %v489 = vunpack.c.l.b16 %v457
        %v490 = vunpack.c.l.b16 %v458
        %v491 = vunpack.c.l.b16 %v459
        %v492 = vunpack.c.l.b16 %v460
        %v493 = vunpack.c.l.b16 %v461
        %v494 = vunpack.c.l.b16 %v462
        %v495 = vpack.c.b16 %v480, %v479
        %v496 = vpack.c.b16 %v482, %v481
        %v497 = vpack.c.b16 %v484, %v483
        %v498 = vpack.c.b16 %v486, %v485
        %v499 = vpack.c.b16 %v488, %v487
        %v500 = vpack.c.b16 %v490, %v489
        %v501 = vpack.c.b16 %v492, %v491
        %v502 = vpack.c.b16 %v494, %v493
        %511 = vmatprep.subr.bf16.mxu0 0
        %512 = vmatpush1.bf16.xpose.msra.mxu0 %v495
        %513 = vmatprep.subr.bf16.mxu0 0
        %514 = vmatpush1.bf16.xpose.msra.mxu0 %v496
        %515 = vmatprep.subr.bf16.mxu0 0
        %516 = vmatpush1.bf16.xpose.msra.mxu0 %v497
        %517 = vmatprep.subr.bf16.mxu0 0
        %518 = vmatpush1.bf16.xpose.msra.mxu0 %v498
        %519 = vmatprep.subr.bf16.mxu0 0
        %520 = vmatpush1.bf16.xpose.msra.mxu0 %v499
        %521 = vmatprep.subr.bf16.mxu0 0
        %522 = vmatpush1.bf16.xpose.msra.mxu0 %v500
        %523 = vmatprep.subr.bf16.mxu0 0
        %524 = vmatpush1.bf16.xpose.msra.mxu0 %v501
        %525 = vmatprep.subr.bf16.mxu0 0
        %526 = vmatpush1.bf16.xpose.msra.mxu0 %v502
        %527 = vmatprep.subr.bf16.mxu0 0
        %528 = vmatpush1.bf16.xpose.msra.mxu0 0
        %529 = vmatprep.subr.bf16.mxu0 0
        %530 = vmatpush1.bf16.xpose.msra.mxu0 0
        %531 = vmatprep.subr.bf16.mxu0 0
        %532 = vmatpush1.bf16.xpose.msra.mxu0 0
        %533 = vmatprep.subr.bf16.mxu0 0
        %534 = vmatpush1.bf16.xpose.msra.mxu0 0
        %535 = vmatprep.subr.bf16.mxu0 0
        %536 = vmatpush1.bf16.xpose.msra.mxu0 0
        %537 = vmatprep.subr.bf16.mxu0 0
        %538 = vmatpush1.bf16.xpose.msra.mxu0 0
        %539 = vmatprep.subr.bf16.mxu0 0
        %540 = vmatpush1.bf16.xpose.msra.mxu0 0
        %541 = vmatprep.subr.bf16.mxu0 0
        %542 = vmatpush1.bf16.xpose.msra.mxu0 0
        %543 = vmatprep.mubr.bf16.mxu0 0
        %544 = vmatmul.mubr.bf16.gmra.mrb[0].mxu0 %v262
        %v545 = vpop.f32.mrb[0].mxu0
        %v546 = vadd.f32 0.0, %v545
        %v547 = vpop.f32.mrb[0].mxu0
        %v548 = vpop.f32.mrb[0].mxu0
        %v549 = vadd.f32 0.0, %v548
        %v550 = vpop.f32.mrb[0].mxu0
        %551 = vmatprep.mubr.bf16.mxu0 0
        %552 = vmatmul.mubr.bf16.gmra.mrb[0].mxu0 %v263
        %v553 = vpop.f32.mrb[0].mxu0
        %v554 = vadd.f32 0.0, %v553
        %v555 = vpop.f32.mrb[0].mxu0
        %v556 = vpop.f32.mrb[0].mxu0
        %v557 = vadd.f32 0.0, %v556
        %v558 = vpop.f32.mrb[0].mxu0
        %559 = vmatprep.mubr.bf16.mxu0 0
        %560 = vmatmul.mubr.bf16.gmra.mrb[0].mxu0 %v264
        %v561 = vpop.f32.mrb[0].mxu0
        %v562 = vadd.f32 0.0, %v561
        %v563 = vpop.f32.mrb[0].mxu0
        %v564 = vpop.f32.mrb[0].mxu0
        %v565 = vadd.f32 0.0, %v564
        %v566 = vpop.f32.mrb[0].mxu0
        %567 = vmatprep.mubr.bf16.mxu0 0
        %568 = vmatmul.mubr.bf16.gmra.mrb[0].mxu0 %v265
        %v569 = vpop.f32.mrb[0].mxu0
        %v570 = vadd.f32 0.0, %v569
        %v571 = vpop.f32.mrb[0].mxu0
        %v572 = vpop.f32.mrb[0].mxu0
        %v573 = vadd.f32 0.0, %v572
        %v574 = vpop.f32.mrb[0].mxu0
        %575 = vmatprep.mubr.bf16.mxu0 0
        %576 = vmatmul.mubr.bf16.gmra.mrb[0].mxu0 %v266
        %v577 = vpop.f32.mrb[0].mxu0
        %v578 = vadd.f32 0.0, %v577
        %v579 = vpop.f32.mrb[0].mxu0
        %v580 = vpop.f32.mrb[0].mxu0
        %v581 = vadd.f32 0.0, %v580
        %v582 = vpop.f32.mrb[0].mxu0
        %583 = vmatprep.mubr.bf16.mxu0 0
        %584 = vmatmul.mubr.bf16.gmra.mrb[0].mxu0 %v267
        %v585 = vpop.f32.mrb[0].mxu0
        %v586 = vadd.f32 0.0, %v585
        %v587 = vpop.f32.mrb[0].mxu0
        %v588 = vpop.f32.mrb[0].mxu0
        %v589 = vadd.f32 0.0, %v588
        %v590 = vpop.f32.mrb[0].mxu0
        %591 = vmatprep.mubr.bf16.mxu0 0
        %592 = vmatmul.mubr.bf16.gmra.mrb[0].mxu0 %v268
        %v593 = vpop.f32.mrb[0].mxu0
        %v594 = vadd.f32 0.0, %v593
        %v595 = vpop.f32.mrb[0].mxu0
        %v596 = vpop.f32.mrb[0].mxu0
        %v597 = vadd.f32 0.0, %v596
        %v598 = vpop.f32.mrb[0].mxu0
        %599 = vmatprep.mubr.bf16.mxu0 0
        %600 = vmatmul.mubr.bf16.gmra.mrb[0].mxu0 %v269
        %v601 = vpop.f32.mrb[0].mxu0
        %v602 = vadd.f32 0.0, %v601
        %v603 = vpop.f32.mrb[0].mxu0
        %v604 = vpop.f32.mrb[0].mxu0
        %v605 = vadd.f32 0.0, %v604
        %v606 = vpop.f32.mrb[0].mxu0
        %607 = vdwg.mxu0
        %v608 = vpack.c.bf16 %v549, %v546
        %v609 = vpack.c.bf16 %v557, %v554
        %v610 = vpack.c.bf16 %v565, %v562
        %v611 = vpack.c.bf16 %v573, %v570
        %v612 = vpack.c.bf16 %v581, %v578
        %v613 = vpack.c.bf16 %v589, %v586
        %v614 = vpack.c.bf16 %v597, %v594
        %v615 = vpack.c.bf16 %v605, %v602
        %616 = vst [vmem:[#allocation2 + $0x8] sm:$0xff] %v608
        %617 = vst [vmem:[#allocation2 + $0x20] sm:$0xff] %v609
        %618 = vst [vmem:[#allocation2 + $0x38] sm:$0xff] %v610
        %619 = vst [vmem:[#allocation2 + $0x50] sm:$0xff] %v611
        %620 = vst [vmem:[#allocation2 + $0x68] sm:$0xff] %v612
        %621 = vst [vmem:[#allocation2 + $0x80] sm:$0xff] %v613
        %622 = vst [vmem:[#allocation2 + $0x98] sm:$0xff] %v614
        %623 = vst [vmem:[#allocation2 + $0xb0] sm:$0xff] %v615
        %v624 = vld [vmem:[#allocation7 + $0x80] sm:$0xf]
        %v625 = vld [vmem:[#allocation7 + $0x84] sm:$0xf]
        %v626 = vld [vmem:[#allocation7 + $0x88] sm:$0xf]
        %v627 = vld [vmem:[#allocation7 + $0x8c] sm:$0xf]
        %v628 = vld [vmem:[#allocation7 + $0x90] sm:$0xf]
        %v629 = vld [vmem:[#allocation7 + $0x94] sm:$0xf]
        %v630 = vld [vmem:[#allocation7 + $0x98] sm:$0xf]
        %v631 = vld [vmem:[#allocation7 + $0x9c] sm:$0xf]
        %v632 = vld [vmem:[#allocation7 + $0xa0] sm:$0xf]
        %v633 = vld [vmem:[#allocation7 + $0xa4] sm:$0xf]
        %v634 = vld [vmem:[#allocation7 + $0xa8] sm:$0xf]
        %v635 = vld [vmem:[#allocation7 + $0xac] sm:$0xf]
        %v636 = vld [vmem:[#allocation7 + $0xb0] sm:$0xf]
        %v637 = vld [vmem:[#allocation7 + $0xb4] sm:$0xf]
        %v638 = vld [vmem:[#allocation7 + $0xb8] sm:$0xf]
        %v639 = vld [vmem:[#allocation7 + $0xbc] sm:$0xf]
        %v656 = vunpack.c.l.b16 %v624
        %v657 = vunpack.c.l.b16 %v625
        %v658 = vunpack.c.l.b16 %v626
        %v659 = vunpack.c.l.b16 %v627
        %v660 = vunpack.c.l.b16 %v628
        %v661 = vunpack.c.l.b16 %v629
        %v662 = vunpack.c.l.b16 %v630
        %v663 = vunpack.c.l.b16 %v631
        %v664 = vunpack.c.l.b16 %v632
        %v665 = vunpack.c.l.b16 %v633
        %v666 = vunpack.c.l.b16 %v634
        %v667 = vunpack.c.l.b16 %v635
        %v668 = vunpack.c.l.b16 %v636
        %v669 = vunpack.c.l.b16 %v637
        %v670 = vunpack.c.l.b16 %v638
        %v671 = vunpack.c.l.b16 %v639
        %v672 = vpack.c.b16 %v657, %v656
        %v673 = vpack.c.b16 %v659, %v658
        %v674 = vpack.c.b16 %v661, %v660
        %v675 = vpack.c.b16 %v663, %v662
        %v676 = vpack.c.b16 %v665, %v664
        %v677 = vpack.c.b16 %v667, %v666
        %v678 = vpack.c.b16 %v669, %v668
        %v679 = vpack.c.b16 %v671, %v670
        %688 = vmatprep.subr.bf16.mxu0 0
        %689 = vmatpush1.bf16.xpose.msra.mxu0 %v672
        %690 = vmatprep.subr.bf16.mxu0 0
        %691 = vmatpush1.bf16.xpose.msra.mxu0 %v673
        %692 = vmatprep.subr.bf16.mxu0 0
        %693 = vmatpush1.bf16.xpose.msra.mxu0 %v674
        %694 = vmatprep.subr.bf16.mxu0 0
        %695 = vmatpush1.bf16.xpose.msra.mxu0 %v675
        %696 = vmatprep.subr.bf16.mxu0 0
        %697 = vmatpush1.bf16.xpose.msra.mxu0 %v676
        %698 = vmatprep.subr.bf16.mxu0 0
        %699 = vmatpush1.bf16.xpose.msra.mxu0 %v677
        %700 = vmatprep.subr.bf16.mxu0 0
        %701 = vmatpush1.bf16.xpose.msra.mxu0 %v678
        %702 = vmatprep.subr.bf16.mxu0 0
        %703 = vmatpush1.bf16.xpose.msra.mxu0 %v679
        %704 = vmatprep.subr.bf16.mxu0 0
        %705 = vmatpush1.bf16.xpose.msra.mxu0 0
        %706 = vmatprep.subr.bf16.mxu0 0
        %707 = vmatpush1.bf16.xpose.msra.mxu0 0
        %708 = vmatprep.subr.bf16.mxu0 0
        %709 = vmatpush1.bf16.xpose.msra.mxu0 0
        %710 = vmatprep.subr.bf16.mxu0 0
        %711 = vmatpush1.bf16.xpose.msra.mxu0 0
        %712 = vmatprep.subr.bf16.mxu0 0
        %713 = vmatpush1.bf16.xpose.msra.mxu0 0
        %714 = vmatprep.subr.bf16.mxu0 0
        %715 = vmatpush1.bf16.xpose.msra.mxu0 0
        %716 = vmatprep.subr.bf16.mxu0 0
        %717 = vmatpush1.bf16.xpose.msra.mxu0 0
        %718 = vmatprep.subr.bf16.mxu0 0
        %719 = vmatpush1.bf16.xpose.msra.mxu0 0
        %720 = vmatprep.mubr.bf16.mxu0 0
        %721 = vmatmul.mubr.bf16.gmra.mrb[0].mxu0 %v262
        %v722 = vpop.f32.mrb[0].mxu0
        %v723 = vadd.f32 0.0, %v722
        %v724 = vpop.f32.mrb[0].mxu0
        %v725 = vpop.f32.mrb[0].mxu0
        %v726 = vadd.f32 0.0, %v725
        %v727 = vpop.f32.mrb[0].mxu0
        %728 = vmatprep.mubr.bf16.mxu0 0
        %729 = vmatmul.mubr.bf16.gmra.mrb[0].mxu0 %v263
        %v730 = vpop.f32.mrb[0].mxu0
        %v731 = vadd.f32 0.0, %v730
        %v732 = vpop.f32.mrb[0].mxu0
        %v733 = vpop.f32.mrb[0].mxu0
        %v734 = vadd.f32 0.0, %v733
        %v735 = vpop.f32.mrb[0].mxu0
        %736 = vmatprep.mubr.bf16.mxu0 0
        %737 = vmatmul.mubr.bf16.gmra.mrb[0].mxu0 %v264
        %v738 = vpop.f32.mrb[0].mxu0
        %v739 = vadd.f32 0.0, %v738
        %v740 = vpop.f32.mrb[0].mxu0
        %v741 = vpop.f32.mrb[0].mxu0
        %v742 = vadd.f32 0.0, %v741
        %v743 = vpop.f32.mrb[0].mxu0
        %744 = vmatprep.mubr.bf16.mxu0 0
        %745 = vmatmul.mubr.bf16.gmra.mrb[0].mxu0 %v265
        %v746 = vpop.f32.mrb[0].mxu0
        %v747 = vadd.f32 0.0, %v746
        %v748 = vpop.f32.mrb[0].mxu0
        %v749 = vpop.f32.mrb[0].mxu0
        %v750 = vadd.f32 0.0, %v749
        %v751 = vpop.f32.mrb[0].mxu0
        %752 = vmatprep.mubr.bf16.mxu0 0
        %753 = vmatmul.mubr.bf16.gmra.mrb[0].mxu0 %v266
        %v754 = vpop.f32.mrb[0].mxu0
        %v755 = vadd.f32 0.0, %v754
        %v756 = vpop.f32.mrb[0].mxu0
        %v757 = vpop.f32.mrb[0].mxu0
        %v758 = vadd.f32 0.0, %v757
        %v759 = vpop.f32.mrb[0].mxu0
        %760 = vmatprep.mubr.bf16.mxu0 0
        %761 = vmatmul.mubr.bf16.gmra.mrb[0].mxu0 %v267
        %v762 = vpop.f32.mrb[0].mxu0
        %v763 = vadd.f32 0.0, %v762
        %v764 = vpop.f32.mrb[0].mxu0
        %v765 = vpop.f32.mrb[0].mxu0
        %v766 = vadd.f32 0.0, %v765
        %v767 = vpop.f32.mrb[0].mxu0
        %768 = vmatprep.mubr.bf16.mxu0 0
        %769 = vmatmul.mubr.bf16.gmra.mrb[0].mxu0 %v268
        %v770 = vpop.f32.mrb[0].mxu0
        %v771 = vadd.f32 0.0, %v770
        %v772 = vpop.f32.mrb[0].mxu0
        %v773 = vpop.f32.mrb[0].mxu0
        %v774 = vadd.f32 0.0, %v773
        %v775 = vpop.f32.mrb[0].mxu0
        %776 = vmatprep.mubr.bf16.mxu0 0
        %777 = vmatmul.mubr.bf16.gmra.mrb[0].mxu0 %v269
        %v778 = vpop.f32.mrb[0].mxu0
        %v779 = vadd.f32 0.0, %v778
        %v780 = vpop.f32.mrb[0].mxu0
        %v781 = vpop.f32.mrb[0].mxu0
        %v782 = vadd.f32 0.0, %v781
        %v783 = vpop.f32.mrb[0].mxu0
        %784 = vdwg.mxu0
        %v785 = vpack.c.bf16 %v726, %v723
        %v786 = vpack.c.bf16 %v734, %v731
        %v787 = vpack.c.bf16 %v742, %v739
        %v788 = vpack.c.bf16 %v750, %v747
        %v789 = vpack.c.bf16 %v758, %v755
        %v790 = vpack.c.bf16 %v766, %v763
        %v791 = vpack.c.bf16 %v774, %v771
        %v792 = vpack.c.bf16 %v782, %v779
        %793 = vst [vmem:[#allocation2 + $0x10] sm:$0xff] %v785
        %794 = vst [vmem:[#allocation2 + $0x28] sm:$0xff] %v786
        %795 = vst [vmem:[#allocation2 + $0x40] sm:$0xff] %v787
        %796 = vst [vmem:[#allocation2 + $0x58] sm:$0xff] %v788
        %797 = vst [vmem:[#allocation2 + $0x70] sm:$0xff] %v789
        %798 = vst [vmem:[#allocation2 + $0x88] sm:$0xff] %v790
        %799 = vst [vmem:[#allocation2 + $0xa0] sm:$0xff] %v791
        %800 = vst [vmem:[#allocation2 + $0xb8] sm:$0xff] %v792
        %v801 = vld [vmem:[#allocation2] sm:$0xff]
        %v802 = vld [vmem:[#allocation2 + $0x18] sm:$0xff]
        %v803 = vld [vmem:[#allocation2 + $0x30] sm:$0xff]
        %v804 = vld [vmem:[#allocation2 + $0x48] sm:$0xff]
        %v805 = vld [vmem:[#allocation2 + $0x60] sm:$0xff]
        %v806 = vld [vmem:[#allocation2 + $0x78] sm:$0xff]
        %v807 = vld [vmem:[#allocation2 + $0x90] sm:$0xff]
        %v808 = vld [vmem:[#allocation2 + $0xa8] sm:$0xff]
        %v809 = vld [vmem:[#allocation2 + $0x8] sm:$0xff]
        %v810 = vld [vmem:[#allocation2 + $0x20] sm:$0xff]
        %v811 = vld [vmem:[#allocation2 + $0x38] sm:$0xff]
        %v812 = vld [vmem:[#allocation2 + $0x50] sm:$0xff]
        %v813 = vld [vmem:[#allocation2 + $0x68] sm:$0xff]
        %v814 = vld [vmem:[#allocation2 + $0x80] sm:$0xff]
        %v815 = vld [vmem:[#allocation2 + $0x98] sm:$0xff]
        %v816 = vld [vmem:[#allocation2 + $0xb0] sm:$0xff]
        %v817 = vld [vmem:[#allocation2 + $0x10] sm:$0xff]
        %v818 = vld [vmem:[#allocation2 + $0x28] sm:$0xff]
        %v819 = vld [vmem:[#allocation2 + $0x40] sm:$0xff]
        %v820 = vld [vmem:[#allocation2 + $0x58] sm:$0xff]
        %v821 = vld [vmem:[#allocation2 + $0x70] sm:$0xff]
        %v822 = vld [vmem:[#allocation2 + $0x88] sm:$0xff]
        %v823 = vld [vmem:[#allocation2 + $0xa0] sm:$0xff]
        %v824 = vld [vmem:[#allocation2 + $0xb8] sm:$0xff]
        %vm825 = vcmask 130048
        %v827 = vsel %vm825, %v801, 0
        %v830 = vsel %vm825, %v802, 0
        %v833 = vsel %vm825, %v803, 0
        %v836 = vsel %vm825, %v804, 0
        %v839 = vsel %vm825, %v805, 0
        %v842 = vsel %vm825, %v806, 0
        %v845 = vsel %vm825, %v807, 0
        %v848 = vsel %vm825, %v808, 0
        %v851 = vsel %vm825, %v809, 0
        %v854 = vsel %vm825, %v810, 0
        %v857 = vsel %vm825, %v811, 0
        %v860 = vsel %vm825, %v812, 0
        %v863 = vsel %vm825, %v813, 0
        %v866 = vsel %vm825, %v814, 0
        %v869 = vsel %vm825, %v815, 0
        %v872 = vsel %vm825, %v816, 0
        %874 = vmatprep.subr.bf16.mxu0 0
        %875 = vmatpush1.bf16.xpose.msra.mxu0 %v851
        %876 = vmatprep.subr.bf16.mxu0 0
        %877 = vmatpush1.bf16.xpose.msra.mxu0 %v854
        %878 = vmatprep.subr.bf16.mxu0 0
        %879 = vmatpush1.bf16.xpose.msra.mxu0 %v857
        %880 = vmatprep.subr.bf16.mxu0 0
        %881 = vmatpush1.bf16.xpose.msra.mxu0 %v860
        %882 = vmatprep.subr.bf16.mxu0 0
        %883 = vmatpush1.bf16.xpose.msra.mxu0 %v863
        %884 = vmatprep.subr.bf16.mxu0 0
        %885 = vmatpush1.bf16.xpose.msra.mxu0 %v866
        %886 = vmatprep.subr.bf16.mxu0 0
        %887 = vmatpush1.bf16.xpose.msra.mxu0 %v869
        %888 = vmatprep.subr.bf16.mxu0 0
        %889 = vmatpush1.bf16.xpose.msra.mxu0 %v872
        %890 = vmatprep.subr.bf16.mxu0 0
        %891 = vmatpush1.bf16.xpose.msra.mxu0 0
        %892 = vmatprep.subr.bf16.mxu0 0
        %893 = vmatpush1.bf16.xpose.msra.mxu0 0
        %894 = vmatprep.subr.bf16.mxu0 0
        %895 = vmatpush1.bf16.xpose.msra.mxu0 0
        %896 = vmatprep.subr.bf16.mxu0 0
        %897 = vmatpush1.bf16.xpose.msra.mxu0 0
        %898 = vmatprep.subr.bf16.mxu0 0
        %899 = vmatpush1.bf16.xpose.msra.mxu0 0
        %900 = vmatprep.subr.bf16.mxu0 0
        %901 = vmatpush1.bf16.xpose.msra.mxu0 0
        %902 = vmatprep.subr.bf16.mxu0 0
        %903 = vmatpush1.bf16.xpose.msra.mxu0 0
        %904 = vmatprep.subr.bf16.mxu0 0
        %905 = vmatpush1.bf16.xpose.msra.mxu0 0
        %906 = vmatprep.mubr.bf16.mxu0 0
        %907 = vmatmul.mubr.bf16.gmra.mrb[0].mxu0 %v827
        %v908 = vpop.f32.mrb[0].mxu0
        %v909 = vadd.f32 0.0, %v908
        %v910 = vpop.f32.mrb[0].mxu0
        %v911 = vpop.f32.mrb[0].mxu0
        %v912 = vadd.f32 0.0, %v911
        %v913 = vpop.f32.mrb[0].mxu0
        %914 = vmatprep.mubr.bf16.mxu0 0
        %915 = vmatmul.mubr.bf16.gmra.mrb[0].mxu0 %v830
        %v916 = vpop.f32.mrb[0].mxu0
        %v917 = vadd.f32 0.0, %v916
        %v918 = vpop.f32.mrb[0].mxu0
        %v919 = vpop.f32.mrb[0].mxu0
        %v920 = vadd.f32 0.0, %v919
        %v921 = vpop.f32.mrb[0].mxu0
        %922 = vmatprep.mubr.bf16.mxu0 0
        %923 = vmatmul.mubr.bf16.gmra.mrb[0].mxu0 %v833
        %v924 = vpop.f32.mrb[0].mxu0
        %v925 = vadd.f32 0.0, %v924
        %v926 = vpop.f32.mrb[0].mxu0
        %v927 = vpop.f32.mrb[0].mxu0
        %v928 = vadd.f32 0.0, %v927
        %v929 = vpop.f32.mrb[0].mxu0
        %930 = vmatprep.mubr.bf16.mxu0 0
        %931 = vmatmul.mubr.bf16.gmra.mrb[0].mxu0 %v836
        %v932 = vpop.f32.mrb[0].mxu0
        %v933 = vadd.f32 0.0, %v932
        %v934 = vpop.f32.mrb[0].mxu0
        %v935 = vpop.f32.mrb[0].mxu0
        %v936 = vadd.f32 0.0, %v935
        %v937 = vpop.f32.mrb[0].mxu0
        %938 = vmatprep.mubr.bf16.mxu0 0
        %939 = vmatmul.mubr.bf16.gmra.mrb[0].mxu0 %v839
        %v940 = vpop.f32.mrb[0].mxu0
        %v941 = vadd.f32 0.0, %v940
        %v942 = vpop.f32.mrb[0].mxu0
        %v943 = vpop.f32.mrb[0].mxu0
        %v944 = vadd.f32 0.0, %v943
        %v945 = vpop.f32.mrb[0].mxu0
        %946 = vmatprep.mubr.bf16.mxu0 0
        %947 = vmatmul.mubr.bf16.gmra.mrb[0].mxu0 %v842
        %v948 = vpop.f32.mrb[0].mxu0
        %v949 = vadd.f32 0.0, %v948
        %v950 = vpop.f32.mrb[0].mxu0
        %v951 = vpop.f32.mrb[0].mxu0
        %v952 = vadd.f32 0.0, %v951
        %v953 = vpop.f32.mrb[0].mxu0
        %954 = vmatprep.mubr.bf16.mxu0 0
        %955 = vmatmul.mubr.bf16.gmra.mrb[0].mxu0 %v845
        %v956 = vpop.f32.mrb[0].mxu0
        %v957 = vadd.f32 0.0, %v956
        %v958 = vpop.f32.mrb[0].mxu0
        %v959 = vpop.f32.mrb[0].mxu0
        %v960 = vadd.f32 0.0, %v959
        %v961 = vpop.f32.mrb[0].mxu0
        %962 = vmatprep.mubr.bf16.mxu0 0
        %963 = vmatmul.mubr.bf16.gmra.mrb[0].mxu0 %v848
        %v964 = vpop.f32.mrb[0].mxu0
        %v965 = vadd.f32 0.0, %v964
        %v966 = vpop.f32.mrb[0].mxu0
        %v967 = vpop.f32.mrb[0].mxu0
        %v968 = vadd.f32 0.0, %v967
        %v969 = vpop.f32.mrb[0].mxu0
        %970 = vdwg.mxu0
        %971 = vmax.xlane.f32.xlu0 %v909
        %v972 = vpop.xlane.xlu0 %971
        %973 = vmax.xlane.f32.xlu0 %v912
        %v974 = vpop.xlane.xlu0 %973
        %975 = vmax.xlane.f32.xlu0 %v917
        %v976 = vpop.xlane.xlu0 %975
        %977 = vmax.xlane.f32.xlu0 %v920
        %v978 = vpop.xlane.xlu0 %977
        %979 = vmax.xlane.f32.xlu0 %v925
        %v980 = vpop.xlane.xlu0 %979
        %981 = vmax.xlane.f32.xlu0 %v928
        %v982 = vpop.xlane.xlu0 %981
        %983 = vmax.xlane.f32.xlu0 %v933
        %v984 = vpop.xlane.xlu0 %983
        %985 = vmax.xlane.f32.xlu0 %v936
        %v986 = vpop.xlane.xlu0 %985
        %987 = vmax.xlane.f32.xlu0 %v941
        %v988 = vpop.xlane.xlu0 %987
        %989 = vmax.xlane.f32.xlu0 %v944
        %v990 = vpop.xlane.xlu0 %989
        %991 = vmax.xlane.f32.xlu0 %v949
        %v992 = vpop.xlane.xlu0 %991
        %993 = vmax.xlane.f32.xlu0 %v952
        %v994 = vpop.xlane.xlu0 %993
        %995 = vmax.xlane.f32.xlu0 %v957
        %v996 = vpop.xlane.xlu0 %995
        %997 = vmax.xlane.f32.xlu0 %v960
        %v998 = vpop.xlane.xlu0 %997
        %999 = vmax.xlane.f32.xlu0 %v965
        %v1000 = vpop.xlane.xlu0 %999
        %1001 = vmax.xlane.f32.xlu0 %v968
        %v1002 = vpop.xlane.xlu0 %1001
        %v1003 = vsub.f32 %v909, %v972
        %v1004 = vsub.f32 %v912, %v974
        %v1005 = vsub.f32 %v917, %v976
        %v1006 = vsub.f32 %v920, %v978
        %v1007 = vsub.f32 %v925, %v980
        %v1008 = vsub.f32 %v928, %v982
        %v1009 = vsub.f32 %v933, %v984
        %v1010 = vsub.f32 %v936, %v986
        %v1011 = vsub.f32 %v941, %v988
        %v1012 = vsub.f32 %v944, %v990
        %v1013 = vsub.f32 %v949, %v992
        %v1014 = vsub.f32 %v952, %v994
        %v1015 = vsub.f32 %v957, %v996
        %v1016 = vsub.f32 %v960, %v998
        %v1017 = vsub.f32 %v965, %v1000
        %v1018 = vsub.f32 %v968, %v1002
        %v1019 = vmul.f32 %v1003, 1.442695
        %v1020 = vpow.pop %v1019
        %v1021 = vmul.f32 %v1004, 1.442695
        %v1022 = vpow.pop %v1021
        %v1023 = vmul.f32 %v1005, 1.442695
        %v1024 = vpow.pop %v1023
        %v1025 = vmul.f32 %v1006, 1.442695
        %v1026 = vpow.pop %v1025
        %v1027 = vmul.f32 %v1007, 1.442695
        %v1028 = vpow.pop %v1027
        %v1029 = vmul.f32 %v1008, 1.442695
        %v1030 = vpow.pop %v1029
        %v1031 = vmul.f32 %v1009, 1.442695
        %v1032 = vpow.pop %v1031
        %v1033 = vmul.f32 %v1010, 1.442695
        %v1034 = vpow.pop %v1033
        %v1035 = vmul.f32 %v1011, 1.442695
        %v1036 = vpow.pop %v1035
        %v1037 = vmul.f32 %v1012, 1.442695
        %v1038 = vpow.pop %v1037
        %v1039 = vmul.f32 %v1013, 1.442695
        %v1040 = vpow.pop %v1039
        %v1041 = vmul.f32 %v1014, 1.442695
        %v1042 = vpow.pop %v1041
        %v1043 = vmul.f32 %v1015, 1.442695
        %v1044 = vpow.pop %v1043
        %v1045 = vmul.f32 %v1016, 1.442695
        %v1046 = vpow.pop %v1045
        %v1047 = vmul.f32 %v1017, 1.442695
        %v1048 = vpow.pop %v1047
        %v1049 = vmul.f32 %v1018, 1.442695
        %v1050 = vpow.pop %v1049
        %1051 = vadd.xlane.f32.xlu0 %v1020
        %v1052 = vpop.xlane.xlu0 %1051
        %1053 = vadd.xlane.f32.xlu0 %v1022
        %v1054 = vpop.xlane.xlu0 %1053
        %1055 = vadd.xlane.f32.xlu0 %v1024
        %v1056 = vpop.xlane.xlu0 %1055
        %1057 = vadd.xlane.f32.xlu0 %v1026
        %v1058 = vpop.xlane.xlu0 %1057
        %1059 = vadd.xlane.f32.xlu0 %v1028
        %v1060 = vpop.xlane.xlu0 %1059
        %1061 = vadd.xlane.f32.xlu0 %v1030
        %v1062 = vpop.xlane.xlu0 %1061
        %1063 = vadd.xlane.f32.xlu0 %v1032
        %v1064 = vpop.xlane.xlu0 %1063
        %1065 = vadd.xlane.f32.xlu0 %v1034
        %v1066 = vpop.xlane.xlu0 %1065
        %1067 = vadd.xlane.f32.xlu0 %v1036
        %v1068 = vpop.xlane.xlu0 %1067
        %1069 = vadd.xlane.f32.xlu0 %v1038
        %v1070 = vpop.xlane.xlu0 %1069
        %1071 = vadd.xlane.f32.xlu0 %v1040
        %v1072 = vpop.xlane.xlu0 %1071
        %1073 = vadd.xlane.f32.xlu0 %v1042
        %v1074 = vpop.xlane.xlu0 %1073
        %1075 = vadd.xlane.f32.xlu0 %v1044
        %v1076 = vpop.xlane.xlu0 %1075
        %1077 = vadd.xlane.f32.xlu0 %v1046
        %v1078 = vpop.xlane.xlu0 %1077
        %1079 = vadd.xlane.f32.xlu0 %v1048
        %v1080 = vpop.xlane.xlu0 %1079
        %1081 = vadd.xlane.f32.xlu0 %v1050
        %v1082 = vpop.xlane.xlu0 %1081
        %v1083 = vrcp.pop %v1052
        %v1084 = vrcp.pop %v1054
        %v1085 = vrcp.pop %v1056
        %v1086 = vrcp.pop %v1058
        %v1087 = vrcp.pop %v1060
        %v1088 = vrcp.pop %v1062
        %v1089 = vrcp.pop %v1064
        %v1090 = vrcp.pop %v1066
        %v1091 = vrcp.pop %v1068
        %v1092 = vrcp.pop %v1070
        %v1093 = vrcp.pop %v1072
        %v1094 = vrcp.pop %v1074
        %v1095 = vrcp.pop %v1076
        %v1096 = vrcp.pop %v1078
        %v1097 = vrcp.pop %v1080
        %v1098 = vrcp.pop %v1082
        %v1099 = vpack.c.bf16 %v1022, %v1020
        %v1100 = vpack.c.bf16 %v1026, %v1024
        %v1101 = vpack.c.bf16 %v1030, %v1028
        %v1102 = vpack.c.bf16 %v1034, %v1032
        %v1103 = vpack.c.bf16 %v1038, %v1036
        %v1104 = vpack.c.bf16 %v1042, %v1040
        %v1105 = vpack.c.bf16 %v1046, %v1044
        %v1106 = vpack.c.bf16 %v1050, %v1048
        %1107 = vmatprep.subr.bf16.mxu0 0
        %1108 = vmatpush1.bf16.msra.mxu0 %v817
        %1109 = vmatprep.subr.bf16.mxu0 0
        %1110 = vmatpush1.bf16.msra.mxu0 %v818
        %1111 = vmatprep.subr.bf16.mxu0 0
        %1112 = vmatpush1.bf16.msra.mxu0 %v819
        %1113 = vmatprep.subr.bf16.mxu0 0
        %1114 = vmatpush1.bf16.msra.mxu0 %v820
        %1115 = vmatprep.subr.bf16.mxu0 0
        %1116 = vmatpush1.bf16.msra.mxu0 %v821
        %1117 = vmatprep.subr.bf16.mxu0 0
        %1118 = vmatpush1.bf16.msra.mxu0 %v822
        %1119 = vmatprep.subr.bf16.mxu0 0
        %1120 = vmatpush1.bf16.msra.mxu0 %v823
        %1121 = vmatprep.subr.bf16.mxu0 0
        %1122 = vmatpush1.bf16.msra.mxu0 %v824
        %1123 = vmatprep.subr.bf16.mxu0 0
        %1124 = vmatpush1.bf16.msra.mxu0 0
        %1125 = vmatprep.subr.bf16.mxu0 0
        %1126 = vmatpush1.bf16.msra.mxu0 0
        %1127 = vmatprep.subr.bf16.mxu0 0
        %1128 = vmatpush1.bf16.msra.mxu0 0
        %1129 = vmatprep.subr.bf16.mxu0 0
        %1130 = vmatpush1.bf16.msra.mxu0 0
        %1131 = vmatprep.subr.bf16.mxu0 0
        %1132 = vmatpush1.bf16.msra.mxu0 0
        %1133 = vmatprep.subr.bf16.mxu0 0
        %1134 = vmatpush1.bf16.msra.mxu0 0
        %1135 = vmatprep.subr.bf16.mxu0 0
        %1136 = vmatpush1.bf16.msra.mxu0 0
        %1137 = vmatprep.subr.bf16.mxu0 0
        %1138 = vmatpush1.bf16.msra.mxu0 0
        %1139 = vmatprep.mubr.bf16.mxu0 0
        %1140 = vmatmul.mubr.bf16.gmra.mrb[0].mxu0 %v1099
        %v1141 = vpop.f32.mrb[0].mxu0
        %v1142 = vadd.f32 0.0, %v1141
        %v1143 = vpop.f32.mrb[0].mxu0
        %v1144 = vpop.f32.mrb[0].mxu0
        %v1145 = vadd.f32 0.0, %v1144
        %v1146 = vpop.f32.mrb[0].mxu0
        %1147 = vmatprep.mubr.bf16.mxu0 0
        %1148 = vmatmul.mubr.bf16.gmra.mrb[0].mxu0 %v1100
        %v1149 = vpop.f32.mrb[0].mxu0
        %v1150 = vadd.f32 0.0, %v1149
        %v1151 = vpop.f32.mrb[0].mxu0
        %v1152 = vpop.f32.mrb[0].mxu0
        %v1153 = vadd.f32 0.0, %v1152
        %v1154 = vpop.f32.mrb[0].mxu0
        %1155 = vmatprep.mubr.bf16.mxu0 0
        %1156 = vmatmul.mubr.bf16.gmra.mrb[0].mxu0 %v1101
        %v1157 = vpop.f32.mrb[0].mxu0
        %v1158 = vadd.f32 0.0, %v1157
        %v1159 = vpop.f32.mrb[0].mxu0
        %v1160 = vpop.f32.mrb[0].mxu0
        %v1161 = vadd.f32 0.0, %v1160
        %v1162 = vpop.f32.mrb[0].mxu0
        %1163 = vmatprep.mubr.bf16.mxu0 0
        %1164 = vmatmul.mubr.bf16.gmra.mrb[0].mxu0 %v1102
        %v1165 = vpop.f32.mrb[0].mxu0
        %v1166 = vadd.f32 0.0, %v1165
        %v1167 = vpop.f32.mrb[0].mxu0
        %v1168 = vpop.f32.mrb[0].mxu0
        %v1169 = vadd.f32 0.0, %v1168
        %v1170 = vpop.f32.mrb[0].mxu0
        %1171 = vmatprep.mubr.bf16.mxu0 0
        %1172 = vmatmul.mubr.bf16.gmra.mrb[0].mxu0 %v1103
        %v1173 = vpop.f32.mrb[0].mxu0
        %v1174 = vadd.f32 0.0, %v1173
        %v1175 = vpop.f32.mrb[0].mxu0
        %v1176 = vpop.f32.mrb[0].mxu0
        %v1177 = vadd.f32 0.0, %v1176
        %v1178 = vpop.f32.mrb[0].mxu0
        %1179 = vmatprep.mubr.bf16.mxu0 0
        %1180 = vmatmul.mubr.bf16.gmra.mrb[0].mxu0 %v1104
        %v1181 = vpop.f32.mrb[0].mxu0
        %v1182 = vadd.f32 0.0, %v1181
        %v1183 = vpop.f32.mrb[0].mxu0
        %v1184 = vpop.f32.mrb[0].mxu0
        %v1185 = vadd.f32 0.0, %v1184
        %v1186 = vpop.f32.mrb[0].mxu0
        %1187 = vmatprep.mubr.bf16.mxu0 0
        %1188 = vmatmul.mubr.bf16.gmra.mrb[0].mxu0 %v1105
        %v1189 = vpop.f32.mrb[0].mxu0
        %v1190 = vadd.f32 0.0, %v1189
        %v1191 = vpop.f32.mrb[0].mxu0
        %v1192 = vpop.f32.mrb[0].mxu0
        %v1193 = vadd.f32 0.0, %v1192
        %v1194 = vpop.f32.mrb[0].mxu0
        %1195 = vmatprep.mubr.bf16.mxu0 0
        %1196 = vmatmul.mubr.bf16.gmra.mrb[0].mxu0 %v1106
        %v1197 = vpop.f32.mrb[0].mxu0
        %v1198 = vadd.f32 0.0, %v1197
        %v1199 = vpop.f32.mrb[0].mxu0
        %v1200 = vpop.f32.mrb[0].mxu0
        %v1201 = vadd.f32 0.0, %v1200
        %v1202 = vpop.f32.mrb[0].mxu0
        %1203 = vdwg.mxu0
        %v1204 = vmul.f32 %v1142, %v1083
        %v1205 = vmul.f32 %v1145, %v1084
        %v1206 = vmul.f32 %v1150, %v1085
        %v1207 = vmul.f32 %v1153, %v1086
        %v1208 = vmul.f32 %v1158, %v1087
        %v1209 = vmul.f32 %v1161, %v1088
        %v1210 = vmul.f32 %v1166, %v1089
        %v1211 = vmul.f32 %v1169, %v1090
        %v1212 = vmul.f32 %v1174, %v1091
        %v1213 = vmul.f32 %v1177, %v1092
        %v1214 = vmul.f32 %v1182, %v1093
        %v1215 = vmul.f32 %v1185, %v1094
        %v1216 = vmul.f32 %v1190, %v1095
        %v1217 = vmul.f32 %v1193, %v1096
        %v1218 = vmul.f32 %v1198, %v1097
        %v1219 = vmul.f32 %v1201, %v1098
        %v1220 = vpack.c.bf16 %v1205, %v1204
        %v1221 = vpack.c.bf16 %v1207, %v1206
        %v1222 = vpack.c.bf16 %v1209, %v1208
        %v1223 = vpack.c.bf16 %v1211, %v1210
        %v1224 = vpack.c.bf16 %v1213, %v1212
        %v1225 = vpack.c.bf16 %v1215, %v1214
        %v1226 = vpack.c.bf16 %v1217, %v1216
        %v1227 = vpack.c.bf16 %v1219, %v1218
        %1228 = vst.msk [vmem:[#allocation3] sm:$0xff] %vm825, %v1220
        %1229 = vst.msk [vmem:[#allocation3 + $0x8] sm:$0xff] %vm825, %v1221
        %1230 = vst.msk [vmem:[#allocation3 + $0x10] sm:$0xff] %vm825, %v1222
        %1231 = vst.msk [vmem:[#allocation3 + $0x18] sm:$0xff] %vm825, %v1223
        %1232 = vst.msk [vmem:[#allocation3 + $0x20] sm:$0xff] %vm825, %v1224
        %1233 = vst.msk [vmem:[#allocation3 + $0x28] sm:$0xff] %vm825, %v1225
        %1234 = vst.msk [vmem:[#allocation3 + $0x30] sm:$0xff] %vm825, %v1226
        %1235 = vst.msk [vmem:[#allocation3 + $0x38] sm:$0xff] %vm825, %v1227
        %v1236 = vld [vmem:[#allocation2] sm:$0xff]
        %v1237 = vld [vmem:[#allocation2 + $0x18] sm:$0xff]
        %v1238 = vld [vmem:[#allocation2 + $0x30] sm:$0xff]
        %v1239 = vld [vmem:[#allocation2 + $0x48] sm:$0xff]
        %v1240 = vld [vmem:[#allocation2 + $0x60] sm:$0xff]
        %v1241 = vld [vmem:[#allocation2 + $0x78] sm:$0xff]
        %v1242 = vld [vmem:[#allocation2 + $0x90] sm:$0xff]
        %v1243 = vld [vmem:[#allocation2 + $0xa8] sm:$0xff]
        %v1244 = vld [vmem:[#allocation2 + $0x8] sm:$0xff]
        %v1245 = vld [vmem:[#allocation2 + $0x20] sm:$0xff]
        %v1246 = vld [vmem:[#allocation2 + $0x38] sm:$0xff]
        %v1247 = vld [vmem:[#allocation2 + $0x50] sm:$0xff]
        %v1248 = vld [vmem:[#allocation2 + $0x68] sm:$0xff]
        %v1249 = vld [vmem:[#allocation2 + $0x80] sm:$0xff]
        %v1250 = vld [vmem:[#allocation2 + $0x98] sm:$0xff]
        %v1251 = vld [vmem:[#allocation2 + $0xb0] sm:$0xff]
        %v1252 = vld [vmem:[#allocation2 + $0x10] sm:$0xff]
        %v1253 = vld [vmem:[#allocation2 + $0x28] sm:$0xff]
        %v1254 = vld [vmem:[#allocation2 + $0x40] sm:$0xff]
        %v1255 = vld [vmem:[#allocation2 + $0x58] sm:$0xff]
        %v1256 = vld [vmem:[#allocation2 + $0x70] sm:$0xff]
        %v1257 = vld [vmem:[#allocation2 + $0x88] sm:$0xff]
        %v1258 = vld [vmem:[#allocation2 + $0xa0] sm:$0xff]
        %v1259 = vld [vmem:[#allocation2 + $0xb8] sm:$0xff]
        %1268 = vrot.lane.b32.xlu0 %v1236, 112
        %v1269 = vpop.permute.xlu0 %1268
        %1270 = vrot.lane.b32.xlu0 %v1237, 112
        %v1271 = vpop.permute.xlu0 %1270
        %1272 = vrot.lane.b32.xlu0 %v1238, 112
        %v1273 = vpop.permute.xlu0 %1272
        %1274 = vrot.lane.b32.xlu0 %v1239, 112
        %v1275 = vpop.permute.xlu0 %1274
        %1276 = vrot.lane.b32.xlu0 %v1240, 112
        %v1277 = vpop.permute.xlu0 %1276
        %1278 = vrot.lane.b32.xlu0 %v1241, 112
        %v1279 = vpop.permute.xlu0 %1278
        %1280 = vrot.lane.b32.xlu0 %v1242, 112
        %v1281 = vpop.permute.xlu0 %1280
        %1282 = vrot.lane.b32.xlu0 %v1243, 112
        %v1283 = vpop.permute.xlu0 %1282
        %1292 = vrot.lane.b32.xlu0 %v1244, 112
        %v1293 = vpop.permute.xlu0 %1292
        %1294 = vrot.lane.b32.xlu0 %v1245, 112
        %v1295 = vpop.permute.xlu0 %1294
        %1296 = vrot.lane.b32.xlu0 %v1246, 112
        %v1297 = vpop.permute.xlu0 %1296
        %1298 = vrot.lane.b32.xlu0 %v1247, 112
        %v1299 = vpop.permute.xlu0 %1298
        %1300 = vrot.lane.b32.xlu0 %v1248, 112
        %v1301 = vpop.permute.xlu0 %1300
        %1302 = vrot.lane.b32.xlu0 %v1249, 112
        %v1303 = vpop.permute.xlu0 %1302
        %1304 = vrot.lane.b32.xlu0 %v1250, 112
        %v1305 = vpop.permute.xlu0 %1304
        %1306 = vrot.lane.b32.xlu0 %v1251, 112
        %v1307 = vpop.permute.xlu0 %1306
        %v1309 = vsel %vm825, %v1269, 0
        %v1312 = vsel %vm825, %v1271, 0
        %v1315 = vsel %vm825, %v1273, 0
        %v1318 = vsel %vm825, %v1275, 0
        %v1321 = vsel %vm825, %v1277, 0
        %v1324 = vsel %vm825, %v1279, 0
        %v1327 = vsel %vm825, %v1281, 0
        %v1330 = vsel %vm825, %v1283, 0
        %v1333 = vsel %vm825, %v1293, 0
        %v1336 = vsel %vm825, %v1295, 0
        %v1339 = vsel %vm825, %v1297, 0
        %v1342 = vsel %vm825, %v1299, 0
        %v1345 = vsel %vm825, %v1301, 0
        %v1348 = vsel %vm825, %v1303, 0
        %v1351 = vsel %vm825, %v1305, 0
        %v1354 = vsel %vm825, %v1307, 0
        %1356 = vmatprep.subr.bf16.mxu0 0
        %1357 = vmatpush1.bf16.xpose.msra.mxu0 %v1333
        %1358 = vmatprep.subr.bf16.mxu0 0
        %1359 = vmatpush1.bf16.xpose.msra.mxu0 %v1336
        %1360 = vmatprep.subr.bf16.mxu0 0
        %1361 = vmatpush1.bf16.xpose.msra.mxu0 %v1339
        %1362 = vmatprep.subr.bf16.mxu0 0
        %1363 = vmatpush1.bf16.xpose.msra.mxu0 %v1342
        %1364 = vmatprep.subr.bf16.mxu0 0
        %1365 = vmatpush1.bf16.xpose.msra.mxu0 %v1345
        %1366 = vmatprep.subr.bf16.mxu0 0
        %1367 = vmatpush1.bf16.xpose.msra.mxu0 %v1348
        %1368 = vmatprep.subr.bf16.mxu0 0
        %1369 = vmatpush1.bf16.xpose.msra.mxu0 %v1351
        %1370 = vmatprep.subr.bf16.mxu0 0
        %1371 = vmatpush1.bf16.xpose.msra.mxu0 %v1354
        %1372 = vmatprep.subr.bf16.mxu0 0
        %1373 = vmatpush1.bf16.xpose.msra.mxu0 0
        %1374 = vmatprep.subr.bf16.mxu0 0
        %1375 = vmatpush1.bf16.xpose.msra.mxu0 0
        %1376 = vmatprep.subr.bf16.mxu0 0
        %1377 = vmatpush1.bf16.xpose.msra.mxu0 0
        %1378 = vmatprep.subr.bf16.mxu0 0
        %1379 = vmatpush1.bf16.xpose.msra.mxu0 0
        %1380 = vmatprep.subr.bf16.mxu0 0
        %1381 = vmatpush1.bf16.xpose.msra.mxu0 0
        %1382 = vmatprep.subr.bf16.mxu0 0
        %1383 = vmatpush1.bf16.xpose.msra.mxu0 0
        %1384 = vmatprep.subr.bf16.mxu0 0
        %1385 = vmatpush1.bf16.xpose.msra.mxu0 0
        %1386 = vmatprep.subr.bf16.mxu0 0
        %1387 = vmatpush1.bf16.xpose.msra.mxu0 0
        %1388 = vmatprep.mubr.bf16.mxu0 0
        %1389 = vmatmul.mubr.bf16.gmra.mrb[0].mxu0 %v1309
        %v1390 = vpop.f32.mrb[0].mxu0
        %v1391 = vadd.f32 0.0, %v1390
        %v1392 = vpop.f32.mrb[0].mxu0
        %v1393 = vpop.f32.mrb[0].mxu0
        %v1394 = vadd.f32 0.0, %v1393
        %v1395 = vpop.f32.mrb[0].mxu0
        %1396 = vmatprep.mubr.bf16.mxu0 0
        %1397 = vmatmul.mubr.bf16.gmra.mrb[0].mxu0 %v1312
        %v1398 = vpop.f32.mrb[0].mxu0
        %v1399 = vadd.f32 0.0, %v1398
        %v1400 = vpop.f32.mrb[0].mxu0
        %v1401 = vpop.f32.mrb[0].mxu0
        %v1402 = vadd.f32 0.0, %v1401
        %v1403 = vpop.f32.mrb[0].mxu0
        %1404 = vmatprep.mubr.bf16.mxu0 0
        %1405 = vmatmul.mubr.bf16.gmra.mrb[0].mxu0 %v1315
        %v1406 = vpop.f32.mrb[0].mxu0
        %v1407 = vadd.f32 0.0, %v1406
        %v1408 = vpop.f32.mrb[0].mxu0
        %v1409 = vpop.f32.mrb[0].mxu0
        %v1410 = vadd.f32 0.0, %v1409
        %v1411 = vpop.f32.mrb[0].mxu0
        %1412 = vmatprep.mubr.bf16.mxu0 0
        %1413 = vmatmul.mubr.bf16.gmra.mrb[0].mxu0 %v1318
        %v1414 = vpop.f32.mrb[0].mxu0
        %v1415 = vadd.f32 0.0, %v1414
        %v1416 = vpop.f32.mrb[0].mxu0
        %v1417 = vpop.f32.mrb[0].mxu0
        %v1418 = vadd.f32 0.0, %v1417
        %v1419 = vpop.f32.mrb[0].mxu0
        %1420 = vmatprep.mubr.bf16.mxu0 0
        %1421 = vmatmul.mubr.bf16.gmra.mrb[0].mxu0 %v1321
        %v1422 = vpop.f32.mrb[0].mxu0
        %v1423 = vadd.f32 0.0, %v1422
        %v1424 = vpop.f32.mrb[0].mxu0
        %v1425 = vpop.f32.mrb[0].mxu0
        %v1426 = vadd.f32 0.0, %v1425
        %v1427 = vpop.f32.mrb[0].mxu0
        %1428 = vmatprep.mubr.bf16.mxu0 0
        %1429 = vmatmul.mubr.bf16.gmra.mrb[0].mxu0 %v1324
        %v1430 = vpop.f32.mrb[0].mxu0
        %v1431 = vadd.f32 0.0, %v1430
        %v1432 = vpop.f32.mrb[0].mxu0
        %v1433 = vpop.f32.mrb[0].mxu0
        %v1434 = vadd.f32 0.0, %v1433
        %v1435 = vpop.f32.mrb[0].mxu0
        %1436 = vmatprep.mubr.bf16.mxu0 0
        %1437 = vmatmul.mubr.bf16.gmra.mrb[0].mxu0 %v1327
        %v1438 = vpop.f32.mrb[0].mxu0
        %v1439 = vadd.f32 0.0, %v1438
        %v1440 = vpop.f32.mrb[0].mxu0
        %v1441 = vpop.f32.mrb[0].mxu0
        %v1442 = vadd.f32 0.0, %v1441
        %v1443 = vpop.f32.mrb[0].mxu0
        %1444 = vmatprep.mubr.bf16.mxu0 0
        %1445 = vmatmul.mubr.bf16.gmra.mrb[0].mxu0 %v1330
        %v1446 = vpop.f32.mrb[0].mxu0
        %v1447 = vadd.f32 0.0, %v1446
        %v1448 = vpop.f32.mrb[0].mxu0
        %v1449 = vpop.f32.mrb[0].mxu0
        %v1450 = vadd.f32 0.0, %v1449
        %v1451 = vpop.f32.mrb[0].mxu0
        %1452 = vdwg.mxu0
        %1453 = vmax.xlane.f32.xlu0 %v1391
        %v1454 = vpop.xlane.xlu0 %1453
        %1455 = vmax.xlane.f32.xlu0 %v1394
        %v1456 = vpop.xlane.xlu0 %1455
        %1457 = vmax.xlane.f32.xlu0 %v1399
        %v1458 = vpop.xlane.xlu0 %1457
        %1459 = vmax.xlane.f32.xlu0 %v1402
        %v1460 = vpop.xlane.xlu0 %1459
        %1461 = vmax.xlane.f32.xlu0 %v1407
        %v1462 = vpop.xlane.xlu0 %1461
        %1463 = vmax.xlane.f32.xlu0 %v1410
        %v1464 = vpop.xlane.xlu0 %1463
        %1465 = vmax.xlane.f32.xlu0 %v1415
        %v1466 = vpop.xlane.xlu0 %1465
        %1467 = vmax.xlane.f32.xlu0 %v1418
        %v1468 = vpop.xlane.xlu0 %1467
        %1469 = vmax.xlane.f32.xlu0 %v1423
        %v1470 = vpop.xlane.xlu0 %1469
        %1471 = vmax.xlane.f32.xlu0 %v1426
        %v1472 = vpop.xlane.xlu0 %1471
        %1473 = vmax.xlane.f32.xlu0 %v1431
        %v1474 = vpop.xlane.xlu0 %1473
        %1475 = vmax.xlane.f32.xlu0 %v1434
        %v1476 = vpop.xlane.xlu0 %1475
        %1477 = vmax.xlane.f32.xlu0 %v1439
        %v1478 = vpop.xlane.xlu0 %1477
        %1479 = vmax.xlane.f32.xlu0 %v1442
        %v1480 = vpop.xlane.xlu0 %1479
        %1481 = vmax.xlane.f32.xlu0 %v1447
        %v1482 = vpop.xlane.xlu0 %1481
        %1483 = vmax.xlane.f32.xlu0 %v1450
        %v1484 = vpop.xlane.xlu0 %1483
        %v1485 = vsub.f32 %v1391, %v1454
        %v1486 = vsub.f32 %v1394, %v1456
        %v1487 = vsub.f32 %v1399, %v1458
        %v1488 = vsub.f32 %v1402, %v1460
        %v1489 = vsub.f32 %v1407, %v1462
        %v1490 = vsub.f32 %v1410, %v1464
        %v1491 = vsub.f32 %v1415, %v1466
        %v1492 = vsub.f32 %v1418, %v1468
        %v1493 = vsub.f32 %v1423, %v1470
        %v1494 = vsub.f32 %v1426, %v1472
        %v1495 = vsub.f32 %v1431, %v1474
        %v1496 = vsub.f32 %v1434, %v1476
        %v1497 = vsub.f32 %v1439, %v1478
        %v1498 = vsub.f32 %v1442, %v1480
        %v1499 = vsub.f32 %v1447, %v1482
        %v1500 = vsub.f32 %v1450, %v1484
        %v1501 = vmul.f32 %v1485, 1.442695
        %v1502 = vpow.pop %v1501
        %v1503 = vmul.f32 %v1486, 1.442695
        %v1504 = vpow.pop %v1503
        %v1505 = vmul.f32 %v1487, 1.442695
        %v1506 = vpow.pop %v1505
        %v1507 = vmul.f32 %v1488, 1.442695
        %v1508 = vpow.pop %v1507
        %v1509 = vmul.f32 %v1489, 1.442695
        %v1510 = vpow.pop %v1509
        %v1511 = vmul.f32 %v1490, 1.442695
        %v1512 = vpow.pop %v1511
        %v1513 = vmul.f32 %v1491, 1.442695
        %v1514 = vpow.pop %v1513
        %v1515 = vmul.f32 %v1492, 1.442695
        %v1516 = vpow.pop %v1515
        %v1517 = vmul.f32 %v1493, 1.442695
        %v1518 = vpow.pop %v1517
        %v1519 = vmul.f32 %v1494, 1.442695
        %v1520 = vpow.pop %v1519
        %v1521 = vmul.f32 %v1495, 1.442695
        %v1522 = vpow.pop %v1521
        %v1523 = vmul.f32 %v1496, 1.442695
        %v1524 = vpow.pop %v1523
        %v1525 = vmul.f32 %v1497, 1.442695
        %v1526 = vpow.pop %v1525
        %v1527 = vmul.f32 %v1498, 1.442695
        %v1528 = vpow.pop %v1527
        %v1529 = vmul.f32 %v1499, 1.442695
        %v1530 = vpow.pop %v1529
        %v1531 = vmul.f32 %v1500, 1.442695
        %v1532 = vpow.pop %v1531
        %1533 = vadd.xlane.f32.xlu0 %v1502
        %v1534 = vpop.xlane.xlu0 %1533
        %1535 = vadd.xlane.f32.xlu0 %v1504
        %v1536 = vpop.xlane.xlu0 %1535
        %1537 = vadd.xlane.f32.xlu0 %v1506
        %v1538 = vpop.xlane.xlu0 %1537
        %1539 = vadd.xlane.f32.xlu0 %v1508
        %v1540 = vpop.xlane.xlu0 %1539
        %1541 = vadd.xlane.f32.xlu0 %v1510
        %v1542 = vpop.xlane.xlu0 %1541
        %1543 = vadd.xlane.f32.xlu0 %v1512
        %v1544 = vpop.xlane.xlu0 %1543
        %1545 = vadd.xlane.f32.xlu0 %v1514
        %v1546 = vpop.xlane.xlu0 %1545
        %1547 = vadd.xlane.f32.xlu0 %v1516
        %v1548 = vpop.xlane.xlu0 %1547
        %1549 = vadd.xlane.f32.xlu0 %v1518
        %v1550 = vpop.xlane.xlu0 %1549
        %1551 = vadd.xlane.f32.xlu0 %v1520
        %v1552 = vpop.xlane.xlu0 %1551
        %1553 = vadd.xlane.f32.xlu0 %v1522
        %v1554 = vpop.xlane.xlu0 %1553
        %1555 = vadd.xlane.f32.xlu0 %v1524
        %v1556 = vpop.xlane.xlu0 %1555
        %1557 = vadd.xlane.f32.xlu0 %v1526
        %v1558 = vpop.xlane.xlu0 %1557
        %1559 = vadd.xlane.f32.xlu0 %v1528
        %v1560 = vpop.xlane.xlu0 %1559
        %1561 = vadd.xlane.f32.xlu0 %v1530
        %v1562 = vpop.xlane.xlu0 %1561
        %1563 = vadd.xlane.f32.xlu0 %v1532
        %v1564 = vpop.xlane.xlu0 %1563
        %v1565 = vrcp.pop %v1534
        %v1566 = vrcp.pop %v1536
        %v1567 = vrcp.pop %v1538
        %v1568 = vrcp.pop %v1540
        %v1569 = vrcp.pop %v1542
        %v1570 = vrcp.pop %v1544
        %v1571 = vrcp.pop %v1546
        %v1572 = vrcp.pop %v1548
        %v1573 = vrcp.pop %v1550
        %v1574 = vrcp.pop %v1552
        %v1575 = vrcp.pop %v1554
        %v1576 = vrcp.pop %v1556
        %v1577 = vrcp.pop %v1558
        %v1578 = vrcp.pop %v1560
        %v1579 = vrcp.pop %v1562
        %v1580 = vrcp.pop %v1564
        %v1581 = vpack.c.bf16 %v1504, %v1502
        %v1582 = vpack.c.bf16 %v1508, %v1506
        %v1583 = vpack.c.bf16 %v1512, %v1510
        %v1584 = vpack.c.bf16 %v1516, %v1514
        %v1585 = vpack.c.bf16 %v1520, %v1518
        %v1586 = vpack.c.bf16 %v1524, %v1522
        %v1587 = vpack.c.bf16 %v1528, %v1526
        %v1588 = vpack.c.bf16 %v1532, %v1530
        %1597 = vrot.lane.b32.xlu0 %v1252, 112
        %v1598 = vpop.permute.xlu0 %1597
        %1599 = vrot.lane.b32.xlu0 %v1253, 112
        %v1600 = vpop.permute.xlu0 %1599
        %1601 = vrot.lane.b32.xlu0 %v1254, 112
        %v1602 = vpop.permute.xlu0 %1601
        %1603 = vrot.lane.b32.xlu0 %v1255, 112
        %v1604 = vpop.permute.xlu0 %1603
        %1605 = vrot.lane.b32.xlu0 %v1256, 112
        %v1606 = vpop.permute.xlu0 %1605
        %1607 = vrot.lane.b32.xlu0 %v1257, 112
        %v1608 = vpop.permute.xlu0 %1607
        %1609 = vrot.lane.b32.xlu0 %v1258, 112
        %v1610 = vpop.permute.xlu0 %1609
        %1611 = vrot.lane.b32.xlu0 %v1259, 112
        %v1612 = vpop.permute.xlu0 %1611
        %1621 = vmatprep.subr.bf16.mxu0 0
        %1622 = vmatpush1.bf16.msra.mxu0 %v1598
        %1623 = vmatprep.subr.bf16.mxu0 0
        %1624 = vmatpush1.bf16.msra.mxu0 %v1600
        %1625 = vmatprep.subr.bf16.mxu0 0
        %1626 = vmatpush1.bf16.msra.mxu0 %v1602
        %1627 = vmatprep.subr.bf16.mxu0 0
        %1628 = vmatpush1.bf16.msra.mxu0 %v1604
        %1629 = vmatprep.subr.bf16.mxu0 0
        %1630 = vmatpush1.bf16.msra.mxu0 %v1606
        %1631 = vmatprep.subr.bf16.mxu0 0
        %1632 = vmatpush1.bf16.msra.mxu0 %v1608
        %1633 = vmatprep.subr.bf16.mxu0 0
        %1634 = vmatpush1.bf16.msra.mxu0 %v1610
        %1635 = vmatprep.subr.bf16.mxu0 0
        %1636 = vmatpush1.bf16.msra.mxu0 %v1612
        %1637 = vmatprep.subr.bf16.mxu0 0
        %1638 = vmatpush1.bf16.msra.mxu0 0
        %1639 = vmatprep.subr.bf16.mxu0 0
        %1640 = vmatpush1.bf16.msra.mxu0 0
        %1641 = vmatprep.subr.bf16.mxu0 0
        %1642 = vmatpush1.bf16.msra.mxu0 0
        %1643 = vmatprep.subr.bf16.mxu0 0
        %1644 = vmatpush1.bf16.msra.mxu0 0
        %1645 = vmatprep.subr.bf16.mxu0 0
        %1646 = vmatpush1.bf16.msra.mxu0 0
        %1647 = vmatprep.subr.bf16.mxu0 0
        %1648 = vmatpush1.bf16.msra.mxu0 0
        %1649 = vmatprep.subr.bf16.mxu0 0
        %1650 = vmatpush1.bf16.msra.mxu0 0
        %1651 = vmatprep.subr.bf16.mxu0 0
        %1652 = vmatpush1.bf16.msra.mxu0 0
        %1653 = vmatprep.mubr.bf16.mxu0 0
        %1654 = vmatmul.mubr.bf16.gmra.mrb[0].mxu0 %v1581
        %v1655 = vpop.f32.mrb[0].mxu0
        %v1656 = vadd.f32 0.0, %v1655
        %v1657 = vpop.f32.mrb[0].mxu0
        %v1658 = vpop.f32.mrb[0].mxu0
        %v1659 = vadd.f32 0.0, %v1658
        %v1660 = vpop.f32.mrb[0].mxu0
        %1661 = vmatprep.mubr.bf16.mxu0 0
        %1662 = vmatmul.mubr.bf16.gmra.mrb[0].mxu0 %v1582
        %v1663 = vpop.f32.mrb[0].mxu0
        %v1664 = vadd.f32 0.0, %v1663
        %v1665 = vpop.f32.mrb[0].mxu0
        %v1666 = vpop.f32.mrb[0].mxu0
        %v1667 = vadd.f32 0.0, %v1666
        %v1668 = vpop.f32.mrb[0].mxu0
        %1669 = vmatprep.mubr.bf16.mxu0 0
        %1670 = vmatmul.mubr.bf16.gmra.mrb[0].mxu0 %v1583
        %v1671 = vpop.f32.mrb[0].mxu0
        %v1672 = vadd.f32 0.0, %v1671
        %v1673 = vpop.f32.mrb[0].mxu0
        %v1674 = vpop.f32.mrb[0].mxu0
        %v1675 = vadd.f32 0.0, %v1674
        %v1676 = vpop.f32.mrb[0].mxu0
        %1677 = vmatprep.mubr.bf16.mxu0 0
        %1678 = vmatmul.mubr.bf16.gmra.mrb[0].mxu0 %v1584
        %v1679 = vpop.f32.mrb[0].mxu0
        %v1680 = vadd.f32 0.0, %v1679
        %v1681 = vpop.f32.mrb[0].mxu0
        %v1682 = vpop.f32.mrb[0].mxu0
        %v1683 = vadd.f32 0.0, %v1682
        %v1684 = vpop.f32.mrb[0].mxu0
        %1685 = vmatprep.mubr.bf16.mxu0 0
        %1686 = vmatmul.mubr.bf16.gmra.mrb[0].mxu0 %v1585
        %v1687 = vpop.f32.mrb[0].mxu0
        %v1688 = vadd.f32 0.0, %v1687
        %v1689 = vpop.f32.mrb[0].mxu0
        %v1690 = vpop.f32.mrb[0].mxu0
        %v1691 = vadd.f32 0.0, %v1690
        %v1692 = vpop.f32.mrb[0].mxu0
        %1693 = vmatprep.mubr.bf16.mxu0 0
        %1694 = vmatmul.mubr.bf16.gmra.mrb[0].mxu0 %v1586
        %v1695 = vpop.f32.mrb[0].mxu0
        %v1696 = vadd.f32 0.0, %v1695
        %v1697 = vpop.f32.mrb[0].mxu0
        %v1698 = vpop.f32.mrb[0].mxu0
        %v1699 = vadd.f32 0.0, %v1698
        %v1700 = vpop.f32.mrb[0].mxu0
        %1701 = vmatprep.mubr.bf16.mxu0 0
        %1702 = vmatmul.mubr.bf16.gmra.mrb[0].mxu0 %v1587
        %v1703 = vpop.f32.mrb[0].mxu0
        %v1704 = vadd.f32 0.0, %v1703
        %v1705 = vpop.f32.mrb[0].mxu0
        %v1706 = vpop.f32.mrb[0].mxu0
        %v1707 = vadd.f32 0.0, %v1706
        %v1708 = vpop.f32.mrb[0].mxu0
        %1709 = vmatprep.mubr.bf16.mxu0 0
        %1710 = vmatmul.mubr.bf16.gmra.mrb[0].mxu0 %v1588
        %v1711 = vpop.f32.mrb[0].mxu0
        %v1712 = vadd.f32 0.0, %v1711
        %v1713 = vpop.f32.mrb[0].mxu0
        %v1714 = vpop.f32.mrb[0].mxu0
        %v1715 = vadd.f32 0.0, %v1714
        %v1716 = vpop.f32.mrb[0].mxu0
        %1717 = vdwg.mxu0
        %v1718 = vmul.f32 %v1656, %v1565
        %v1719 = vmul.f32 %v1659, %v1566
        %v1720 = vmul.f32 %v1664, %v1567
        %v1721 = vmul.f32 %v1667, %v1568
        %v1722 = vmul.f32 %v1672, %v1569
        %v1723 = vmul.f32 %v1675, %v1570
        %v1724 = vmul.f32 %v1680, %v1571
        %v1725 = vmul.f32 %v1683, %v1572
        %v1726 = vmul.f32 %v1688, %v1573
        %v1727 = vmul.f32 %v1691, %v1574
        %v1728 = vmul.f32 %v1696, %v1575
        %v1729 = vmul.f32 %v1699, %v1576
        %v1730 = vmul.f32 %v1704, %v1577
        %v1731 = vmul.f32 %v1707, %v1578
        %v1732 = vmul.f32 %v1712, %v1579
        %v1733 = vmul.f32 %v1715, %v1580
        %v1734 = vpack.c.bf16 %v1719, %v1718
        %v1735 = vpack.c.bf16 %v1721, %v1720
        %v1736 = vpack.c.bf16 %v1723, %v1722
        %v1737 = vpack.c.bf16 %v1725, %v1724
        %v1738 = vpack.c.bf16 %v1727, %v1726
        %v1739 = vpack.c.bf16 %v1729, %v1728
        %v1740 = vpack.c.bf16 %v1731, %v1730
        %v1741 = vpack.c.bf16 %v1733, %v1732
        %1750 = vrot.lane.b32.xlu0 %v1734, 16
        %v1751 = vpop.permute.xlu0 %1750
        %1752 = vrot.lane.b32.xlu0 %v1735, 16
        %v1753 = vpop.permute.xlu0 %1752
        %1754 = vrot.lane.b32.xlu0 %v1736, 16
        %v1755 = vpop.permute.xlu0 %1754
        %1756 = vrot.lane.b32.xlu0 %v1737, 16
        %v1757 = vpop.permute.xlu0 %1756
        %1758 = vrot.lane.b32.xlu0 %v1738, 16
        %v1759 = vpop.permute.xlu0 %1758
        %1760 = vrot.lane.b32.xlu0 %v1739, 16
        %v1761 = vpop.permute.xlu0 %1760
        %1762 = vrot.lane.b32.xlu0 %v1740, 16
        %v1763 = vpop.permute.xlu0 %1762
        %1764 = vrot.lane.b32.xlu0 %v1741, 16
        %v1765 = vpop.permute.xlu0 %1764
        %vm1774 = vcmask 261248
        %1775 = vst.msk [vmem:[#allocation3] sm:$0xff] %vm1774, %v1751
        %1776 = vst.msk [vmem:[#allocation3 + $0x8] sm:$0xff] %vm1774, %v1753
        %1777 = vst.msk [vmem:[#allocation3 + $0x10] sm:$0xff] %vm1774, %v1755
        %1778 = vst.msk [vmem:[#allocation3 + $0x18] sm:$0xff] %vm1774, %v1757
        %1779 = vst.msk [vmem:[#allocation3 + $0x20] sm:$0xff] %vm1774, %v1759
        %1780 = vst.msk [vmem:[#allocation3 + $0x28] sm:$0xff] %vm1774, %v1761
        %1781 = vst.msk [vmem:[#allocation3 + $0x30] sm:$0xff] %vm1774, %v1763
        %1782 = vst.msk [vmem:[#allocation3 + $0x38] sm:$0xff] %vm1774, %v1765
        %v1783 = vld [vmem:[#allocation2] sm:$0xff]
        %v1784 = vld [vmem:[#allocation2 + $0x18] sm:$0xff]
        %v1785 = vld [vmem:[#allocation2 + $0x30] sm:$0xff]
        %v1786 = vld [vmem:[#allocation2 + $0x48] sm:$0xff]
        %v1787 = vld [vmem:[#allocation2 + $0x60] sm:$0xff]
        %v1788 = vld [vmem:[#allocation2 + $0x78] sm:$0xff]
        %v1789 = vld [vmem:[#allocation2 + $0x90] sm:$0xff]
        %v1790 = vld [vmem:[#allocation2 + $0xa8] sm:$0xff]
        %v1791 = vld [vmem:[#allocation2 + $0x8] sm:$0xff]
        %v1792 = vld [vmem:[#allocation2 + $0x20] sm:$0xff]
        %v1793 = vld [vmem:[#allocation2 + $0x38] sm:$0xff]
        %v1794 = vld [vmem:[#allocation2 + $0x50] sm:$0xff]
        %v1795 = vld [vmem:[#allocation2 + $0x68] sm:$0xff]
        %v1796 = vld [vmem:[#allocation2 + $0x80] sm:$0xff]
        %v1797 = vld [vmem:[#allocation2 + $0x98] sm:$0xff]
        %v1798 = vld [vmem:[#allocation2 + $0xb0] sm:$0xff]
        %v1799 = vld [vmem:[#allocation2 + $0x10] sm:$0xff]
        %v1800 = vld [vmem:[#allocation2 + $0x28] sm:$0xff]
        %v1801 = vld [vmem:[#allocation2 + $0x40] sm:$0xff]
        %v1802 = vld [vmem:[#allocation2 + $0x58] sm:$0xff]
        %v1803 = vld [vmem:[#allocation2 + $0x70] sm:$0xff]
        %v1804 = vld [vmem:[#allocation2 + $0x88] sm:$0xff]
        %v1805 = vld [vmem:[#allocation2 + $0xa0] sm:$0xff]
        %v1806 = vld [vmem:[#allocation2 + $0xb8] sm:$0xff]
        %1815 = vrot.lane.b32.xlu0 %v1783, 96
        %v1816 = vpop.permute.xlu0 %1815
        %1817 = vrot.lane.b32.xlu0 %v1784, 96
        %v1818 = vpop.permute.xlu0 %1817
        %1819 = vrot.lane.b32.xlu0 %v1785, 96
        %v1820 = vpop.permute.xlu0 %1819
        %1821 = vrot.lane.b32.xlu0 %v1786, 96
        %v1822 = vpop.permute.xlu0 %1821
        %1823 = vrot.lane.b32.xlu0 %v1787, 96
        %v1824 = vpop.permute.xlu0 %1823
        %1825 = vrot.lane.b32.xlu0 %v1788, 96
        %v1826 = vpop.permute.xlu0 %1825
        %1827 = vrot.lane.b32.xlu0 %v1789, 96
        %v1828 = vpop.permute.xlu0 %1827
        %1829 = vrot.lane.b32.xlu0 %v1790, 96
        %v1830 = vpop.permute.xlu0 %1829
        %1839 = vrot.lane.b32.xlu0 %v1791, 96
        %v1840 = vpop.permute.xlu0 %1839
        %1841 = vrot.lane.b32.xlu0 %v1792, 96
        %v1842 = vpop.permute.xlu0 %1841
        %1843 = vrot.lane.b32.xlu0 %v1793, 96
        %v1844 = vpop.permute.xlu0 %1843
        %1845 = vrot.lane.b32.xlu0 %v1794, 96
        %v1846 = vpop.permute.xlu0 %1845
        %1847 = vrot.lane.b32.xlu0 %v1795, 96
        %v1848 = vpop.permute.xlu0 %1847
        %1849 = vrot.lane.b32.xlu0 %v1796, 96
        %v1850 = vpop.permute.xlu0 %1849
        %1851 = vrot.lane.b32.xlu0 %v1797, 96
        %v1852 = vpop.permute.xlu0 %1851
        %1853 = vrot.lane.b32.xlu0 %v1798, 96
        %v1854 = vpop.permute.xlu0 %1853
        %v1856 = vsel %vm825, %v1816, 0
        %v1859 = vsel %vm825, %v1818, 0
        %v1862 = vsel %vm825, %v1820, 0
        %v1865 = vsel %vm825, %v1822, 0
        %v1868 = vsel %vm825, %v1824, 0
        %v1871 = vsel %vm825, %v1826, 0
        %v1874 = vsel %vm825, %v1828, 0
        %v1877 = vsel %vm825, %v1830, 0
        %v1880 = vsel %vm825, %v1840, 0
        %v1883 = vsel %vm825, %v1842, 0
        %v1886 = vsel %vm825, %v1844, 0
        %v1889 = vsel %vm825, %v1846, 0
        %v1892 = vsel %vm825, %v1848, 0
        %v1895 = vsel %vm825, %v1850, 0
        %v1898 = vsel %vm825, %v1852, 0
        %v1901 = vsel %vm825, %v1854, 0
        %1903 = vmatprep.subr.bf16.mxu0 0
        %1904 = vmatpush1.bf16.xpose.msra.mxu0 %v1880
        %1905 = vmatprep.subr.bf16.mxu0 0
        %1906 = vmatpush1.bf16.xpose.msra.mxu0 %v1883
        %1907 = vmatprep.subr.bf16.mxu0 0
        %1908 = vmatpush1.bf16.xpose.msra.mxu0 %v1886
        %1909 = vmatprep.subr.bf16.mxu0 0
        %1910 = vmatpush1.bf16.xpose.msra.mxu0 %v1889
        %1911 = vmatprep.subr.bf16.mxu0 0
        %1912 = vmatpush1.bf16.xpose.msra.mxu0 %v1892
        %1913 = vmatprep.subr.bf16.mxu0 0
        %1914 = vmatpush1.bf16.xpose.msra.mxu0 %v1895
        %1915 = vmatprep.subr.bf16.mxu0 0
        %1916 = vmatpush1.bf16.xpose.msra.mxu0 %v1898
        %1917 = vmatprep.subr.bf16.mxu0 0
        %1918 = vmatpush1.bf16.xpose.msra.mxu0 %v1901
        %1919 = vmatprep.subr.bf16.mxu0 0
        %1920 = vmatpush1.bf16.xpose.msra.mxu0 0
        %1921 = vmatprep.subr.bf16.mxu0 0
        %1922 = vmatpush1.bf16.xpose.msra.mxu0 0
        %1923 = vmatprep.subr.bf16.mxu0 0
        %1924 = vmatpush1.bf16.xpose.msra.mxu0 0
        %1925 = vmatprep.subr.bf16.mxu0 0
        %1926 = vmatpush1.bf16.xpose.msra.mxu0 0
        %1927 = vmatprep.subr.bf16.mxu0 0
        %1928 = vmatpush1.bf16.xpose.msra.mxu0 0
        %1929 = vmatprep.subr.bf16.mxu0 0
        %1930 = vmatpush1.bf16.xpose.msra.mxu0 0
        %1931 = vmatprep.subr.bf16.mxu0 0
        %1932 = vmatpush1.bf16.xpose.msra.mxu0 0
        %1933 = vmatprep.subr.bf16.mxu0 0
        %1934 = vmatpush1.bf16.xpose.msra.mxu0 0
        %1935 = vmatprep.mubr.bf16.mxu0 0
        %1936 = vmatmul.mubr.bf16.gmra.mrb[0].mxu0 %v1856
        %v1937 = vpop.f32.mrb[0].mxu0
        %v1938 = vadd.f32 0.0, %v1937
        %v1939 = vpop.f32.mrb[0].mxu0
        %v1940 = vpop.f32.mrb[0].mxu0
        %v1941 = vadd.f32 0.0, %v1940
        %v1942 = vpop.f32.mrb[0].mxu0
        %1943 = vmatprep.mubr.bf16.mxu0 0
        %1944 = vmatmul.mubr.bf16.gmra.mrb[0].mxu0 %v1859
        %v1945 = vpop.f32.mrb[0].mxu0
        %v1946 = vadd.f32 0.0, %v1945
        %v1947 = vpop.f32.mrb[0].mxu0
        %v1948 = vpop.f32.mrb[0].mxu0
        %v1949 = vadd.f32 0.0, %v1948
        %v1950 = vpop.f32.mrb[0].mxu0
        %1951 = vmatprep.mubr.bf16.mxu0 0
        %1952 = vmatmul.mubr.bf16.gmra.mrb[0].mxu0 %v1862
        %v1953 = vpop.f32.mrb[0].mxu0
        %v1954 = vadd.f32 0.0, %v1953
        %v1955 = vpop.f32.mrb[0].mxu0
        %v1956 = vpop.f32.mrb[0].mxu0
        %v1957 = vadd.f32 0.0, %v1956
        %v1958 = vpop.f32.mrb[0].mxu0
        %1959 = vmatprep.mubr.bf16.mxu0 0
        %1960 = vmatmul.mubr.bf16.gmra.mrb[0].mxu0 %v1865
        %v1961 = vpop.f32.mrb[0].mxu0
        %v1962 = vadd.f32 0.0, %v1961
        %v1963 = vpop.f32.mrb[0].mxu0
        %v1964 = vpop.f32.mrb[0].mxu0
        %v1965 = vadd.f32 0.0, %v1964
        %v1966 = vpop.f32.mrb[0].mxu0
        %1967 = vmatprep.mubr.bf16.mxu0 0
        %1968 = vmatmul.mubr.bf16.gmra.mrb[0].mxu0 %v1868
        %v1969 = vpop.f32.mrb[0].mxu0
        %v1970 = vadd.f32 0.0, %v1969
        %v1971 = vpop.f32.mrb[0].mxu0
        %v1972 = vpop.f32.mrb[0].mxu0
        %v1973 = vadd.f32 0.0, %v1972
        %v1974 = vpop.f32.mrb[0].mxu0
        %1975 = vmatprep.mubr.bf16.mxu0 0
        %1976 = vmatmul.mubr.bf16.gmra.mrb[0].mxu0 %v1871
        %v1977 = vpop.f32.mrb[0].mxu0
        %v1978 = vadd.f32 0.0, %v1977
        %v1979 = vpop.f32.mrb[0].mxu0
        %v1980 = vpop.f32.mrb[0].mxu0
        %v1981 = vadd.f32 0.0, %v1980
        %v1982 = vpop.f32.mrb[0].mxu0
        %1983 = vmatprep.mubr.bf16.mxu0 0
        %1984 = vmatmul.mubr.bf16.gmra.mrb[0].mxu0 %v1874
        %v1985 = vpop.f32.mrb[0].mxu0
        %v1986 = vadd.f32 0.0, %v1985
        %v1987 = vpop.f32.mrb[0].mxu0
        %v1988 = vpop.f32.mrb[0].mxu0
        %v1989 = vadd.f32 0.0, %v1988
        %v1990 = vpop.f32.mrb[0].mxu0
        %1991 = vmatprep.mubr.bf16.mxu0 0
        %1992 = vmatmul.mubr.bf16.gmra.mrb[0].mxu0 %v1877
        %v1993 = vpop.f32.mrb[0].mxu0
        %v1994 = vadd.f32 0.0, %v1993
        %v1995 = vpop.f32.mrb[0].mxu0
        %v1996 = vpop.f32.mrb[0].mxu0
        %v1997 = vadd.f32 0.0, %v1996
        %v1998 = vpop.f32.mrb[0].mxu0
        %1999 = vdwg.mxu0
        %2000 = vmax.xlane.f32.xlu0 %v1938
        %v2001 = vpop.xlane.xlu0 %2000
        %2002 = vmax.xlane.f32.xlu0 %v1941
        %v2003 = vpop.xlane.xlu0 %2002
        %2004 = vmax.xlane.f32.xlu0 %v1946
        %v2005 = vpop.xlane.xlu0 %2004
        %2006 = vmax.xlane.f32.xlu0 %v1949
        %v2007 = vpop.xlane.xlu0 %2006
        %2008 = vmax.xlane.f32.xlu0 %v1954
        %v2009 = vpop.xlane.xlu0 %2008
        %2010 = vmax.xlane.f32.xlu0 %v1957
        %v2011 = vpop.xlane.xlu0 %2010
        %2012 = vmax.xlane.f32.xlu0 %v1962
        %v2013 = vpop.xlane.xlu0 %2012
        %2014 = vmax.xlane.f32.xlu0 %v1965
        %v2015 = vpop.xlane.xlu0 %2014
        %2016 = vmax.xlane.f32.xlu0 %v1970
        %v2017 = vpop.xlane.xlu0 %2016
        %2018 = vmax.xlane.f32.xlu0 %v1973
        %v2019 = vpop.xlane.xlu0 %2018
        %2020 = vmax.xlane.f32.xlu0 %v1978
        %v2021 = vpop.xlane.xlu0 %2020
        %2022 = vmax.xlane.f32.xlu0 %v1981
        %v2023 = vpop.xlane.xlu0 %2022
        %2024 = vmax.xlane.f32.xlu0 %v1986
        %v2025 = vpop.xlane.xlu0 %2024
        %2026 = vmax.xlane.f32.xlu0 %v1989
        %v2027 = vpop.xlane.xlu0 %2026
        %2028 = vmax.xlane.f32.xlu0 %v1994
        %v2029 = vpop.xlane.xlu0 %2028
        %2030 = vmax.xlane.f32.xlu0 %v1997
        %v2031 = vpop.xlane.xlu0 %2030
        %v2032 = vsub.f32 %v1938, %v2001
        %v2033 = vsub.f32 %v1941, %v2003
        %v2034 = vsub.f32 %v1946, %v2005
        %v2035 = vsub.f32 %v1949, %v2007
        %v2036 = vsub.f32 %v1954, %v2009
        %v2037 = vsub.f32 %v1957, %v2011
        %v2038 = vsub.f32 %v1962, %v2013
        %v2039 = vsub.f32 %v1965, %v2015
        %v2040 = vsub.f32 %v1970, %v2017
        %v2041 = vsub.f32 %v1973, %v2019
        %v2042 = vsub.f32 %v1978, %v2021
        %v2043 = vsub.f32 %v1981, %v2023
        %v2044 = vsub.f32 %v1986, %v2025
        %v2045 = vsub.f32 %v1989, %v2027
        %v2046 = vsub.f32 %v1994, %v2029
        %v2047 = vsub.f32 %v1997, %v2031
        %v2048 = vmul.f32 %v2032, 1.442695
        %v2049 = vpow.pop %v2048
        %v2050 = vmul.f32 %v2033, 1.442695
        %v2051 = vpow.pop %v2050
        %v2052 = vmul.f32 %v2034, 1.442695
        %v2053 = vpow.pop %v2052
        %v2054 = vmul.f32 %v2035, 1.442695
        %v2055 = vpow.pop %v2054
        %v2056 = vmul.f32 %v2036, 1.442695
        %v2057 = vpow.pop %v2056
        %v2058 = vmul.f32 %v2037, 1.442695
        %v2059 = vpow.pop %v2058
        %v2060 = vmul.f32 %v2038, 1.442695
        %v2061 = vpow.pop %v2060
        %v2062 = vmul.f32 %v2039, 1.442695
        %v2063 = vpow.pop %v2062
        %v2064 = vmul.f32 %v2040, 1.442695
        %v2065 = vpow.pop %v2064
        %v2066 = vmul.f32 %v2041, 1.442695
        %v2067 = vpow.pop %v2066
        %v2068 = vmul.f32 %v2042, 1.442695
        %v2069 = vpow.pop %v2068
        %v2070 = vmul.f32 %v2043, 1.442695
        %v2071 = vpow.pop %v2070
        %v2072 = vmul.f32 %v2044, 1.442695
        %v2073 = vpow.pop %v2072
        %v2074 = vmul.f32 %v2045, 1.442695
        %v2075 = vpow.pop %v2074
        %v2076 = vmul.f32 %v2046, 1.442695
        %v2077 = vpow.pop %v2076
        %v2078 = vmul.f32 %v2047, 1.442695
        %v2079 = vpow.pop %v2078
        %2080 = vadd.xlane.f32.xlu0 %v2049
        %v2081 = vpop.xlane.xlu0 %2080
        %2082 = vadd.xlane.f32.xlu0 %v2051
        %v2083 = vpop.xlane.xlu0 %2082
        %2084 = vadd.xlane.f32.xlu0 %v2053
        %v2085 = vpop.xlane.xlu0 %2084
        %2086 = vadd.xlane.f32.xlu0 %v2055
        %v2087 = vpop.xlane.xlu0 %2086
        %2088 = vadd.xlane.f32.xlu0 %v2057
        %v2089 = vpop.xlane.xlu0 %2088
        %2090 = vadd.xlane.f32.xlu0 %v2059
        %v2091 = vpop.xlane.xlu0 %2090
        %2092 = vadd.xlane.f32.xlu0 %v2061
        %v2093 = vpop.xlane.xlu0 %2092
        %2094 = vadd.xlane.f32.xlu0 %v2063
        %v2095 = vpop.xlane.xlu0 %2094
        %2096 = vadd.xlane.f32.xlu0 %v2065
        %v2097 = vpop.xlane.xlu0 %2096
        %2098 = vadd.xlane.f32.xlu0 %v2067
        %v2099 = vpop.xlane.xlu0 %2098
        %2100 = vadd.xlane.f32.xlu0 %v2069
        %v2101 = vpop.xlane.xlu0 %2100
        %2102 = vadd.xlane.f32.xlu0 %v2071
        %v2103 = vpop.xlane.xlu0 %2102
        %2104 = vadd.xlane.f32.xlu0 %v2073
        %v2105 = vpop.xlane.xlu0 %2104
        %2106 = vadd.xlane.f32.xlu0 %v2075
        %v2107 = vpop.xlane.xlu0 %2106
        %2108 = vadd.xlane.f32.xlu0 %v2077
        %v2109 = vpop.xlane.xlu0 %2108
        %2110 = vadd.xlane.f32.xlu0 %v2079
        %v2111 = vpop.xlane.xlu0 %2110
        %v2112 = vrcp.pop %v2081
        %v2113 = vrcp.pop %v2083
        %v2114 = vrcp.pop %v2085
        %v2115 = vrcp.pop %v2087
        %v2116 = vrcp.pop %v2089
        %v2117 = vrcp.pop %v2091
        %v2118 = vrcp.pop %v2093
        %v2119 = vrcp.pop %v2095
        %v2120 = vrcp.pop %v2097
        %v2121 = vrcp.pop %v2099
        %v2122 = vrcp.pop %v2101
        %v2123 = vrcp.pop %v2103
        %v2124 = vrcp.pop %v2105
        %v2125 = vrcp.pop %v2107
        %v2126 = vrcp.pop %v2109
        %v2127 = vrcp.pop %v2111
        %v2128 = vpack.c.bf16 %v2051, %v2049
        %v2129 = vpack.c.bf16 %v2055, %v2053
        %v2130 = vpack.c.bf16 %v2059, %v2057
        %v2131 = vpack.c.bf16 %v2063, %v2061
        %v2132 = vpack.c.bf16 %v2067, %v2065
        %v2133 = vpack.c.bf16 %v2071, %v2069
        %v2134 = vpack.c.bf16 %v2075, %v2073
        %v2135 = vpack.c.bf16 %v2079, %v2077
        %2144 = vrot.lane.b32.xlu0 %v1799, 96
        %v2145 = vpop.permute.xlu0 %2144
        %2146 = vrot.lane.b32.xlu0 %v1800, 96
        %v2147 = vpop.permute.xlu0 %2146
        %2148 = vrot.lane.b32.xlu0 %v1801, 96
        %v2149 = vpop.permute.xlu0 %2148
        %2150 = vrot.lane.b32.xlu0 %v1802, 96
        %v2151 = vpop.permute.xlu0 %2150
        %2152 = vrot.lane.b32.xlu0 %v1803, 96
        %v2153 = vpop.permute.xlu0 %2152
        %2154 = vrot.lane.b32.xlu0 %v1804, 96
        %v2155 = vpop.permute.xlu0 %2154
        %2156 = vrot.lane.b32.xlu0 %v1805, 96
        %v2157 = vpop.permute.xlu0 %2156
        %2158 = vrot.lane.b32.xlu0 %v1806, 96
        %v2159 = vpop.permute.xlu0 %2158
        %2168 = vmatprep.subr.bf16.mxu0 0
        %2169 = vmatpush1.bf16.msra.mxu0 %v2145
        %2170 = vmatprep.subr.bf16.mxu0 0
        %2171 = vmatpush1.bf16.msra.mxu0 %v2147
        %2172 = vmatprep.subr.bf16.mxu0 0
        %2173 = vmatpush1.bf16.msra.mxu0 %v2149
        %2174 = vmatprep.subr.bf16.mxu0 0
        %2175 = vmatpush1.bf16.msra.mxu0 %v2151
        %2176 = vmatprep.subr.bf16.mxu0 0
        %2177 = vmatpush1.bf16.msra.mxu0 %v2153
        %2178 = vmatprep.subr.bf16.mxu0 0
        %2179 = vmatpush1.bf16.msra.mxu0 %v2155
        %2180 = vmatprep.subr.bf16.mxu0 0
        %2181 = vmatpush1.bf16.msra.mxu0 %v2157
        %2182 = vmatprep.subr.bf16.mxu0 0
        %2183 = vmatpush1.bf16.msra.mxu0 %v2159
        %2184 = vmatprep.subr.bf16.mxu0 0
        %2185 = vmatpush1.bf16.msra.mxu0 0
        %2186 = vmatprep.subr.bf16.mxu0 0
        %2187 = vmatpush1.bf16.msra.mxu0 0
        %2188 = vmatprep.subr.bf16.mxu0 0
        %2189 = vmatpush1.bf16.msra.mxu0 0
        %2190 = vmatprep.subr.bf16.mxu0 0
        %2191 = vmatpush1.bf16.msra.mxu0 0
        %2192 = vmatprep.subr.bf16.mxu0 0
        %2193 = vmatpush1.bf16.msra.mxu0 0
        %2194 = vmatprep.subr.bf16.mxu0 0
        %2195 = vmatpush1.bf16.msra.mxu0 0
        %2196 = vmatprep.subr.bf16.mxu0 0
        %2197 = vmatpush1.bf16.msra.mxu0 0
        %2198 = vmatprep.subr.bf16.mxu0 0
        %2199 = vmatpush1.bf16.msra.mxu0 0
        %2200 = vmatprep.mubr.bf16.mxu0 0
        %2201 = vmatmul.mubr.bf16.gmra.mrb[0].mxu0 %v2128
        %v2202 = vpop.f32.mrb[0].mxu0
        %v2203 = vadd.f32 0.0, %v2202
        %v2204 = vpop.f32.mrb[0].mxu0
        %v2205 = vpop.f32.mrb[0].mxu0
        %v2206 = vadd.f32 0.0, %v2205
        %v2207 = vpop.f32.mrb[0].mxu0
        %2208 = vmatprep.mubr.bf16.mxu0 0
        %2209 = vmatmul.mubr.bf16.gmra.mrb[0].mxu0 %v2129
        %v2210 = vpop.f32.mrb[0].mxu0
        %v2211 = vadd.f32 0.0, %v2210
        %v2212 = vpop.f32.mrb[0].mxu0
        %v2213 = vpop.f32.mrb[0].mxu0
        %v2214 = vadd.f32 0.0, %v2213
        %v2215 = vpop.f32.mrb[0].mxu0
        %2216 = vmatprep.mubr.bf16.mxu0 0
        %2217 = vmatmul.mubr.bf16.gmra.mrb[0].mxu0 %v2130
        %v2218 = vpop.f32.mrb[0].mxu0
        %v2219 = vadd.f32 0.0, %v2218
        %v2220 = vpop.f32.mrb[0].mxu0
        %v2221 = vpop.f32.mrb[0].mxu0
        %v2222 = vadd.f32 0.0, %v2221
        %v2223 = vpop.f32.mrb[0].mxu0
        %2224 = vmatprep.mubr.bf16.mxu0 0
        %2225 = vmatmul.mubr.bf16.gmra.mrb[0].mxu0 %v2131
        %v2226 = vpop.f32.mrb[0].mxu0
        %v2227 = vadd.f32 0.0, %v2226
        %v2228 = vpop.f32.mrb[0].mxu0
        %v2229 = vpop.f32.mrb[0].mxu0
        %v2230 = vadd.f32 0.0, %v2229
        %v2231 = vpop.f32.mrb[0].mxu0
        %2232 = vmatprep.mubr.bf16.mxu0 0
        %2233 = vmatmul.mubr.bf16.gmra.mrb[0].mxu0 %v2132
        %v2234 = vpop.f32.mrb[0].mxu0
        %v2235 = vadd.f32 0.0, %v2234
        %v2236 = vpop.f32.mrb[0].mxu0
        %v2237 = vpop.f32.mrb[0].mxu0
        %v2238 = vadd.f32 0.0, %v2237
        %v2239 = vpop.f32.mrb[0].mxu0
        %2240 = vmatprep.mubr.bf16.mxu0 0
        %2241 = vmatmul.mubr.bf16.gmra.mrb[0].mxu0 %v2133
        %v2242 = vpop.f32.mrb[0].mxu0
        %v2243 = vadd.f32 0.0, %v2242
        %v2244 = vpop.f32.mrb[0].mxu0
        %v2245 = vpop.f32.mrb[0].mxu0
        %v2246 = vadd.f32 0.0, %v2245
        %v2247 = vpop.f32.mrb[0].mxu0
        %2248 = vmatprep.mubr.bf16.mxu0 0
        %2249 = vmatmul.mubr.bf16.gmra.mrb[0].mxu0 %v2134
        %v2250 = vpop.f32.mrb[0].mxu0
        %v2251 = vadd.f32 0.0, %v2250
        %v2252 = vpop.f32.mrb[0].mxu0
        %v2253 = vpop.f32.mrb[0].mxu0
        %v2254 = vadd.f32 0.0, %v2253
        %v2255 = vpop.f32.mrb[0].mxu0
        %2256 = vmatprep.mubr.bf16.mxu0 0
        %2257 = vmatmul.mubr.bf16.gmra.mrb[0].mxu0 %v2135
        %v2258 = vpop.f32.mrb[0].mxu0
        %v2259 = vadd.f32 0.0, %v2258
        %v2260 = vpop.f32.mrb[0].mxu0
        %v2261 = vpop.f32.mrb[0].mxu0
        %v2262 = vadd.f32 0.0, %v2261
        %v2263 = vpop.f32.mrb[0].mxu0
        %2264 = vdwg.mxu0
        %v2265 = vmul.f32 %v2203, %v2112
        %v2266 = vmul.f32 %v2206, %v2113
        %v2267 = vmul.f32 %v2211, %v2114
        %v2268 = vmul.f32 %v2214, %v2115
        %v2269 = vmul.f32 %v2219, %v2116
        %v2270 = vmul.f32 %v2222, %v2117
        %v2271 = vmul.f32 %v2227, %v2118
        %v2272 = vmul.f32 %v2230, %v2119
        %v2273 = vmul.f32 %v2235, %v2120
        %v2274 = vmul.f32 %v2238, %v2121
        %v2275 = vmul.f32 %v2243, %v2122
        %v2276 = vmul.f32 %v2246, %v2123
        %v2277 = vmul.f32 %v2251, %v2124
        %v2278 = vmul.f32 %v2254, %v2125
        %v2279 = vmul.f32 %v2259, %v2126
        %v2280 = vmul.f32 %v2262, %v2127
        %v2281 = vpack.c.bf16 %v2266, %v2265
        %v2282 = vpack.c.bf16 %v2268, %v2267
        %v2283 = vpack.c.bf16 %v2270, %v2269
        %v2284 = vpack.c.bf16 %v2272, %v2271
        %v2285 = vpack.c.bf16 %v2274, %v2273
        %v2286 = vpack.c.bf16 %v2276, %v2275
        %v2287 = vpack.c.bf16 %v2278, %v2277
        %v2288 = vpack.c.bf16 %v2280, %v2279
        %2297 = vrot.lane.b32.xlu0 %v2281, 32
        %v2298 = vpop.permute.xlu0 %2297
        %2299 = vrot.lane.b32.xlu0 %v2282, 32
        %v2300 = vpop.permute.xlu0 %2299
        %2301 = vrot.lane.b32.xlu0 %v2283, 32
        %v2302 = vpop.permute.xlu0 %2301
        %2303 = vrot.lane.b32.xlu0 %v2284, 32
        %v2304 = vpop.permute.xlu0 %2303
        %2305 = vrot.lane.b32.xlu0 %v2285, 32
        %v2306 = vpop.permute.xlu0 %2305
        %2307 = vrot.lane.b32.xlu0 %v2286, 32
        %v2308 = vpop.permute.xlu0 %2307
        %2309 = vrot.lane.b32.xlu0 %v2287, 32
        %v2310 = vpop.permute.xlu0 %2309
        %2311 = vrot.lane.b32.xlu0 %v2288, 32
        %v2312 = vpop.permute.xlu0 %2311
        %vm2321 = vcmask 392448
        %2322 = vst.msk [vmem:[#allocation3] sm:$0xff] %vm2321, %v2298
        %2323 = vst.msk [vmem:[#allocation3 + $0x8] sm:$0xff] %vm2321, %v2300
        %2324 = vst.msk [vmem:[#allocation3 + $0x10] sm:$0xff] %vm2321, %v2302
        %2325 = vst.msk [vmem:[#allocation3 + $0x18] sm:$0xff] %vm2321, %v2304
        %2326 = vst.msk [vmem:[#allocation3 + $0x20] sm:$0xff] %vm2321, %v2306
        %2327 = vst.msk [vmem:[#allocation3 + $0x28] sm:$0xff] %vm2321, %v2308
        %2328 = vst.msk [vmem:[#allocation3 + $0x30] sm:$0xff] %vm2321, %v2310
        %2329 = vst.msk [vmem:[#allocation3 + $0x38] sm:$0xff] %vm2321, %v2312
        %v2330 = vld [vmem:[#allocation2] sm:$0xff]
        %v2331 = vld [vmem:[#allocation2 + $0x18] sm:$0xff]
        %v2332 = vld [vmem:[#allocation2 + $0x30] sm:$0xff]
        %v2333 = vld [vmem:[#allocation2 + $0x48] sm:$0xff]
        %v2334 = vld [vmem:[#allocation2 + $0x60] sm:$0xff]
        %v2335 = vld [vmem:[#allocation2 + $0x78] sm:$0xff]
        %v2336 = vld [vmem:[#allocation2 + $0x90] sm:$0xff]
        %v2337 = vld [vmem:[#allocation2 + $0xa8] sm:$0xff]
        %v2338 = vld [vmem:[#allocation2 + $0x8] sm:$0xff]
        %v2339 = vld [vmem:[#allocation2 + $0x20] sm:$0xff]
        %v2340 = vld [vmem:[#allocation2 + $0x38] sm:$0xff]
        %v2341 = vld [vmem:[#allocation2 + $0x50] sm:$0xff]
        %v2342 = vld [vmem:[#allocation2 + $0x68] sm:$0xff]
        %v2343 = vld [vmem:[#allocation2 + $0x80] sm:$0xff]
        %v2344 = vld [vmem:[#allocation2 + $0x98] sm:$0xff]
        %v2345 = vld [vmem:[#allocation2 + $0xb0] sm:$0xff]
        %v2346 = vld [vmem:[#allocation2 + $0x10] sm:$0xff]
        %v2347 = vld [vmem:[#allocation2 + $0x28] sm:$0xff]
        %v2348 = vld [vmem:[#allocation2 + $0x40] sm:$0xff]
        %v2349 = vld [vmem:[#allocation2 + $0x58] sm:$0xff]
        %v2350 = vld [vmem:[#allocation2 + $0x70] sm:$0xff]
        %v2351 = vld [vmem:[#allocation2 + $0x88] sm:$0xff]
        %v2352 = vld [vmem:[#allocation2 + $0xa0] sm:$0xff]
        %v2353 = vld [vmem:[#allocation2 + $0xb8] sm:$0xff]
        %2362 = vrot.lane.b32.xlu0 %v2330, 80
        %v2363 = vpop.permute.xlu0 %2362
        %2364 = vrot.lane.b32.xlu0 %v2331, 80
        %v2365 = vpop.permute.xlu0 %2364
        %2366 = vrot.lane.b32.xlu0 %v2332, 80
        %v2367 = vpop.permute.xlu0 %2366
        %2368 = vrot.lane.b32.xlu0 %v2333, 80
        %v2369 = vpop.permute.xlu0 %2368
        %2370 = vrot.lane.b32.xlu0 %v2334, 80
        %v2371 = vpop.permute.xlu0 %2370
        %2372 = vrot.lane.b32.xlu0 %v2335, 80
        %v2373 = vpop.permute.xlu0 %2372
        %2374 = vrot.lane.b32.xlu0 %v2336, 80
        %v2375 = vpop.permute.xlu0 %2374
        %2376 = vrot.lane.b32.xlu0 %v2337, 80
        %v2377 = vpop.permute.xlu0 %2376
        %2386 = vrot.lane.b32.xlu0 %v2338, 80
        %v2387 = vpop.permute.xlu0 %2386
        %2388 = vrot.lane.b32.xlu0 %v2339, 80
        %v2389 = vpop.permute.xlu0 %2388
        %2390 = vrot.lane.b32.xlu0 %v2340, 80
        %v2391 = vpop.permute.xlu0 %2390
        %2392 = vrot.lane.b32.xlu0 %v2341, 80
        %v2393 = vpop.permute.xlu0 %2392
        %2394 = vrot.lane.b32.xlu0 %v2342, 80
        %v2395 = vpop.permute.xlu0 %2394
        %2396 = vrot.lane.b32.xlu0 %v2343, 80
        %v2397 = vpop.permute.xlu0 %2396
        %2398 = vrot.lane.b32.xlu0 %v2344, 80
        %v2399 = vpop.permute.xlu0 %2398
        %2400 = vrot.lane.b32.xlu0 %v2345, 80
        %v2401 = vpop.permute.xlu0 %2400
        %v2403 = vsel %vm825, %v2363, 0
        %v2406 = vsel %vm825, %v2365, 0
        %v2409 = vsel %vm825, %v2367, 0
        %v2412 = vsel %vm825, %v2369, 0
        %v2415 = vsel %vm825, %v2371, 0
        %v2418 = vsel %vm825, %v2373, 0
        %v2421 = vsel %vm825, %v2375, 0
        %v2424 = vsel %vm825, %v2377, 0
        %v2427 = vsel %vm825, %v2387, 0
        %v2430 = vsel %vm825, %v2389, 0
        %v2433 = vsel %vm825, %v2391, 0
        %v2436 = vsel %vm825, %v2393, 0
        %v2439 = vsel %vm825, %v2395, 0
        %v2442 = vsel %vm825, %v2397, 0
        %v2445 = vsel %vm825, %v2399, 0
        %v2448 = vsel %vm825, %v2401, 0
        %2450 = vmatprep.subr.bf16.mxu0 0
        %2451 = vmatpush1.bf16.xpose.msra.mxu0 %v2427
        %2452 = vmatprep.subr.bf16.mxu0 0
        %2453 = vmatpush1.bf16.xpose.msra.mxu0 %v2430
        %2454 = vmatprep.subr.bf16.mxu0 0
        %2455 = vmatpush1.bf16.xpose.msra.mxu0 %v2433
        %2456 = vmatprep.subr.bf16.mxu0 0
        %2457 = vmatpush1.bf16.xpose.msra.mxu0 %v2436
        %2458 = vmatprep.subr.bf16.mxu0 0
        %2459 = vmatpush1.bf16.xpose.msra.mxu0 %v2439
        %2460 = vmatprep.subr.bf16.mxu0 0
        %2461 = vmatpush1.bf16.xpose.msra.mxu0 %v2442
        %2462 = vmatprep.subr.bf16.mxu0 0
        %2463 = vmatpush1.bf16.xpose.msra.mxu0 %v2445
        %2464 = vmatprep.subr.bf16.mxu0 0
        %2465 = vmatpush1.bf16.xpose.msra.mxu0 %v2448
        %2466 = vmatprep.subr.bf16.mxu0 0
        %2467 = vmatpush1.bf16.xpose.msra.mxu0 0
        %2468 = vmatprep.subr.bf16.mxu0 0
        %2469 = vmatpush1.bf16.xpose.msra.mxu0 0
        %2470 = vmatprep.subr.bf16.mxu0 0
        %2471 = vmatpush1.bf16.xpose.msra.mxu0 0
        %2472 = vmatprep.subr.bf16.mxu0 0
        %2473 = vmatpush1.bf16.xpose.msra.mxu0 0
        %2474 = vmatprep.subr.bf16.mxu0 0
        %2475 = vmatpush1.bf16.xpose.msra.mxu0 0
        %2476 = vmatprep.subr.bf16.mxu0 0
        %2477 = vmatpush1.bf16.xpose.msra.mxu0 0
        %2478 = vmatprep.subr.bf16.mxu0 0
        %2479 = vmatpush1.bf16.xpose.msra.mxu0 0
        %2480 = vmatprep.subr.bf16.mxu0 0
        %2481 = vmatpush1.bf16.xpose.msra.mxu0 0
        %2482 = vmatprep.mubr.bf16.mxu0 0
        %2483 = vmatmul.mubr.bf16.gmra.mrb[0].mxu0 %v2403
        %v2484 = vpop.f32.mrb[0].mxu0
        %v2485 = vadd.f32 0.0, %v2484
        %v2486 = vpop.f32.mrb[0].mxu0
        %v2487 = vpop.f32.mrb[0].mxu0
        %v2488 = vadd.f32 0.0, %v2487
        %v2489 = vpop.f32.mrb[0].mxu0
        %2490 = vmatprep.mubr.bf16.mxu0 0
        %2491 = vmatmul.mubr.bf16.gmra.mrb[0].mxu0 %v2406
        %v2492 = vpop.f32.mrb[0].mxu0
        %v2493 = vadd.f32 0.0, %v2492
        %v2494 = vpop.f32.mrb[0].mxu0
        %v2495 = vpop.f32.mrb[0].mxu0
        %v2496 = vadd.f32 0.0, %v2495
        %v2497 = vpop.f32.mrb[0].mxu0
        %2498 = vmatprep.mubr.bf16.mxu0 0
        %2499 = vmatmul.mubr.bf16.gmra.mrb[0].mxu0 %v2409
        %v2500 = vpop.f32.mrb[0].mxu0
        %v2501 = vadd.f32 0.0, %v2500
        %v2502 = vpop.f32.mrb[0].mxu0
        %v2503 = vpop.f32.mrb[0].mxu0
        %v2504 = vadd.f32 0.0, %v2503
        %v2505 = vpop.f32.mrb[0].mxu0
        %2506 = vmatprep.mubr.bf16.mxu0 0
        %2507 = vmatmul.mubr.bf16.gmra.mrb[0].mxu0 %v2412
        %v2508 = vpop.f32.mrb[0].mxu0
        %v2509 = vadd.f32 0.0, %v2508
        %v2510 = vpop.f32.mrb[0].mxu0
        %v2511 = vpop.f32.mrb[0].mxu0
        %v2512 = vadd.f32 0.0, %v2511
        %v2513 = vpop.f32.mrb[0].mxu0
        %2514 = vmatprep.mubr.bf16.mxu0 0
        %2515 = vmatmul.mubr.bf16.gmra.mrb[0].mxu0 %v2415
        %v2516 = vpop.f32.mrb[0].mxu0
        %v2517 = vadd.f32 0.0, %v2516
        %v2518 = vpop.f32.mrb[0].mxu0
        %v2519 = vpop.f32.mrb[0].mxu0
        %v2520 = vadd.f32 0.0, %v2519
        %v2521 = vpop.f32.mrb[0].mxu0
        %2522 = vmatprep.mubr.bf16.mxu0 0
        %2523 = vmatmul.mubr.bf16.gmra.mrb[0].mxu0 %v2418
        %v2524 = vpop.f32.mrb[0].mxu0
        %v2525 = vadd.f32 0.0, %v2524
        %v2526 = vpop.f32.mrb[0].mxu0
        %v2527 = vpop.f32.mrb[0].mxu0
        %v2528 = vadd.f32 0.0, %v2527
        %v2529 = vpop.f32.mrb[0].mxu0
        %2530 = vmatprep.mubr.bf16.mxu0 0
        %2531 = vmatmul.mubr.bf16.gmra.mrb[0].mxu0 %v2421
        %v2532 = vpop.f32.mrb[0].mxu0
        %v2533 = vadd.f32 0.0, %v2532
        %v2534 = vpop.f32.mrb[0].mxu0
        %v2535 = vpop.f32.mrb[0].mxu0
        %v2536 = vadd.f32 0.0, %v2535
        %v2537 = vpop.f32.mrb[0].mxu0
        %2538 = vmatprep.mubr.bf16.mxu0 0
        %2539 = vmatmul.mubr.bf16.gmra.mrb[0].mxu0 %v2424
        %v2540 = vpop.f32.mrb[0].mxu0
        %v2541 = vadd.f32 0.0, %v2540
        %v2542 = vpop.f32.mrb[0].mxu0
        %v2543 = vpop.f32.mrb[0].mxu0
        %v2544 = vadd.f32 0.0, %v2543
        %v2545 = vpop.f32.mrb[0].mxu0
        %2546 = vdwg.mxu0
        %2547 = vmax.xlane.f32.xlu0 %v2485
        %v2548 = vpop.xlane.xlu0 %2547
        %2549 = vmax.xlane.f32.xlu0 %v2488
        %v2550 = vpop.xlane.xlu0 %2549
        %2551 = vmax.xlane.f32.xlu0 %v2493
        %v2552 = vpop.xlane.xlu0 %2551
        %2553 = vmax.xlane.f32.xlu0 %v2496
        %v2554 = vpop.xlane.xlu0 %2553
        %2555 = vmax.xlane.f32.xlu0 %v2501
        %v2556 = vpop.xlane.xlu0 %2555
        %2557 = vmax.xlane.f32.xlu0 %v2504
        %v2558 = vpop.xlane.xlu0 %2557
        %2559 = vmax.xlane.f32.xlu0 %v2509
        %v2560 = vpop.xlane.xlu0 %2559
        %2561 = vmax.xlane.f32.xlu0 %v2512
        %v2562 = vpop.xlane.xlu0 %2561
        %2563 = vmax.xlane.f32.xlu0 %v2517
        %v2564 = vpop.xlane.xlu0 %2563
        %2565 = vmax.xlane.f32.xlu0 %v2520
        %v2566 = vpop.xlane.xlu0 %2565
        %2567 = vmax.xlane.f32.xlu0 %v2525
        %v2568 = vpop.xlane.xlu0 %2567
        %2569 = vmax.xlane.f32.xlu0 %v2528
        %v2570 = vpop.xlane.xlu0 %2569
        %2571 = vmax.xlane.f32.xlu0 %v2533
        %v2572 = vpop.xlane.xlu0 %2571
        %2573 = vmax.xlane.f32.xlu0 %v2536
        %v2574 = vpop.xlane.xlu0 %2573
        %2575 = vmax.xlane.f32.xlu0 %v2541
        %v2576 = vpop.xlane.xlu0 %2575
        %2577 = vmax.xlane.f32.xlu0 %v2544
        %v2578 = vpop.xlane.xlu0 %2577
        %v2579 = vsub.f32 %v2485, %v2548
        %v2580 = vsub.f32 %v2488, %v2550
        %v2581 = vsub.f32 %v2493, %v2552
        %v2582 = vsub.f32 %v2496, %v2554
        %v2583 = vsub.f32 %v2501, %v2556
        %v2584 = vsub.f32 %v2504, %v2558
        %v2585 = vsub.f32 %v2509, %v2560
        %v2586 = vsub.f32 %v2512, %v2562
        %v2587 = vsub.f32 %v2517, %v2564
        %v2588 = vsub.f32 %v2520, %v2566
        %v2589 = vsub.f32 %v2525, %v2568
        %v2590 = vsub.f32 %v2528, %v2570
        %v2591 = vsub.f32 %v2533, %v2572
        %v2592 = vsub.f32 %v2536, %v2574
        %v2593 = vsub.f32 %v2541, %v2576
        %v2594 = vsub.f32 %v2544, %v2578
        %v2595 = vmul.f32 %v2579, 1.442695
        %v2596 = vpow.pop %v2595
        %v2597 = vmul.f32 %v2580, 1.442695
        %v2598 = vpow.pop %v2597
        %v2599 = vmul.f32 %v2581, 1.442695
        %v2600 = vpow.pop %v2599
        %v2601 = vmul.f32 %v2582, 1.442695
        %v2602 = vpow.pop %v2601
        %v2603 = vmul.f32 %v2583, 1.442695
        %v2604 = vpow.pop %v2603
        %v2605 = vmul.f32 %v2584, 1.442695
        %v2606 = vpow.pop %v2605
        %v2607 = vmul.f32 %v2585, 1.442695
        %v2608 = vpow.pop %v2607
        %v2609 = vmul.f32 %v2586, 1.442695
        %v2610 = vpow.pop %v2609
        %v2611 = vmul.f32 %v2587, 1.442695
        %v2612 = vpow.pop %v2611
        %v2613 = vmul.f32 %v2588, 1.442695
        %v2614 = vpow.pop %v2613
        %v2615 = vmul.f32 %v2589, 1.442695
        %v2616 = vpow.pop %v2615
        %v2617 = vmul.f32 %v2590, 1.442695
        %v2618 = vpow.pop %v2617
        %v2619 = vmul.f32 %v2591, 1.442695
        %v2620 = vpow.pop %v2619
        %v2621 = vmul.f32 %v2592, 1.442695
        %v2622 = vpow.pop %v2621
        %v2623 = vmul.f32 %v2593, 1.442695
        %v2624 = vpow.pop %v2623
        %v2625 = vmul.f32 %v2594, 1.442695
        %v2626 = vpow.pop %v2625
        %2627 = vadd.xlane.f32.xlu0 %v2596
        %v2628 = vpop.xlane.xlu0 %2627
        %2629 = vadd.xlane.f32.xlu0 %v2598
        %v2630 = vpop.xlane.xlu0 %2629
        %2631 = vadd.xlane.f32.xlu0 %v2600
        %v2632 = vpop.xlane.xlu0 %2631
        %2633 = vadd.xlane.f32.xlu0 %v2602
        %v2634 = vpop.xlane.xlu0 %2633
        %2635 = vadd.xlane.f32.xlu0 %v2604
        %v2636 = vpop.xlane.xlu0 %2635
        %2637 = vadd.xlane.f32.xlu0 %v2606
        %v2638 = vpop.xlane.xlu0 %2637
        %2639 = vadd.xlane.f32.xlu0 %v2608
        %v2640 = vpop.xlane.xlu0 %2639
        %2641 = vadd.xlane.f32.xlu0 %v2610
        %v2642 = vpop.xlane.xlu0 %2641
        %2643 = vadd.xlane.f32.xlu0 %v2612
        %v2644 = vpop.xlane.xlu0 %2643
        %2645 = vadd.xlane.f32.xlu0 %v2614
        %v2646 = vpop.xlane.xlu0 %2645
        %2647 = vadd.xlane.f32.xlu0 %v2616
        %v2648 = vpop.xlane.xlu0 %2647
        %2649 = vadd.xlane.f32.xlu0 %v2618
        %v2650 = vpop.xlane.xlu0 %2649
        %2651 = vadd.xlane.f32.xlu0 %v2620
        %v2652 = vpop.xlane.xlu0 %2651
        %2653 = vadd.xlane.f32.xlu0 %v2622
        %v2654 = vpop.xlane.xlu0 %2653
        %2655 = vadd.xlane.f32.xlu0 %v2624
        %v2656 = vpop.xlane.xlu0 %2655
        %2657 = vadd.xlane.f32.xlu0 %v2626
        %v2658 = vpop.xlane.xlu0 %2657
        %v2659 = vrcp.pop %v2628
        %v2660 = vrcp.pop %v2630
        %v2661 = vrcp.pop %v2632
        %v2662 = vrcp.pop %v2634
        %v2663 = vrcp.pop %v2636
        %v2664 = vrcp.pop %v2638
        %v2665 = vrcp.pop %v2640
        %v2666 = vrcp.pop %v2642
        %v2667 = vrcp.pop %v2644
        %v2668 = vrcp.pop %v2646
        %v2669 = vrcp.pop %v2648
        %v2670 = vrcp.pop %v2650
        %v2671 = vrcp.pop %v2652
        %v2672 = vrcp.pop %v2654
        %v2673 = vrcp.pop %v2656
        %v2674 = vrcp.pop %v2658
        %v2675 = vpack.c.bf16 %v2598, %v2596
        %v2676 = vpack.c.bf16 %v2602, %v2600
        %v2677 = vpack.c.bf16 %v2606, %v2604
        %v2678 = vpack.c.bf16 %v2610, %v2608
        %v2679 = vpack.c.bf16 %v2614, %v2612
        %v2680 = vpack.c.bf16 %v2618, %v2616
        %v2681 = vpack.c.bf16 %v2622, %v2620
        %v2682 = vpack.c.bf16 %v2626, %v2624
        %2691 = vrot.lane.b32.xlu0 %v2346, 80
        %v2692 = vpop.permute.xlu0 %2691
        %2693 = vrot.lane.b32.xlu0 %v2347, 80
        %v2694 = vpop.permute.xlu0 %2693
        %2695 = vrot.lane.b32.xlu0 %v2348, 80
        %v2696 = vpop.permute.xlu0 %2695
        %2697 = vrot.lane.b32.xlu0 %v2349, 80
        %v2698 = vpop.permute.xlu0 %2697
        %2699 = vrot.lane.b32.xlu0 %v2350, 80
        %v2700 = vpop.permute.xlu0 %2699
        %2701 = vrot.lane.b32.xlu0 %v2351, 80
        %v2702 = vpop.permute.xlu0 %2701
        %2703 = vrot.lane.b32.xlu0 %v2352, 80
        %v2704 = vpop.permute.xlu0 %2703
        %2705 = vrot.lane.b32.xlu0 %v2353, 80
        %v2706 = vpop.permute.xlu0 %2705
        %2715 = vmatprep.subr.bf16.mxu0 0
        %2716 = vmatpush1.bf16.msra.mxu0 %v2692
        %2717 = vmatprep.subr.bf16.mxu0 0
        %2718 = vmatpush1.bf16.msra.mxu0 %v2694
        %2719 = vmatprep.subr.bf16.mxu0 0
        %2720 = vmatpush1.bf16.msra.mxu0 %v2696
        %2721 = vmatprep.subr.bf16.mxu0 0
        %2722 = vmatpush1.bf16.msra.mxu0 %v2698
        %2723 = vmatprep.subr.bf16.mxu0 0
        %2724 = vmatpush1.bf16.msra.mxu0 %v2700
        %2725 = vmatprep.subr.bf16.mxu0 0
        %2726 = vmatpush1.bf16.msra.mxu0 %v2702
        %2727 = vmatprep.subr.bf16.mxu0 0
        %2728 = vmatpush1.bf16.msra.mxu0 %v2704
        %2729 = vmatprep.subr.bf16.mxu0 0
        %2730 = vmatpush1.bf16.msra.mxu0 %v2706
        %2731 = vmatprep.subr.bf16.mxu0 0
        %2732 = vmatpush1.bf16.msra.mxu0 0
        %2733 = vmatprep.subr.bf16.mxu0 0
        %2734 = vmatpush1.bf16.msra.mxu0 0
        %2735 = vmatprep.subr.bf16.mxu0 0
        %2736 = vmatpush1.bf16.msra.mxu0 0
        %2737 = vmatprep.subr.bf16.mxu0 0
        %2738 = vmatpush1.bf16.msra.mxu0 0
        %2739 = vmatprep.subr.bf16.mxu0 0
        %2740 = vmatpush1.bf16.msra.mxu0 0
        %2741 = vmatprep.subr.bf16.mxu0 0
        %2742 = vmatpush1.bf16.msra.mxu0 0
        %2743 = vmatprep.subr.bf16.mxu0 0
        %2744 = vmatpush1.bf16.msra.mxu0 0
        %2745 = vmatprep.subr.bf16.mxu0 0
        %2746 = vmatpush1.bf16.msra.mxu0 0
        %2747 = vmatprep.mubr.bf16.mxu0 0
        %2748 = vmatmul.mubr.bf16.gmra.mrb[0].mxu0 %v2675
        %v2749 = vpop.f32.mrb[0].mxu0
        %v2750 = vadd.f32 0.0, %v2749
        %v2751 = vpop.f32.mrb[0].mxu0
        %v2752 = vpop.f32.mrb[0].mxu0
        %v2753 = vadd.f32 0.0, %v2752
        %v2754 = vpop.f32.mrb[0].mxu0
        %2755 = vmatprep.mubr.bf16.mxu0 0
        %2756 = vmatmul.mubr.bf16.gmra.mrb[0].mxu0 %v2676
        %v2757 = vpop.f32.mrb[0].mxu0
        %v2758 = vadd.f32 0.0, %v2757
        %v2759 = vpop.f32.mrb[0].mxu0
        %v2760 = vpop.f32.mrb[0].mxu0
        %v2761 = vadd.f32 0.0, %v2760
        %v2762 = vpop.f32.mrb[0].mxu0
        %2763 = vmatprep.mubr.bf16.mxu0 0
        %2764 = vmatmul.mubr.bf16.gmra.mrb[0].mxu0 %v2677
        %v2765 = vpop.f32.mrb[0].mxu0
        %v2766 = vadd.f32 0.0, %v2765
        %v2767 = vpop.f32.mrb[0].mxu0
        %v2768 = vpop.f32.mrb[0].mxu0
        %v2769 = vadd.f32 0.0, %v2768
        %v2770 = vpop.f32.mrb[0].mxu0
        %2771 = vmatprep.mubr.bf16.mxu0 0
        %2772 = vmatmul.mubr.bf16.gmra.mrb[0].mxu0 %v2678
        %v2773 = vpop.f32.mrb[0].mxu0
        %v2774 = vadd.f32 0.0, %v2773
        %v2775 = vpop.f32.mrb[0].mxu0
        %v2776 = vpop.f32.mrb[0].mxu0
        %v2777 = vadd.f32 0.0, %v2776
        %v2778 = vpop.f32.mrb[0].mxu0
        %2779 = vmatprep.mubr.bf16.mxu0 0
        %2780 = vmatmul.mubr.bf16.gmra.mrb[0].mxu0 %v2679
        %v2781 = vpop.f32.mrb[0].mxu0
        %v2782 = vadd.f32 0.0, %v2781
        %v2783 = vpop.f32.mrb[0].mxu0
        %v2784 = vpop.f32.mrb[0].mxu0
        %v2785 = vadd.f32 0.0, %v2784
        %v2786 = vpop.f32.mrb[0].mxu0
        %2787 = vmatprep.mubr.bf16.mxu0 0
        %2788 = vmatmul.mubr.bf16.gmra.mrb[0].mxu0 %v2680
        %v2789 = vpop.f32.mrb[0].mxu0
        %v2790 = vadd.f32 0.0, %v2789
        %v2791 = vpop.f32.mrb[0].mxu0
        %v2792 = vpop.f32.mrb[0].mxu0
        %v2793 = vadd.f32 0.0, %v2792
        %v2794 = vpop.f32.mrb[0].mxu0
        %2795 = vmatprep.mubr.bf16.mxu0 0
        %2796 = vmatmul.mubr.bf16.gmra.mrb[0].mxu0 %v2681
        %v2797 = vpop.f32.mrb[0].mxu0
        %v2798 = vadd.f32 0.0, %v2797
        %v2799 = vpop.f32.mrb[0].mxu0
        %v2800 = vpop.f32.mrb[0].mxu0
        %v2801 = vadd.f32 0.0, %v2800
        %v2802 = vpop.f32.mrb[0].mxu0
        %2803 = vmatprep.mubr.bf16.mxu0 0
        %2804 = vmatmul.mubr.bf16.gmra.mrb[0].mxu0 %v2682
        %v2805 = vpop.f32.mrb[0].mxu0
        %v2806 = vadd.f32 0.0, %v2805
        %v2807 = vpop.f32.mrb[0].mxu0
        %v2808 = vpop.f32.mrb[0].mxu0
        %v2809 = vadd.f32 0.0, %v2808
        %v2810 = vpop.f32.mrb[0].mxu0
        %2811 = vdwg.mxu0
        %v2812 = vmul.f32 %v2750, %v2659
        %v2813 = vmul.f32 %v2753, %v2660
        %v2814 = vmul.f32 %v2758, %v2661
        %v2815 = vmul.f32 %v2761, %v2662
        %v2816 = vmul.f32 %v2766, %v2663
        %v2817 = vmul.f32 %v2769, %v2664
        %v2818 = vmul.f32 %v2774, %v2665
        %v2819 = vmul.f32 %v2777, %v2666
        %v2820 = vmul.f32 %v2782, %v2667
        %v2821 = vmul.f32 %v2785, %v2668
        %v2822 = vmul.f32 %v2790, %v2669
        %v2823 = vmul.f32 %v2793, %v2670
        %v2824 = vmul.f32 %v2798, %v2671
        %v2825 = vmul.f32 %v2801, %v2672
        %v2826 = vmul.f32 %v2806, %v2673
        %v2827 = vmul.f32 %v2809, %v2674
        %v2828 = vpack.c.bf16 %v2813, %v2812
        %v2829 = vpack.c.bf16 %v2815, %v2814
        %v2830 = vpack.c.bf16 %v2817, %v2816
        %v2831 = vpack.c.bf16 %v2819, %v2818
        %v2832 = vpack.c.bf16 %v2821, %v2820
        %v2833 = vpack.c.bf16 %v2823, %v2822
        %v2834 = vpack.c.bf16 %v2825, %v2824
        %v2835 = vpack.c.bf16 %v2827, %v2826
        %2844 = vrot.lane.b32.xlu0 %v2828, 48
        %v2845 = vpop.permute.xlu0 %2844
        %2846 = vrot.lane.b32.xlu0 %v2829, 48
        %v2847 = vpop.permute.xlu0 %2846
        %2848 = vrot.lane.b32.xlu0 %v2830, 48
        %v2849 = vpop.permute.xlu0 %2848
        %2850 = vrot.lane.b32.xlu0 %v2831, 48
        %v2851 = vpop.permute.xlu0 %2850
        %2852 = vrot.lane.b32.xlu0 %v2832, 48
        %v2853 = vpop.permute.xlu0 %2852
        %2854 = vrot.lane.b32.xlu0 %v2833, 48
        %v2855 = vpop.permute.xlu0 %2854
        %2856 = vrot.lane.b32.xlu0 %v2834, 48
        %v2857 = vpop.permute.xlu0 %2856
        %2858 = vrot.lane.b32.xlu0 %v2835, 48
        %v2859 = vpop.permute.xlu0 %2858
        %vm2868 = vcmask 523648
        %2869 = vst.msk [vmem:[#allocation3] sm:$0xff] %vm2868, %v2845
        %2870 = vst.msk [vmem:[#allocation3 + $0x8] sm:$0xff] %vm2868, %v2847
        %2871 = vst.msk [vmem:[#allocation3 + $0x10] sm:$0xff] %vm2868, %v2849
        %2872 = vst.msk [vmem:[#allocation3 + $0x18] sm:$0xff] %vm2868, %v2851
        %2873 = vst.msk [vmem:[#allocation3 + $0x20] sm:$0xff] %vm2868, %v2853
        %2874 = vst.msk [vmem:[#allocation3 + $0x28] sm:$0xff] %vm2868, %v2855
        %2875 = vst.msk [vmem:[#allocation3 + $0x30] sm:$0xff] %vm2868, %v2857
        %2876 = vst.msk [vmem:[#allocation3 + $0x38] sm:$0xff] %vm2868, %v2859
        %v2877 = vld [vmem:[#allocation2] sm:$0xff]
        %v2878 = vld [vmem:[#allocation2 + $0x18] sm:$0xff]
        %v2879 = vld [vmem:[#allocation2 + $0x30] sm:$0xff]
        %v2880 = vld [vmem:[#allocation2 + $0x48] sm:$0xff]
        %v2881 = vld [vmem:[#allocation2 + $0x60] sm:$0xff]
        %v2882 = vld [vmem:[#allocation2 + $0x78] sm:$0xff]
        %v2883 = vld [vmem:[#allocation2 + $0x90] sm:$0xff]
        %v2884 = vld [vmem:[#allocation2 + $0xa8] sm:$0xff]
        %v2885 = vld [vmem:[#allocation2 + $0x8] sm:$0xff]
        %v2886 = vld [vmem:[#allocation2 + $0x20] sm:$0xff]
        %v2887 = vld [vmem:[#allocation2 + $0x38] sm:$0xff]
        %v2888 = vld [vmem:[#allocation2 + $0x50] sm:$0xff]
        %v2889 = vld [vmem:[#allocation2 + $0x68] sm:$0xff]
        %v2890 = vld [vmem:[#allocation2 + $0x80] sm:$0xff]
        %v2891 = vld [vmem:[#allocation2 + $0x98] sm:$0xff]
        %v2892 = vld [vmem:[#allocation2 + $0xb0] sm:$0xff]
        %v2893 = vld [vmem:[#allocation2 + $0x10] sm:$0xff]
        %v2894 = vld [vmem:[#allocation2 + $0x28] sm:$0xff]
        %v2895 = vld [vmem:[#allocation2 + $0x40] sm:$0xff]
        %v2896 = vld [vmem:[#allocation2 + $0x58] sm:$0xff]
        %v2897 = vld [vmem:[#allocation2 + $0x70] sm:$0xff]
        %v2898 = vld [vmem:[#allocation2 + $0x88] sm:$0xff]
        %v2899 = vld [vmem:[#allocation2 + $0xa0] sm:$0xff]
        %v2900 = vld [vmem:[#allocation2 + $0xb8] sm:$0xff]
        %2909 = vrot.lane.b32.xlu0 %v2877, 64
        %v2910 = vpop.permute.xlu0 %2909
        %2911 = vrot.lane.b32.xlu0 %v2878, 64
        %v2912 = vpop.permute.xlu0 %2911
        %2913 = vrot.lane.b32.xlu0 %v2879, 64
        %v2914 = vpop.permute.xlu0 %2913
        %2915 = vrot.lane.b32.xlu0 %v2880, 64
        %v2916 = vpop.permute.xlu0 %2915
        %2917 = vrot.lane.b32.xlu0 %v2881, 64
        %v2918 = vpop.permute.xlu0 %2917
        %2919 = vrot.lane.b32.xlu0 %v2882, 64
        %v2920 = vpop.permute.xlu0 %2919
        %2921 = vrot.lane.b32.xlu0 %v2883, 64
        %v2922 = vpop.permute.xlu0 %2921
        %2923 = vrot.lane.b32.xlu0 %v2884, 64
        %v2924 = vpop.permute.xlu0 %2923
        %2933 = vrot.lane.b32.xlu0 %v2885, 64
        %v2934 = vpop.permute.xlu0 %2933
        %2935 = vrot.lane.b32.xlu0 %v2886, 64
        %v2936 = vpop.permute.xlu0 %2935
        %2937 = vrot.lane.b32.xlu0 %v2887, 64
        %v2938 = vpop.permute.xlu0 %2937
        %2939 = vrot.lane.b32.xlu0 %v2888, 64
        %v2940 = vpop.permute.xlu0 %2939
        %2941 = vrot.lane.b32.xlu0 %v2889, 64
        %v2942 = vpop.permute.xlu0 %2941
        %2943 = vrot.lane.b32.xlu0 %v2890, 64
        %v2944 = vpop.permute.xlu0 %2943
        %2945 = vrot.lane.b32.xlu0 %v2891, 64
        %v2946 = vpop.permute.xlu0 %2945
        %2947 = vrot.lane.b32.xlu0 %v2892, 64
        %v2948 = vpop.permute.xlu0 %2947
        %v2950 = vsel %vm825, %v2910, 0
        %v2953 = vsel %vm825, %v2912, 0
        %v2956 = vsel %vm825, %v2914, 0
        %v2959 = vsel %vm825, %v2916, 0
        %v2962 = vsel %vm825, %v2918, 0
        %v2965 = vsel %vm825, %v2920, 0
        %v2968 = vsel %vm825, %v2922, 0
        %v2971 = vsel %vm825, %v2924, 0
        %v2974 = vsel %vm825, %v2934, 0
        %v2977 = vsel %vm825, %v2936, 0
        %v2980 = vsel %vm825, %v2938, 0
        %v2983 = vsel %vm825, %v2940, 0
        %v2986 = vsel %vm825, %v2942, 0
        %v2989 = vsel %vm825, %v2944, 0
        %v2992 = vsel %vm825, %v2946, 0
        %v2995 = vsel %vm825, %v2948, 0
        %2997 = vmatprep.subr.bf16.mxu0 0
        %2998 = vmatpush1.bf16.xpose.msra.mxu0 %v2974
        %2999 = vmatprep.subr.bf16.mxu0 0
        %3000 = vmatpush1.bf16.xpose.msra.mxu0 %v2977
        %3001 = vmatprep.subr.bf16.mxu0 0
        %3002 = vmatpush1.bf16.xpose.msra.mxu0 %v2980
        %3003 = vmatprep.subr.bf16.mxu0 0
        %3004 = vmatpush1.bf16.xpose.msra.mxu0 %v2983
        %3005 = vmatprep.subr.bf16.mxu0 0
        %3006 = vmatpush1.bf16.xpose.msra.mxu0 %v2986
        %3007 = vmatprep.subr.bf16.mxu0 0
        %3008 = vmatpush1.bf16.xpose.msra.mxu0 %v2989
        %3009 = vmatprep.subr.bf16.mxu0 0
        %3010 = vmatpush1.bf16.xpose.msra.mxu0 %v2992
        %3011 = vmatprep.subr.bf16.mxu0 0
        %3012 = vmatpush1.bf16.xpose.msra.mxu0 %v2995
        %3013 = vmatprep.subr.bf16.mxu0 0
        %3014 = vmatpush1.bf16.xpose.msra.mxu0 0
        %3015 = vmatprep.subr.bf16.mxu0 0
        %3016 = vmatpush1.bf16.xpose.msra.mxu0 0
        %3017 = vmatprep.subr.bf16.mxu0 0
        %3018 = vmatpush1.bf16.xpose.msra.mxu0 0
        %3019 = vmatprep.subr.bf16.mxu0 0
        %3020 = vmatpush1.bf16.xpose.msra.mxu0 0
        %3021 = vmatprep.subr.bf16.mxu0 0
        %3022 = vmatpush1.bf16.xpose.msra.mxu0 0
        %3023 = vmatprep.subr.bf16.mxu0 0
        %3024 = vmatpush1.bf16.xpose.msra.mxu0 0
        %3025 = vmatprep.subr.bf16.mxu0 0
        %3026 = vmatpush1.bf16.xpose.msra.mxu0 0
        %3027 = vmatprep.subr.bf16.mxu0 0
        %3028 = vmatpush1.bf16.xpose.msra.mxu0 0
        %3029 = vmatprep.mubr.bf16.mxu0 0
        %3030 = vmatmul.mubr.bf16.gmra.mrb[0].mxu0 %v2950
        %v3031 = vpop.f32.mrb[0].mxu0
        %v3032 = vadd.f32 0.0, %v3031
        %v3033 = vpop.f32.mrb[0].mxu0
        %v3034 = vpop.f32.mrb[0].mxu0
        %v3035 = vadd.f32 0.0, %v3034
        %v3036 = vpop.f32.mrb[0].mxu0
        %3037 = vmatprep.mubr.bf16.mxu0 0
        %3038 = vmatmul.mubr.bf16.gmra.mrb[0].mxu0 %v2953
        %v3039 = vpop.f32.mrb[0].mxu0
        %v3040 = vadd.f32 0.0, %v3039
        %v3041 = vpop.f32.mrb[0].mxu0
        %v3042 = vpop.f32.mrb[0].mxu0
        %v3043 = vadd.f32 0.0, %v3042
        %v3044 = vpop.f32.mrb[0].mxu0
        %3045 = vmatprep.mubr.bf16.mxu0 0
        %3046 = vmatmul.mubr.bf16.gmra.mrb[0].mxu0 %v2956
        %v3047 = vpop.f32.mrb[0].mxu0
        %v3048 = vadd.f32 0.0, %v3047
        %v3049 = vpop.f32.mrb[0].mxu0
        %v3050 = vpop.f32.mrb[0].mxu0
        %v3051 = vadd.f32 0.0, %v3050
        %v3052 = vpop.f32.mrb[0].mxu0
        %3053 = vmatprep.mubr.bf16.mxu0 0
        %3054 = vmatmul.mubr.bf16.gmra.mrb[0].mxu0 %v2959
        %v3055 = vpop.f32.mrb[0].mxu0
        %v3056 = vadd.f32 0.0, %v3055
        %v3057 = vpop.f32.mrb[0].mxu0
        %v3058 = vpop.f32.mrb[0].mxu0
        %v3059 = vadd.f32 0.0, %v3058
        %v3060 = vpop.f32.mrb[0].mxu0
        %3061 = vmatprep.mubr.bf16.mxu0 0
        %3062 = vmatmul.mubr.bf16.gmra.mrb[0].mxu0 %v2962
        %v3063 = vpop.f32.mrb[0].mxu0
        %v3064 = vadd.f32 0.0, %v3063
        %v3065 = vpop.f32.mrb[0].mxu0
        %v3066 = vpop.f32.mrb[0].mxu0
        %v3067 = vadd.f32 0.0, %v3066
        %v3068 = vpop.f32.mrb[0].mxu0
        %3069 = vmatprep.mubr.bf16.mxu0 0
        %3070 = vmatmul.mubr.bf16.gmra.mrb[0].mxu0 %v2965
        %v3071 = vpop.f32.mrb[0].mxu0
        %v3072 = vadd.f32 0.0, %v3071
        %v3073 = vpop.f32.mrb[0].mxu0
        %v3074 = vpop.f32.mrb[0].mxu0
        %v3075 = vadd.f32 0.0, %v3074
        %v3076 = vpop.f32.mrb[0].mxu0
        %3077 = vmatprep.mubr.bf16.mxu0 0
        %3078 = vmatmul.mubr.bf16.gmra.mrb[0].mxu0 %v2968
        %v3079 = vpop.f32.mrb[0].mxu0
        %v3080 = vadd.f32 0.0, %v3079
        %v3081 = vpop.f32.mrb[0].mxu0
        %v3082 = vpop.f32.mrb[0].mxu0
        %v3083 = vadd.f32 0.0, %v3082
        %v3084 = vpop.f32.mrb[0].mxu0
        %3085 = vmatprep.mubr.bf16.mxu0 0
        %3086 = vmatmul.mubr.bf16.gmra.mrb[0].mxu0 %v2971
        %v3087 = vpop.f32.mrb[0].mxu0
        %v3088 = vadd.f32 0.0, %v3087
        %v3089 = vpop.f32.mrb[0].mxu0
        %v3090 = vpop.f32.mrb[0].mxu0
        %v3091 = vadd.f32 0.0, %v3090
        %v3092 = vpop.f32.mrb[0].mxu0
        %3093 = vdwg.mxu0
        %3094 = vmax.xlane.f32.xlu0 %v3032
        %v3095 = vpop.xlane.xlu0 %3094
        %3096 = vmax.xlane.f32.xlu0 %v3035
        %v3097 = vpop.xlane.xlu0 %3096
        %3098 = vmax.xlane.f32.xlu0 %v3040
        %v3099 = vpop.xlane.xlu0 %3098
        %3100 = vmax.xlane.f32.xlu0 %v3043
        %v3101 = vpop.xlane.xlu0 %3100
        %3102 = vmax.xlane.f32.xlu0 %v3048
        %v3103 = vpop.xlane.xlu0 %3102
        %3104 = vmax.xlane.f32.xlu0 %v3051
        %v3105 = vpop.xlane.xlu0 %3104
        %3106 = vmax.xlane.f32.xlu0 %v3056
        %v3107 = vpop.xlane.xlu0 %3106
        %3108 = vmax.xlane.f32.xlu0 %v3059
        %v3109 = vpop.xlane.xlu0 %3108
        %3110 = vmax.xlane.f32.xlu0 %v3064
        %v3111 = vpop.xlane.xlu0 %3110
        %3112 = vmax.xlane.f32.xlu0 %v3067
        %v3113 = vpop.xlane.xlu0 %3112
        %3114 = vmax.xlane.f32.xlu0 %v3072
        %v3115 = vpop.xlane.xlu0 %3114
        %3116 = vmax.xlane.f32.xlu0 %v3075
        %v3117 = vpop.xlane.xlu0 %3116
        %3118 = vmax.xlane.f32.xlu0 %v3080
        %v3119 = vpop.xlane.xlu0 %3118
        %3120 = vmax.xlane.f32.xlu0 %v3083
        %v3121 = vpop.xlane.xlu0 %3120
        %3122 = vmax.xlane.f32.xlu0 %v3088
        %v3123 = vpop.xlane.xlu0 %3122
        %3124 = vmax.xlane.f32.xlu0 %v3091
        %v3125 = vpop.xlane.xlu0 %3124
        %v3126 = vsub.f32 %v3032, %v3095
        %v3127 = vsub.f32 %v3035, %v3097
        %v3128 = vsub.f32 %v3040, %v3099
        %v3129 = vsub.f32 %v3043, %v3101
        %v3130 = vsub.f32 %v3048, %v3103
        %v3131 = vsub.f32 %v3051, %v3105
        %v3132 = vsub.f32 %v3056, %v3107
        %v3133 = vsub.f32 %v3059, %v3109
        %v3134 = vsub.f32 %v3064, %v3111
        %v3135 = vsub.f32 %v3067, %v3113
        %v3136 = vsub.f32 %v3072, %v3115
        %v3137 = vsub.f32 %v3075, %v3117
        %v3138 = vsub.f32 %v3080, %v3119
        %v3139 = vsub.f32 %v3083, %v3121
        %v3140 = vsub.f32 %v3088, %v3123
        %v3141 = vsub.f32 %v3091, %v3125
        %v3142 = vmul.f32 %v3126, 1.442695
        %v3143 = vpow.pop %v3142
        %v3144 = vmul.f32 %v3127, 1.442695
        %v3145 = vpow.pop %v3144
        %v3146 = vmul.f32 %v3128, 1.442695
        %v3147 = vpow.pop %v3146
        %v3148 = vmul.f32 %v3129, 1.442695
        %v3149 = vpow.pop %v3148
        %v3150 = vmul.f32 %v3130, 1.442695
        %v3151 = vpow.pop %v3150
        %v3152 = vmul.f32 %v3131, 1.442695
        %v3153 = vpow.pop %v3152
        %v3154 = vmul.f32 %v3132, 1.442695
        %v3155 = vpow.pop %v3154
        %v3156 = vmul.f32 %v3133, 1.442695
        %v3157 = vpow.pop %v3156
        %v3158 = vmul.f32 %v3134, 1.442695
        %v3159 = vpow.pop %v3158
        %v3160 = vmul.f32 %v3135, 1.442695
        %v3161 = vpow.pop %v3160
        %v3162 = vmul.f32 %v3136, 1.442695
        %v3163 = vpow.pop %v3162
        %v3164 = vmul.f32 %v3137, 1.442695
        %v3165 = vpow.pop %v3164
        %v3166 = vmul.f32 %v3138, 1.442695
        %v3167 = vpow.pop %v3166
        %v3168 = vmul.f32 %v3139, 1.442695
        %v3169 = vpow.pop %v3168
        %v3170 = vmul.f32 %v3140, 1.442695
        %v3171 = vpow.pop %v3170
        %v3172 = vmul.f32 %v3141, 1.442695
        %v3173 = vpow.pop %v3172
        %3174 = vadd.xlane.f32.xlu0 %v3143
        %v3175 = vpop.xlane.xlu0 %3174
        %3176 = vadd.xlane.f32.xlu0 %v3145
        %v3177 = vpop.xlane.xlu0 %3176
        %3178 = vadd.xlane.f32.xlu0 %v3147
        %v3179 = vpop.xlane.xlu0 %3178
        %3180 = vadd.xlane.f32.xlu0 %v3149
        %v3181 = vpop.xlane.xlu0 %3180
        %3182 = vadd.xlane.f32.xlu0 %v3151
        %v3183 = vpop.xlane.xlu0 %3182
        %3184 = vadd.xlane.f32.xlu0 %v3153
        %v3185 = vpop.xlane.xlu0 %3184
        %3186 = vadd.xlane.f32.xlu0 %v3155
        %v3187 = vpop.xlane.xlu0 %3186
        %3188 = vadd.xlane.f32.xlu0 %v3157
        %v3189 = vpop.xlane.xlu0 %3188
        %3190 = vadd.xlane.f32.xlu0 %v3159
        %v3191 = vpop.xlane.xlu0 %3190
        %3192 = vadd.xlane.f32.xlu0 %v3161
        %v3193 = vpop.xlane.xlu0 %3192
        %3194 = vadd.xlane.f32.xlu0 %v3163
        %v3195 = vpop.xlane.xlu0 %3194
        %3196 = vadd.xlane.f32.xlu0 %v3165
        %v3197 = vpop.xlane.xlu0 %3196
        %3198 = vadd.xlane.f32.xlu0 %v3167
        %v3199 = vpop.xlane.xlu0 %3198
        %3200 = vadd.xlane.f32.xlu0 %v3169
        %v3201 = vpop.xlane.xlu0 %3200
        %3202 = vadd.xlane.f32.xlu0 %v3171
        %v3203 = vpop.xlane.xlu0 %3202
        %3204 = vadd.xlane.f32.xlu0 %v3173
        %v3205 = vpop.xlane.xlu0 %3204
        %v3206 = vrcp.pop %v3175
        %v3207 = vrcp.pop %v3177
        %v3208 = vrcp.pop %v3179
        %v3209 = vrcp.pop %v3181
        %v3210 = vrcp.pop %v3183
        %v3211 = vrcp.pop %v3185
        %v3212 = vrcp.pop %v3187
        %v3213 = vrcp.pop %v3189
        %v3214 = vrcp.pop %v3191
        %v3215 = vrcp.pop %v3193
        %v3216 = vrcp.pop %v3195
        %v3217 = vrcp.pop %v3197
        %v3218 = vrcp.pop %v3199
        %v3219 = vrcp.pop %v3201
        %v3220 = vrcp.pop %v3203
        %v3221 = vrcp.pop %v3205
        %v3222 = vpack.c.bf16 %v3145, %v3143
        %v3223 = vpack.c.bf16 %v3149, %v3147
        %v3224 = vpack.c.bf16 %v3153, %v3151
        %v3225 = vpack.c.bf16 %v3157, %v3155
        %v3226 = vpack.c.bf16 %v3161, %v3159
        %v3227 = vpack.c.bf16 %v3165, %v3163
        %v3228 = vpack.c.bf16 %v3169, %v3167
        %v3229 = vpack.c.bf16 %v3173, %v3171
        %3238 = vrot.lane.b32.xlu0 %v2893, 64
        %v3239 = vpop.permute.xlu0 %3238
        %3240 = vrot.lane.b32.xlu0 %v2894, 64
        %v3241 = vpop.permute.xlu0 %3240
        %3242 = vrot.lane.b32.xlu0 %v2895, 64
        %v3243 = vpop.permute.xlu0 %3242
        %3244 = vrot.lane.b32.xlu0 %v2896, 64
        %v3245 = vpop.permute.xlu0 %3244
        %3246 = vrot.lane.b32.xlu0 %v2897, 64
        %v3247 = vpop.permute.xlu0 %3246
        %3248 = vrot.lane.b32.xlu0 %v2898, 64
        %v3249 = vpop.permute.xlu0 %3248
        %3250 = vrot.lane.b32.xlu0 %v2899, 64
        %v3251 = vpop.permute.xlu0 %3250
        %3252 = vrot.lane.b32.xlu0 %v2900, 64
        %v3253 = vpop.permute.xlu0 %3252
        %3262 = vmatprep.subr.bf16.mxu0 0
        %3263 = vmatpush1.bf16.msra.mxu0 %v3239
        %3264 = vmatprep.subr.bf16.mxu0 0
        %3265 = vmatpush1.bf16.msra.mxu0 %v3241
        %3266 = vmatprep.subr.bf16.mxu0 0
        %3267 = vmatpush1.bf16.msra.mxu0 %v3243
        %3268 = vmatprep.subr.bf16.mxu0 0
        %3269 = vmatpush1.bf16.msra.mxu0 %v3245
        %3270 = vmatprep.subr.bf16.mxu0 0
        %3271 = vmatpush1.bf16.msra.mxu0 %v3247
        %3272 = vmatprep.subr.bf16.mxu0 0
        %3273 = vmatpush1.bf16.msra.mxu0 %v3249
        %3274 = vmatprep.subr.bf16.mxu0 0
        %3275 = vmatpush1.bf16.msra.mxu0 %v3251
        %3276 = vmatprep.subr.bf16.mxu0 0
        %3277 = vmatpush1.bf16.msra.mxu0 %v3253
        %3278 = vmatprep.subr.bf16.mxu0 0
        %3279 = vmatpush1.bf16.msra.mxu0 0
        %3280 = vmatprep.subr.bf16.mxu0 0
        %3281 = vmatpush1.bf16.msra.mxu0 0
        %3282 = vmatprep.subr.bf16.mxu0 0
        %3283 = vmatpush1.bf16.msra.mxu0 0
        %3284 = vmatprep.subr.bf16.mxu0 0
        %3285 = vmatpush1.bf16.msra.mxu0 0
        %3286 = vmatprep.subr.bf16.mxu0 0
        %3287 = vmatpush1.bf16.msra.mxu0 0
        %3288 = vmatprep.subr.bf16.mxu0 0
        %3289 = vmatpush1.bf16.msra.mxu0 0
        %3290 = vmatprep.subr.bf16.mxu0 0
        %3291 = vmatpush1.bf16.msra.mxu0 0
        %3292 = vmatprep.subr.bf16.mxu0 0
        %3293 = vmatpush1.bf16.msra.mxu0 0
        %3294 = vmatprep.mubr.bf16.mxu0 0
        %3295 = vmatmul.mubr.bf16.gmra.mrb[0].mxu0 %v3222
        %v3296 = vpop.f32.mrb[0].mxu0
        %v3297 = vadd.f32 0.0, %v3296
        %v3298 = vpop.f32.mrb[0].mxu0
        %v3299 = vpop.f32.mrb[0].mxu0
        %v3300 = vadd.f32 0.0, %v3299
        %v3301 = vpop.f32.mrb[0].mxu0
        %3302 = vmatprep.mubr.bf16.mxu0 0
        %3303 = vmatmul.mubr.bf16.gmra.mrb[0].mxu0 %v3223
        %v3304 = vpop.f32.mrb[0].mxu0
        %v3305 = vadd.f32 0.0, %v3304
        %v3306 = vpop.f32.mrb[0].mxu0
        %v3307 = vpop.f32.mrb[0].mxu0
        %v3308 = vadd.f32 0.0, %v3307
        %v3309 = vpop.f32.mrb[0].mxu0
        %3310 = vmatprep.mubr.bf16.mxu0 0
        %3311 = vmatmul.mubr.bf16.gmra.mrb[0].mxu0 %v3224
        %v3312 = vpop.f32.mrb[0].mxu0
        %v3313 = vadd.f32 0.0, %v3312
        %v3314 = vpop.f32.mrb[0].mxu0
        %v3315 = vpop.f32.mrb[0].mxu0
        %v3316 = vadd.f32 0.0, %v3315
        %v3317 = vpop.f32.mrb[0].mxu0
        %3318 = vmatprep.mubr.bf16.mxu0 0
        %3319 = vmatmul.mubr.bf16.gmra.mrb[0].mxu0 %v3225
        %v3320 = vpop.f32.mrb[0].mxu0
        %v3321 = vadd.f32 0.0, %v3320
        %v3322 = vpop.f32.mrb[0].mxu0
        %v3323 = vpop.f32.mrb[0].mxu0
        %v3324 = vadd.f32 0.0, %v3323
        %v3325 = vpop.f32.mrb[0].mxu0
        %3326 = vmatprep.mubr.bf16.mxu0 0
        %3327 = vmatmul.mubr.bf16.gmra.mrb[0].mxu0 %v3226
        %v3328 = vpop.f32.mrb[0].mxu0
        %v3329 = vadd.f32 0.0, %v3328
        %v3330 = vpop.f32.mrb[0].mxu0
        %v3331 = vpop.f32.mrb[0].mxu0
        %v3332 = vadd.f32 0.0, %v3331
        %v3333 = vpop.f32.mrb[0].mxu0
        %3334 = vmatprep.mubr.bf16.mxu0 0
        %3335 = vmatmul.mubr.bf16.gmra.mrb[0].mxu0 %v3227
        %v3336 = vpop.f32.mrb[0].mxu0
        %v3337 = vadd.f32 0.0, %v3336
        %v3338 = vpop.f32.mrb[0].mxu0
        %v3339 = vpop.f32.mrb[0].mxu0
        %v3340 = vadd.f32 0.0, %v3339
        %v3341 = vpop.f32.mrb[0].mxu0
        %3342 = vmatprep.mubr.bf16.mxu0 0
        %3343 = vmatmul.mubr.bf16.gmra.mrb[0].mxu0 %v3228
        %v3344 = vpop.f32.mrb[0].mxu0
        %v3345 = vadd.f32 0.0, %v3344
        %v3346 = vpop.f32.mrb[0].mxu0
        %v3347 = vpop.f32.mrb[0].mxu0
        %v3348 = vadd.f32 0.0, %v3347
        %v3349 = vpop.f32.mrb[0].mxu0
        %3350 = vmatprep.mubr.bf16.mxu0 0
        %3351 = vmatmul.mubr.bf16.gmra.mrb[0].mxu0 %v3229
        %v3352 = vpop.f32.mrb[0].mxu0
        %v3353 = vadd.f32 0.0, %v3352
        %v3354 = vpop.f32.mrb[0].mxu0
        %v3355 = vpop.f32.mrb[0].mxu0
        %v3356 = vadd.f32 0.0, %v3355
        %v3357 = vpop.f32.mrb[0].mxu0
        %3358 = vdwg.mxu0
        %v3359 = vmul.f32 %v3297, %v3206
        %v3360 = vmul.f32 %v3300, %v3207
        %v3361 = vmul.f32 %v3305, %v3208
        %v3362 = vmul.f32 %v3308, %v3209
        %v3363 = vmul.f32 %v3313, %v3210
        %v3364 = vmul.f32 %v3316, %v3211
        %v3365 = vmul.f32 %v3321, %v3212
        %v3366 = vmul.f32 %v3324, %v3213
        %v3367 = vmul.f32 %v3329, %v3214
        %v3368 = vmul.f32 %v3332, %v3215
        %v3369 = vmul.f32 %v3337, %v3216
        %v3370 = vmul.f32 %v3340, %v3217
        %v3371 = vmul.f32 %v3345, %v3218
        %v3372 = vmul.f32 %v3348, %v3219
        %v3373 = vmul.f32 %v3353, %v3220
        %v3374 = vmul.f32 %v3356, %v3221
        %v3375 = vpack.c.bf16 %v3360, %v3359
        %v3376 = vpack.c.bf16 %v3362, %v3361
        %v3377 = vpack.c.bf16 %v3364, %v3363
        %v3378 = vpack.c.bf16 %v3366, %v3365
        %v3379 = vpack.c.bf16 %v3368, %v3367
        %v3380 = vpack.c.bf16 %v3370, %v3369
        %v3381 = vpack.c.bf16 %v3372, %v3371
        %v3382 = vpack.c.bf16 %v3374, %v3373
        %3391 = vrot.lane.b32.xlu0 %v3375, 64
        %v3392 = vpop.permute.xlu0 %3391
        %3393 = vrot.lane.b32.xlu0 %v3376, 64
        %v3394 = vpop.permute.xlu0 %3393
        %3395 = vrot.lane.b32.xlu0 %v3377, 64
        %v3396 = vpop.permute.xlu0 %3395
        %3397 = vrot.lane.b32.xlu0 %v3378, 64
        %v3398 = vpop.permute.xlu0 %3397
        %3399 = vrot.lane.b32.xlu0 %v3379, 64
        %v3400 = vpop.permute.xlu0 %3399
        %3401 = vrot.lane.b32.xlu0 %v3380, 64
        %v3402 = vpop.permute.xlu0 %3401
        %3403 = vrot.lane.b32.xlu0 %v3381, 64
        %v3404 = vpop.permute.xlu0 %3403
        %3405 = vrot.lane.b32.xlu0 %v3382, 64
        %v3406 = vpop.permute.xlu0 %3405
        %vm3415 = vcmask 654848
        %3416 = vst.msk [vmem:[#allocation3] sm:$0xff] %vm3415, %v3392
        %3417 = vst.msk [vmem:[#allocation3 + $0x8] sm:$0xff] %vm3415, %v3394
        %3418 = vst.msk [vmem:[#allocation3 + $0x10] sm:$0xff] %vm3415, %v3396
        %3419 = vst.msk [vmem:[#allocation3 + $0x18] sm:$0xff] %vm3415, %v3398
        %3420 = vst.msk [vmem:[#allocation3 + $0x20] sm:$0xff] %vm3415, %v3400
        %3421 = vst.msk [vmem:[#allocation3 + $0x28] sm:$0xff] %vm3415, %v3402
        %3422 = vst.msk [vmem:[#allocation3 + $0x30] sm:$0xff] %vm3415, %v3404
        %3423 = vst.msk [vmem:[#allocation3 + $0x38] sm:$0xff] %vm3415, %v3406
        %v3424 = vld [vmem:[#allocation2] sm:$0xff]
        %v3425 = vld [vmem:[#allocation2 + $0x18] sm:$0xff]
        %v3426 = vld [vmem:[#allocation2 + $0x30] sm:$0xff]
        %v3427 = vld [vmem:[#allocation2 + $0x48] sm:$0xff]
        %v3428 = vld [vmem:[#allocation2 + $0x60] sm:$0xff]
        %v3429 = vld [vmem:[#allocation2 + $0x78] sm:$0xff]
        %v3430 = vld [vmem:[#allocation2 + $0x90] sm:$0xff]
        %v3431 = vld [vmem:[#allocation2 + $0xa8] sm:$0xff]
        %v3432 = vld [vmem:[#allocation2 + $0x8] sm:$0xff]
        %v3433 = vld [vmem:[#allocation2 + $0x20] sm:$0xff]
        %v3434 = vld [vmem:[#allocation2 + $0x38] sm:$0xff]
        %v3435 = vld [vmem:[#allocation2 + $0x50] sm:$0xff]
        %v3436 = vld [vmem:[#allocation2 + $0x68] sm:$0xff]
        %v3437 = vld [vmem:[#allocation2 + $0x80] sm:$0xff]
        %v3438 = vld [vmem:[#allocation2 + $0x98] sm:$0xff]
        %v3439 = vld [vmem:[#allocation2 + $0xb0] sm:$0xff]
        %v3440 = vld [vmem:[#allocation2 + $0x10] sm:$0xff]
        %v3441 = vld [vmem:[#allocation2 + $0x28] sm:$0xff]
        %v3442 = vld [vmem:[#allocation2 + $0x40] sm:$0xff]
        %v3443 = vld [vmem:[#allocation2 + $0x58] sm:$0xff]
        %v3444 = vld [vmem:[#allocation2 + $0x70] sm:$0xff]
        %v3445 = vld [vmem:[#allocation2 + $0x88] sm:$0xff]
        %v3446 = vld [vmem:[#allocation2 + $0xa0] sm:$0xff]
        %v3447 = vld [vmem:[#allocation2 + $0xb8] sm:$0xff]
        %3456 = vrot.lane.b32.xlu0 %v3424, 48
        %v3457 = vpop.permute.xlu0 %3456
        %3458 = vrot.lane.b32.xlu0 %v3425, 48
        %v3459 = vpop.permute.xlu0 %3458
        %3460 = vrot.lane.b32.xlu0 %v3426, 48
        %v3461 = vpop.permute.xlu0 %3460
        %3462 = vrot.lane.b32.xlu0 %v3427, 48
        %v3463 = vpop.permute.xlu0 %3462
        %3464 = vrot.lane.b32.xlu0 %v3428, 48
        %v3465 = vpop.permute.xlu0 %3464
        %3466 = vrot.lane.b32.xlu0 %v3429, 48
        %v3467 = vpop.permute.xlu0 %3466
        %3468 = vrot.lane.b32.xlu0 %v3430, 48
        %v3469 = vpop.permute.xlu0 %3468
        %3470 = vrot.lane.b32.xlu0 %v3431, 48
        %v3471 = vpop.permute.xlu0 %3470
        %3480 = vrot.lane.b32.xlu0 %v3432, 48
        %v3481 = vpop.permute.xlu0 %3480
        %3482 = vrot.lane.b32.xlu0 %v3433, 48
        %v3483 = vpop.permute.xlu0 %3482
        %3484 = vrot.lane.b32.xlu0 %v3434, 48
        %v3485 = vpop.permute.xlu0 %3484
        %3486 = vrot.lane.b32.xlu0 %v3435, 48
        %v3487 = vpop.permute.xlu0 %3486
        %3488 = vrot.lane.b32.xlu0 %v3436, 48
        %v3489 = vpop.permute.xlu0 %3488
        %3490 = vrot.lane.b32.xlu0 %v3437, 48
        %v3491 = vpop.permute.xlu0 %3490
        %3492 = vrot.lane.b32.xlu0 %v3438, 48
        %v3493 = vpop.permute.xlu0 %3492
        %3494 = vrot.lane.b32.xlu0 %v3439, 48
        %v3495 = vpop.permute.xlu0 %3494
        %v3497 = vsel %vm825, %v3457, 0
        %v3500 = vsel %vm825, %v3459, 0
        %v3503 = vsel %vm825, %v3461, 0
        %v3506 = vsel %vm825, %v3463, 0
        %v3509 = vsel %vm825, %v3465, 0
        %v3512 = vsel %vm825, %v3467, 0
        %v3515 = vsel %vm825, %v3469, 0
        %v3518 = vsel %vm825, %v3471, 0
        %v3521 = vsel %vm825, %v3481, 0
        %v3524 = vsel %vm825, %v3483, 0
        %v3527 = vsel %vm825, %v3485, 0
        %v3530 = vsel %vm825, %v3487, 0
        %v3533 = vsel %vm825, %v3489, 0
        %v3536 = vsel %vm825, %v3491, 0
        %v3539 = vsel %vm825, %v3493, 0
        %v3542 = vsel %vm825, %v3495, 0
        %3544 = vmatprep.subr.bf16.mxu0 0
        %3545 = vmatpush1.bf16.xpose.msra.mxu0 %v3521
        %3546 = vmatprep.subr.bf16.mxu0 0
        %3547 = vmatpush1.bf16.xpose.msra.mxu0 %v3524
        %3548 = vmatprep.subr.bf16.mxu0 0
        %3549 = vmatpush1.bf16.xpose.msra.mxu0 %v3527
        %3550 = vmatprep.subr.bf16.mxu0 0
        %3551 = vmatpush1.bf16.xpose.msra.mxu0 %v3530
        %3552 = vmatprep.subr.bf16.mxu0 0
        %3553 = vmatpush1.bf16.xpose.msra.mxu0 %v3533
        %3554 = vmatprep.subr.bf16.mxu0 0
        %3555 = vmatpush1.bf16.xpose.msra.mxu0 %v3536
        %3556 = vmatprep.subr.bf16.mxu0 0
        %3557 = vmatpush1.bf16.xpose.msra.mxu0 %v3539
        %3558 = vmatprep.subr.bf16.mxu0 0
        %3559 = vmatpush1.bf16.xpose.msra.mxu0 %v3542
        %3560 = vmatprep.subr.bf16.mxu0 0
        %3561 = vmatpush1.bf16.xpose.msra.mxu0 0
        %3562 = vmatprep.subr.bf16.mxu0 0
        %3563 = vmatpush1.bf16.xpose.msra.mxu0 0
        %3564 = vmatprep.subr.bf16.mxu0 0
        %3565 = vmatpush1.bf16.xpose.msra.mxu0 0
        %3566 = vmatprep.subr.bf16.mxu0 0
        %3567 = vmatpush1.bf16.xpose.msra.mxu0 0
        %3568 = vmatprep.subr.bf16.mxu0 0
        %3569 = vmatpush1.bf16.xpose.msra.mxu0 0
        %3570 = vmatprep.subr.bf16.mxu0 0
        %3571 = vmatpush1.bf16.xpose.msra.mxu0 0
        %3572 = vmatprep.subr.bf16.mxu0 0
        %3573 = vmatpush1.bf16.xpose.msra.mxu0 0
        %3574 = vmatprep.subr.bf16.mxu0 0
        %3575 = vmatpush1.bf16.xpose.msra.mxu0 0
        %3576 = vmatprep.mubr.bf16.mxu0 0
        %3577 = vmatmul.mubr.bf16.gmra.mrb[0].mxu0 %v3497
        %v3578 = vpop.f32.mrb[0].mxu0
        %v3579 = vadd.f32 0.0, %v3578
        %v3580 = vpop.f32.mrb[0].mxu0
        %v3581 = vpop.f32.mrb[0].mxu0
        %v3582 = vadd.f32 0.0, %v3581
        %v3583 = vpop.f32.mrb[0].mxu0
        %3584 = vmatprep.mubr.bf16.mxu0 0
        %3585 = vmatmul.mubr.bf16.gmra.mrb[0].mxu0 %v3500
        %v3586 = vpop.f32.mrb[0].mxu0
        %v3587 = vadd.f32 0.0, %v3586
        %v3588 = vpop.f32.mrb[0].mxu0
        %v3589 = vpop.f32.mrb[0].mxu0
        %v3590 = vadd.f32 0.0, %v3589
        %v3591 = vpop.f32.mrb[0].mxu0
        %3592 = vmatprep.mubr.bf16.mxu0 0
        %3593 = vmatmul.mubr.bf16.gmra.mrb[0].mxu0 %v3503
        %v3594 = vpop.f32.mrb[0].mxu0
        %v3595 = vadd.f32 0.0, %v3594
        %v3596 = vpop.f32.mrb[0].mxu0
        %v3597 = vpop.f32.mrb[0].mxu0
        %v3598 = vadd.f32 0.0, %v3597
        %v3599 = vpop.f32.mrb[0].mxu0
        %3600 = vmatprep.mubr.bf16.mxu0 0
        %3601 = vmatmul.mubr.bf16.gmra.mrb[0].mxu0 %v3506
        %v3602 = vpop.f32.mrb[0].mxu0
        %v3603 = vadd.f32 0.0, %v3602
        %v3604 = vpop.f32.mrb[0].mxu0
        %v3605 = vpop.f32.mrb[0].mxu0
        %v3606 = vadd.f32 0.0, %v3605
        %v3607 = vpop.f32.mrb[0].mxu0
        %3608 = vmatprep.mubr.bf16.mxu0 0
        %3609 = vmatmul.mubr.bf16.gmra.mrb[0].mxu0 %v3509
        %v3610 = vpop.f32.mrb[0].mxu0
        %v3611 = vadd.f32 0.0, %v3610
        %v3612 = vpop.f32.mrb[0].mxu0
        %v3613 = vpop.f32.mrb[0].mxu0
        %v3614 = vadd.f32 0.0, %v3613
        %v3615 = vpop.f32.mrb[0].mxu0
        %3616 = vmatprep.mubr.bf16.mxu0 0
        %3617 = vmatmul.mubr.bf16.gmra.mrb[0].mxu0 %v3512
        %v3618 = vpop.f32.mrb[0].mxu0
        %v3619 = vadd.f32 0.0, %v3618
        %v3620 = vpop.f32.mrb[0].mxu0
        %v3621 = vpop.f32.mrb[0].mxu0
        %v3622 = vadd.f32 0.0, %v3621
        %v3623 = vpop.f32.mrb[0].mxu0
        %3624 = vmatprep.mubr.bf16.mxu0 0
        %3625 = vmatmul.mubr.bf16.gmra.mrb[0].mxu0 %v3515
        %v3626 = vpop.f32.mrb[0].mxu0
        %v3627 = vadd.f32 0.0, %v3626
        %v3628 = vpop.f32.mrb[0].mxu0
        %v3629 = vpop.f32.mrb[0].mxu0
        %v3630 = vadd.f32 0.0, %v3629
        %v3631 = vpop.f32.mrb[0].mxu0
        %3632 = vmatprep.mubr.bf16.mxu0 0
        %3633 = vmatmul.mubr.bf16.gmra.mrb[0].mxu0 %v3518
        %v3634 = vpop.f32.mrb[0].mxu0
        %v3635 = vadd.f32 0.0, %v3634
        %v3636 = vpop.f32.mrb[0].mxu0
        %v3637 = vpop.f32.mrb[0].mxu0
        %v3638 = vadd.f32 0.0, %v3637
        %v3639 = vpop.f32.mrb[0].mxu0
        %3640 = vdwg.mxu0
        %3641 = vmax.xlane.f32.xlu0 %v3579
        %v3642 = vpop.xlane.xlu0 %3641
        %3643 = vmax.xlane.f32.xlu0 %v3582
        %v3644 = vpop.xlane.xlu0 %3643
        %3645 = vmax.xlane.f32.xlu0 %v3587
        %v3646 = vpop.xlane.xlu0 %3645
        %3647 = vmax.xlane.f32.xlu0 %v3590
        %v3648 = vpop.xlane.xlu0 %3647
        %3649 = vmax.xlane.f32.xlu0 %v3595
        %v3650 = vpop.xlane.xlu0 %3649
        %3651 = vmax.xlane.f32.xlu0 %v3598
        %v3652 = vpop.xlane.xlu0 %3651
        %3653 = vmax.xlane.f32.xlu0 %v3603
        %v3654 = vpop.xlane.xlu0 %3653
        %3655 = vmax.xlane.f32.xlu0 %v3606
        %v3656 = vpop.xlane.xlu0 %3655
        %3657 = vmax.xlane.f32.xlu0 %v3611
        %v3658 = vpop.xlane.xlu0 %3657
        %3659 = vmax.xlane.f32.xlu0 %v3614
        %v3660 = vpop.xlane.xlu0 %3659
        %3661 = vmax.xlane.f32.xlu0 %v3619
        %v3662 = vpop.xlane.xlu0 %3661
        %3663 = vmax.xlane.f32.xlu0 %v3622
        %v3664 = vpop.xlane.xlu0 %3663
        %3665 = vmax.xlane.f32.xlu0 %v3627
        %v3666 = vpop.xlane.xlu0 %3665
        %3667 = vmax.xlane.f32.xlu0 %v3630
        %v3668 = vpop.xlane.xlu0 %3667
        %3669 = vmax.xlane.f32.xlu0 %v3635
        %v3670 = vpop.xlane.xlu0 %3669
        %3671 = vmax.xlane.f32.xlu0 %v3638
        %v3672 = vpop.xlane.xlu0 %3671
        %v3673 = vsub.f32 %v3579, %v3642
        %v3674 = vsub.f32 %v3582, %v3644
        %v3675 = vsub.f32 %v3587, %v3646
        %v3676 = vsub.f32 %v3590, %v3648
        %v3677 = vsub.f32 %v3595, %v3650
        %v3678 = vsub.f32 %v3598, %v3652
        %v3679 = vsub.f32 %v3603, %v3654
        %v3680 = vsub.f32 %v3606, %v3656
        %v3681 = vsub.f32 %v3611, %v3658
        %v3682 = vsub.f32 %v3614, %v3660
        %v3683 = vsub.f32 %v3619, %v3662
        %v3684 = vsub.f32 %v3622, %v3664
        %v3685 = vsub.f32 %v3627, %v3666
        %v3686 = vsub.f32 %v3630, %v3668
        %v3687 = vsub.f32 %v3635, %v3670
        %v3688 = vsub.f32 %v3638, %v3672
        %v3689 = vmul.f32 %v3673, 1.442695
        %v3690 = vpow.pop %v3689
        %v3691 = vmul.f32 %v3674, 1.442695
        %v3692 = vpow.pop %v3691
        %v3693 = vmul.f32 %v3675, 1.442695
        %v3694 = vpow.pop %v3693
        %v3695 = vmul.f32 %v3676, 1.442695
        %v3696 = vpow.pop %v3695
        %v3697 = vmul.f32 %v3677, 1.442695
        %v3698 = vpow.pop %v3697
        %v3699 = vmul.f32 %v3678, 1.442695
        %v3700 = vpow.pop %v3699
        %v3701 = vmul.f32 %v3679, 1.442695
        %v3702 = vpow.pop %v3701
        %v3703 = vmul.f32 %v3680, 1.442695
        %v3704 = vpow.pop %v3703
        %v3705 = vmul.f32 %v3681, 1.442695
        %v3706 = vpow.pop %v3705
        %v3707 = vmul.f32 %v3682, 1.442695
        %v3708 = vpow.pop %v3707
        %v3709 = vmul.f32 %v3683, 1.442695
        %v3710 = vpow.pop %v3709
        %v3711 = vmul.f32 %v3684, 1.442695
        %v3712 = vpow.pop %v3711
        %v3713 = vmul.f32 %v3685, 1.442695
        %v3714 = vpow.pop %v3713
        %v3715 = vmul.f32 %v3686, 1.442695
        %v3716 = vpow.pop %v3715
        %v3717 = vmul.f32 %v3687, 1.442695
        %v3718 = vpow.pop %v3717
        %v3719 = vmul.f32 %v3688, 1.442695
        %v3720 = vpow.pop %v3719
        %3721 = vadd.xlane.f32.xlu0 %v3690
        %v3722 = vpop.xlane.xlu0 %3721
        %3723 = vadd.xlane.f32.xlu0 %v3692
        %v3724 = vpop.xlane.xlu0 %3723
        %3725 = vadd.xlane.f32.xlu0 %v3694
        %v3726 = vpop.xlane.xlu0 %3725
        %3727 = vadd.xlane.f32.xlu0 %v3696
        %v3728 = vpop.xlane.xlu0 %3727
        %3729 = vadd.xlane.f32.xlu0 %v3698
        %v3730 = vpop.xlane.xlu0 %3729
        %3731 = vadd.xlane.f32.xlu0 %v3700
        %v3732 = vpop.xlane.xlu0 %3731
        %3733 = vadd.xlane.f32.xlu0 %v3702
        %v3734 = vpop.xlane.xlu0 %3733
        %3735 = vadd.xlane.f32.xlu0 %v3704
        %v3736 = vpop.xlane.xlu0 %3735
        %3737 = vadd.xlane.f32.xlu0 %v3706
        %v3738 = vpop.xlane.xlu0 %3737
        %3739 = vadd.xlane.f32.xlu0 %v3708
        %v3740 = vpop.xlane.xlu0 %3739
        %3741 = vadd.xlane.f32.xlu0 %v3710
        %v3742 = vpop.xlane.xlu0 %3741
        %3743 = vadd.xlane.f32.xlu0 %v3712
        %v3744 = vpop.xlane.xlu0 %3743
        %3745 = vadd.xlane.f32.xlu0 %v3714
        %v3746 = vpop.xlane.xlu0 %3745
        %3747 = vadd.xlane.f32.xlu0 %v3716
        %v3748 = vpop.xlane.xlu0 %3747
        %3749 = vadd.xlane.f32.xlu0 %v3718
        %v3750 = vpop.xlane.xlu0 %3749
        %3751 = vadd.xlane.f32.xlu0 %v3720
        %v3752 = vpop.xlane.xlu0 %3751
        %v3753 = vrcp.pop %v3722
        %v3754 = vrcp.pop %v3724
        %v3755 = vrcp.pop %v3726
        %v3756 = vrcp.pop %v3728
        %v3757 = vrcp.pop %v3730
        %v3758 = vrcp.pop %v3732
        %v3759 = vrcp.pop %v3734
        %v3760 = vrcp.pop %v3736
        %v3761 = vrcp.pop %v3738
        %v3762 = vrcp.pop %v3740
        %v3763 = vrcp.pop %v3742
        %v3764 = vrcp.pop %v3744
        %v3765 = vrcp.pop %v3746
        %v3766 = vrcp.pop %v3748
        %v3767 = vrcp.pop %v3750
        %v3768 = vrcp.pop %v3752
        %v3769 = vpack.c.bf16 %v3692, %v3690
        %v3770 = vpack.c.bf16 %v3696, %v3694
        %v3771 = vpack.c.bf16 %v3700, %v3698
        %v3772 = vpack.c.bf16 %v3704, %v3702
        %v3773 = vpack.c.bf16 %v3708, %v3706
        %v3774 = vpack.c.bf16 %v3712, %v3710
        %v3775 = vpack.c.bf16 %v3716, %v3714
        %v3776 = vpack.c.bf16 %v3720, %v3718
        %3785 = vrot.lane.b32.xlu0 %v3440, 48
        %v3786 = vpop.permute.xlu0 %3785
        %3787 = vrot.lane.b32.xlu0 %v3441, 48
        %v3788 = vpop.permute.xlu0 %3787
        %3789 = vrot.lane.b32.xlu0 %v3442, 48
        %v3790 = vpop.permute.xlu0 %3789
        %3791 = vrot.lane.b32.xlu0 %v3443, 48
        %v3792 = vpop.permute.xlu0 %3791
        %3793 = vrot.lane.b32.xlu0 %v3444, 48
        %v3794 = vpop.permute.xlu0 %3793
        %3795 = vrot.lane.b32.xlu0 %v3445, 48
        %v3796 = vpop.permute.xlu0 %3795
        %3797 = vrot.lane.b32.xlu0 %v3446, 48
        %v3798 = vpop.permute.xlu0 %3797
        %3799 = vrot.lane.b32.xlu0 %v3447, 48
        %v3800 = vpop.permute.xlu0 %3799
        %3809 = vmatprep.subr.bf16.mxu0 0
        %3810 = vmatpush1.bf16.msra.mxu0 %v3786
        %3811 = vmatprep.subr.bf16.mxu0 0
        %3812 = vmatpush1.bf16.msra.mxu0 %v3788
        %3813 = vmatprep.subr.bf16.mxu0 0
        %3814 = vmatpush1.bf16.msra.mxu0 %v3790
        %3815 = vmatprep.subr.bf16.mxu0 0
        %3816 = vmatpush1.bf16.msra.mxu0 %v3792
        %3817 = vmatprep.subr.bf16.mxu0 0
        %3818 = vmatpush1.bf16.msra.mxu0 %v3794
        %3819 = vmatprep.subr.bf16.mxu0 0
        %3820 = vmatpush1.bf16.msra.mxu0 %v3796
        %3821 = vmatprep.subr.bf16.mxu0 0
        %3822 = vmatpush1.bf16.msra.mxu0 %v3798
        %3823 = vmatprep.subr.bf16.mxu0 0
        %3824 = vmatpush1.bf16.msra.mxu0 %v3800
        %3825 = vmatprep.subr.bf16.mxu0 0
        %3826 = vmatpush1.bf16.msra.mxu0 0
        %3827 = vmatprep.subr.bf16.mxu0 0
        %3828 = vmatpush1.bf16.msra.mxu0 0
        %3829 = vmatprep.subr.bf16.mxu0 0
        %3830 = vmatpush1.bf16.msra.mxu0 0
        %3831 = vmatprep.subr.bf16.mxu0 0
        %3832 = vmatpush1.bf16.msra.mxu0 0
        %3833 = vmatprep.subr.bf16.mxu0 0
        %3834 = vmatpush1.bf16.msra.mxu0 0
        %3835 = vmatprep.subr.bf16.mxu0 0
        %3836 = vmatpush1.bf16.msra.mxu0 0
        %3837 = vmatprep.subr.bf16.mxu0 0
        %3838 = vmatpush1.bf16.msra.mxu0 0
        %3839 = vmatprep.subr.bf16.mxu0 0
        %3840 = vmatpush1.bf16.msra.mxu0 0
        %3841 = vmatprep.mubr.bf16.mxu0 0
        %3842 = vmatmul.mubr.bf16.gmra.mrb[0].mxu0 %v3769
        %v3843 = vpop.f32.mrb[0].mxu0
        %v3844 = vadd.f32 0.0, %v3843
        %v3845 = vpop.f32.mrb[0].mxu0
        %v3846 = vpop.f32.mrb[0].mxu0
        %v3847 = vadd.f32 0.0, %v3846
        %v3848 = vpop.f32.mrb[0].mxu0
        %3849 = vmatprep.mubr.bf16.mxu0 0
        %3850 = vmatmul.mubr.bf16.gmra.mrb[0].mxu0 %v3770
        %v3851 = vpop.f32.mrb[0].mxu0
        %v3852 = vadd.f32 0.0, %v3851
        %v3853 = vpop.f32.mrb[0].mxu0
        %v3854 = vpop.f32.mrb[0].mxu0
        %v3855 = vadd.f32 0.0, %v3854
        %v3856 = vpop.f32.mrb[0].mxu0
        %3857 = vmatprep.mubr.bf16.mxu0 0
        %3858 = vmatmul.mubr.bf16.gmra.mrb[0].mxu0 %v3771
        %v3859 = vpop.f32.mrb[0].mxu0
        %v3860 = vadd.f32 0.0, %v3859
        %v3861 = vpop.f32.mrb[0].mxu0
        %v3862 = vpop.f32.mrb[0].mxu0
        %v3863 = vadd.f32 0.0, %v3862
        %v3864 = vpop.f32.mrb[0].mxu0
        %3865 = vmatprep.mubr.bf16.mxu0 0
        %3866 = vmatmul.mubr.bf16.gmra.mrb[0].mxu0 %v3772
        %v3867 = vpop.f32.mrb[0].mxu0
        %v3868 = vadd.f32 0.0, %v3867
        %v3869 = vpop.f32.mrb[0].mxu0
        %v3870 = vpop.f32.mrb[0].mxu0
        %v3871 = vadd.f32 0.0, %v3870
        %v3872 = vpop.f32.mrb[0].mxu0
        %3873 = vmatprep.mubr.bf16.mxu0 0
        %3874 = vmatmul.mubr.bf16.gmra.mrb[0].mxu0 %v3773
        %v3875 = vpop.f32.mrb[0].mxu0
        %v3876 = vadd.f32 0.0, %v3875
        %v3877 = vpop.f32.mrb[0].mxu0
        %v3878 = vpop.f32.mrb[0].mxu0
        %v3879 = vadd.f32 0.0, %v3878
        %v3880 = vpop.f32.mrb[0].mxu0
        %3881 = vmatprep.mubr.bf16.mxu0 0
        %3882 = vmatmul.mubr.bf16.gmra.mrb[0].mxu0 %v3774
        %v3883 = vpop.f32.mrb[0].mxu0
        %v3884 = vadd.f32 0.0, %v3883
        %v3885 = vpop.f32.mrb[0].mxu0
        %v3886 = vpop.f32.mrb[0].mxu0
        %v3887 = vadd.f32 0.0, %v3886
        %v3888 = vpop.f32.mrb[0].mxu0
        %3889 = vmatprep.mubr.bf16.mxu0 0
        %3890 = vmatmul.mubr.bf16.gmra.mrb[0].mxu0 %v3775
        %v3891 = vpop.f32.mrb[0].mxu0
        %v3892 = vadd.f32 0.0, %v3891
        %v3893 = vpop.f32.mrb[0].mxu0
        %v3894 = vpop.f32.mrb[0].mxu0
        %v3895 = vadd.f32 0.0, %v3894
        %v3896 = vpop.f32.mrb[0].mxu0
        %3897 = vmatprep.mubr.bf16.mxu0 0
        %3898 = vmatmul.mubr.bf16.gmra.mrb[0].mxu0 %v3776
        %v3899 = vpop.f32.mrb[0].mxu0
        %v3900 = vadd.f32 0.0, %v3899
        %v3901 = vpop.f32.mrb[0].mxu0
        %v3902 = vpop.f32.mrb[0].mxu0
        %v3903 = vadd.f32 0.0, %v3902
        %v3904 = vpop.f32.mrb[0].mxu0
        %3905 = vdwg.mxu0
        %v3906 = vmul.f32 %v3844, %v3753
        %v3907 = vmul.f32 %v3847, %v3754
        %v3908 = vmul.f32 %v3852, %v3755
        %v3909 = vmul.f32 %v3855, %v3756
        %v3910 = vmul.f32 %v3860, %v3757
        %v3911 = vmul.f32 %v3863, %v3758
        %v3912 = vmul.f32 %v3868, %v3759
        %v3913 = vmul.f32 %v3871, %v3760
        %v3914 = vmul.f32 %v3876, %v3761
        %v3915 = vmul.f32 %v3879, %v3762
        %v3916 = vmul.f32 %v3884, %v3763
        %v3917 = vmul.f32 %v3887, %v3764
        %v3918 = vmul.f32 %v3892, %v3765
        %v3919 = vmul.f32 %v3895, %v3766
        %v3920 = vmul.f32 %v3900, %v3767
        %v3921 = vmul.f32 %v3903, %v3768
        %v3922 = vpack.c.bf16 %v3907, %v3906
        %v3923 = vpack.c.bf16 %v3909, %v3908
        %v3924 = vpack.c.bf16 %v3911, %v3910
        %v3925 = vpack.c.bf16 %v3913, %v3912
        %v3926 = vpack.c.bf16 %v3915, %v3914
        %v3927 = vpack.c.bf16 %v3917, %v3916
        %v3928 = vpack.c.bf16 %v3919, %v3918
        %v3929 = vpack.c.bf16 %v3921, %v3920
        %3938 = vrot.lane.b32.xlu0 %v3922, 80
        %v3939 = vpop.permute.xlu0 %3938
        %3940 = vrot.lane.b32.xlu0 %v3923, 80
        %v3941 = vpop.permute.xlu0 %3940
        %3942 = vrot.lane.b32.xlu0 %v3924, 80
        %v3943 = vpop.permute.xlu0 %3942
        %3944 = vrot.lane.b32.xlu0 %v3925, 80
        %v3945 = vpop.permute.xlu0 %3944
        %3946 = vrot.lane.b32.xlu0 %v3926, 80
        %v3947 = vpop.permute.xlu0 %3946
        %3948 = vrot.lane.b32.xlu0 %v3927, 80
        %v3949 = vpop.permute.xlu0 %3948
        %3950 = vrot.lane.b32.xlu0 %v3928, 80
        %v3951 = vpop.permute.xlu0 %3950
        %3952 = vrot.lane.b32.xlu0 %v3929, 80
        %v3953 = vpop.permute.xlu0 %3952
        %vm3962 = vcmask 786048
        %3963 = vst.msk [vmem:[#allocation3] sm:$0xff] %vm3962, %v3939
        %3964 = vst.msk [vmem:[#allocation3 + $0x8] sm:$0xff] %vm3962, %v3941
        %3965 = vst.msk [vmem:[#allocation3 + $0x10] sm:$0xff] %vm3962, %v3943
        %3966 = vst.msk [vmem:[#allocation3 + $0x18] sm:$0xff] %vm3962, %v3945
        %3967 = vst.msk [vmem:[#allocation3 + $0x20] sm:$0xff] %vm3962, %v3947
        %3968 = vst.msk [vmem:[#allocation3 + $0x28] sm:$0xff] %vm3962, %v3949
        %3969 = vst.msk [vmem:[#allocation3 + $0x30] sm:$0xff] %vm3962, %v3951
        %3970 = vst.msk [vmem:[#allocation3 + $0x38] sm:$0xff] %vm3962, %v3953
        %v3971 = vld [vmem:[#allocation2] sm:$0xff]
        %v3972 = vld [vmem:[#allocation2 + $0x18] sm:$0xff]
        %v3973 = vld [vmem:[#allocation2 + $0x30] sm:$0xff]
        %v3974 = vld [vmem:[#allocation2 + $0x48] sm:$0xff]
        %v3975 = vld [vmem:[#allocation2 + $0x60] sm:$0xff]
        %v3976 = vld [vmem:[#allocation2 + $0x78] sm:$0xff]
        %v3977 = vld [vmem:[#allocation2 + $0x90] sm:$0xff]
        %v3978 = vld [vmem:[#allocation2 + $0xa8] sm:$0xff]
        %v3979 = vld [vmem:[#allocation2 + $0x8] sm:$0xff]
        %v3980 = vld [vmem:[#allocation2 + $0x20] sm:$0xff]
        %v3981 = vld [vmem:[#allocation2 + $0x38] sm:$0xff]
        %v3982 = vld [vmem:[#allocation2 + $0x50] sm:$0xff]
        %v3983 = vld [vmem:[#allocation2 + $0x68] sm:$0xff]
        %v3984 = vld [vmem:[#allocation2 + $0x80] sm:$0xff]
        %v3985 = vld [vmem:[#allocation2 + $0x98] sm:$0xff]
        %v3986 = vld [vmem:[#allocation2 + $0xb0] sm:$0xff]
        %v3987 = vld [vmem:[#allocation2 + $0x10] sm:$0xff]
        %v3988 = vld [vmem:[#allocation2 + $0x28] sm:$0xff]
        %v3989 = vld [vmem:[#allocation2 + $0x40] sm:$0xff]
        %v3990 = vld [vmem:[#allocation2 + $0x58] sm:$0xff]
        %v3991 = vld [vmem:[#allocation2 + $0x70] sm:$0xff]
        %v3992 = vld [vmem:[#allocation2 + $0x88] sm:$0xff]
        %v3993 = vld [vmem:[#allocation2 + $0xa0] sm:$0xff]
        %v3994 = vld [vmem:[#allocation2 + $0xb8] sm:$0xff]
        %4003 = vrot.lane.b32.xlu0 %v3971, 32
        %v4004 = vpop.permute.xlu0 %4003
        %4005 = vrot.lane.b32.xlu0 %v3972, 32
        %v4006 = vpop.permute.xlu0 %4005
        %4007 = vrot.lane.b32.xlu0 %v3973, 32
        %v4008 = vpop.permute.xlu0 %4007
        %4009 = vrot.lane.b32.xlu0 %v3974, 32
        %v4010 = vpop.permute.xlu0 %4009
        %4011 = vrot.lane.b32.xlu0 %v3975, 32
        %v4012 = vpop.permute.xlu0 %4011
        %4013 = vrot.lane.b32.xlu0 %v3976, 32
        %v4014 = vpop.permute.xlu0 %4013
        %4015 = vrot.lane.b32.xlu0 %v3977, 32
        %v4016 = vpop.permute.xlu0 %4015
        %4017 = vrot.lane.b32.xlu0 %v3978, 32
        %v4018 = vpop.permute.xlu0 %4017
        %4027 = vrot.lane.b32.xlu0 %v3979, 32
        %v4028 = vpop.permute.xlu0 %4027
        %4029 = vrot.lane.b32.xlu0 %v3980, 32
        %v4030 = vpop.permute.xlu0 %4029
        %4031 = vrot.lane.b32.xlu0 %v3981, 32
        %v4032 = vpop.permute.xlu0 %4031
        %4033 = vrot.lane.b32.xlu0 %v3982, 32
        %v4034 = vpop.permute.xlu0 %4033
        %4035 = vrot.lane.b32.xlu0 %v3983, 32
        %v4036 = vpop.permute.xlu0 %4035
        %4037 = vrot.lane.b32.xlu0 %v3984, 32
        %v4038 = vpop.permute.xlu0 %4037
        %4039 = vrot.lane.b32.xlu0 %v3985, 32
        %v4040 = vpop.permute.xlu0 %4039
        %4041 = vrot.lane.b32.xlu0 %v3986, 32
        %v4042 = vpop.permute.xlu0 %4041
        %v4044 = vsel %vm825, %v4004, 0
        %v4047 = vsel %vm825, %v4006, 0
        %v4050 = vsel %vm825, %v4008, 0
        %v4053 = vsel %vm825, %v4010, 0
        %v4056 = vsel %vm825, %v4012, 0
        %v4059 = vsel %vm825, %v4014, 0
        %v4062 = vsel %vm825, %v4016, 0
        %v4065 = vsel %vm825, %v4018, 0
        %v4068 = vsel %vm825, %v4028, 0
        %v4071 = vsel %vm825, %v4030, 0
        %v4074 = vsel %vm825, %v4032, 0
        %v4077 = vsel %vm825, %v4034, 0
        %v4080 = vsel %vm825, %v4036, 0
        %v4083 = vsel %vm825, %v4038, 0
        %v4086 = vsel %vm825, %v4040, 0
        %v4089 = vsel %vm825, %v4042, 0
        %4091 = vmatprep.subr.bf16.mxu0 0
        %4092 = vmatpush1.bf16.xpose.msra.mxu0 %v4068
        %4093 = vmatprep.subr.bf16.mxu0 0
        %4094 = vmatpush1.bf16.xpose.msra.mxu0 %v4071
        %4095 = vmatprep.subr.bf16.mxu0 0
        %4096 = vmatpush1.bf16.xpose.msra.mxu0 %v4074
        %4097 = vmatprep.subr.bf16.mxu0 0
        %4098 = vmatpush1.bf16.xpose.msra.mxu0 %v4077
        %4099 = vmatprep.subr.bf16.mxu0 0
        %4100 = vmatpush1.bf16.xpose.msra.mxu0 %v4080
        %4101 = vmatprep.subr.bf16.mxu0 0
        %4102 = vmatpush1.bf16.xpose.msra.mxu0 %v4083
        %4103 = vmatprep.subr.bf16.mxu0 0
        %4104 = vmatpush1.bf16.xpose.msra.mxu0 %v4086
        %4105 = vmatprep.subr.bf16.mxu0 0
        %4106 = vmatpush1.bf16.xpose.msra.mxu0 %v4089
        %4107 = vmatprep.subr.bf16.mxu0 0
        %4108 = vmatpush1.bf16.xpose.msra.mxu0 0
        %4109 = vmatprep.subr.bf16.mxu0 0
        %4110 = vmatpush1.bf16.xpose.msra.mxu0 0
        %4111 = vmatprep.subr.bf16.mxu0 0
        %4112 = vmatpush1.bf16.xpose.msra.mxu0 0
        %4113 = vmatprep.subr.bf16.mxu0 0
        %4114 = vmatpush1.bf16.xpose.msra.mxu0 0
        %4115 = vmatprep.subr.bf16.mxu0 0
        %4116 = vmatpush1.bf16.xpose.msra.mxu0 0
        %4117 = vmatprep.subr.bf16.mxu0 0
        %4118 = vmatpush1.bf16.xpose.msra.mxu0 0
        %4119 = vmatprep.subr.bf16.mxu0 0
        %4120 = vmatpush1.bf16.xpose.msra.mxu0 0
        %4121 = vmatprep.subr.bf16.mxu0 0
        %4122 = vmatpush1.bf16.xpose.msra.mxu0 0
        %4123 = vmatprep.mubr.bf16.mxu0 0
        %4124 = vmatmul.mubr.bf16.gmra.mrb[0].mxu0 %v4044
        %v4125 = vpop.f32.mrb[0].mxu0
        %v4126 = vadd.f32 0.0, %v4125
        %v4127 = vpop.f32.mrb[0].mxu0
        %v4128 = vpop.f32.mrb[0].mxu0
        %v4129 = vadd.f32 0.0, %v4128
        %v4130 = vpop.f32.mrb[0].mxu0
        %4131 = vmatprep.mubr.bf16.mxu0 0
        %4132 = vmatmul.mubr.bf16.gmra.mrb[0].mxu0 %v4047
        %v4133 = vpop.f32.mrb[0].mxu0
        %v4134 = vadd.f32 0.0, %v4133
        %v4135 = vpop.f32.mrb[0].mxu0
        %v4136 = vpop.f32.mrb[0].mxu0
        %v4137 = vadd.f32 0.0, %v4136
        %v4138 = vpop.f32.mrb[0].mxu0
        %4139 = vmatprep.mubr.bf16.mxu0 0
        %4140 = vmatmul.mubr.bf16.gmra.mrb[0].mxu0 %v4050
        %v4141 = vpop.f32.mrb[0].mxu0
        %v4142 = vadd.f32 0.0, %v4141
        %v4143 = vpop.f32.mrb[0].mxu0
        %v4144 = vpop.f32.mrb[0].mxu0
        %v4145 = vadd.f32 0.0, %v4144
        %v4146 = vpop.f32.mrb[0].mxu0
        %4147 = vmatprep.mubr.bf16.mxu0 0
        %4148 = vmatmul.mubr.bf16.gmra.mrb[0].mxu0 %v4053
        %v4149 = vpop.f32.mrb[0].mxu0
        %v4150 = vadd.f32 0.0, %v4149
        %v4151 = vpop.f32.mrb[0].mxu0
        %v4152 = vpop.f32.mrb[0].mxu0
        %v4153 = vadd.f32 0.0, %v4152
        %v4154 = vpop.f32.mrb[0].mxu0
        %4155 = vmatprep.mubr.bf16.mxu0 0
        %4156 = vmatmul.mubr.bf16.gmra.mrb[0].mxu0 %v4056
        %v4157 = vpop.f32.mrb[0].mxu0
        %v4158 = vadd.f32 0.0, %v4157
        %v4159 = vpop.f32.mrb[0].mxu0
        %v4160 = vpop.f32.mrb[0].mxu0
        %v4161 = vadd.f32 0.0, %v4160
        %v4162 = vpop.f32.mrb[0].mxu0
        %4163 = vmatprep.mubr.bf16.mxu0 0
        %4164 = vmatmul.mubr.bf16.gmra.mrb[0].mxu0 %v4059
        %v4165 = vpop.f32.mrb[0].mxu0
        %v4166 = vadd.f32 0.0, %v4165
        %v4167 = vpop.f32.mrb[0].mxu0
        %v4168 = vpop.f32.mrb[0].mxu0
        %v4169 = vadd.f32 0.0, %v4168
        %v4170 = vpop.f32.mrb[0].mxu0
        %4171 = vmatprep.mubr.bf16.mxu0 0
        %4172 = vmatmul.mubr.bf16.gmra.mrb[0].mxu0 %v4062
        %v4173 = vpop.f32.mrb[0].mxu0
        %v4174 = vadd.f32 0.0, %v4173
        %v4175 = vpop.f32.mrb[0].mxu0
        %v4176 = vpop.f32.mrb[0].mxu0
        %v4177 = vadd.f32 0.0, %v4176
        %v4178 = vpop.f32.mrb[0].mxu0
        %4179 = vmatprep.mubr.bf16.mxu0 0
        %4180 = vmatmul.mubr.bf16.gmra.mrb[0].mxu0 %v4065
        %v4181 = vpop.f32.mrb[0].mxu0
        %v4182 = vadd.f32 0.0, %v4181
        %v4183 = vpop.f32.mrb[0].mxu0
        %v4184 = vpop.f32.mrb[0].mxu0
        %v4185 = vadd.f32 0.0, %v4184
        %v4186 = vpop.f32.mrb[0].mxu0
        %4187 = vdwg.mxu0
        %4188 = vmax.xlane.f32.xlu0 %v4126
        %v4189 = vpop.xlane.xlu0 %4188
        %4190 = vmax.xlane.f32.xlu0 %v4129
        %v4191 = vpop.xlane.xlu0 %4190
        %4192 = vmax.xlane.f32.xlu0 %v4134
        %v4193 = vpop.xlane.xlu0 %4192
        %4194 = vmax.xlane.f32.xlu0 %v4137
        %v4195 = vpop.xlane.xlu0 %4194
        %4196 = vmax.xlane.f32.xlu0 %v4142
        %v4197 = vpop.xlane.xlu0 %4196
        %4198 = vmax.xlane.f32.xlu0 %v4145
        %v4199 = vpop.xlane.xlu0 %4198
        %4200 = vmax.xlane.f32.xlu0 %v4150
        %v4201 = vpop.xlane.xlu0 %4200
        %4202 = vmax.xlane.f32.xlu0 %v4153
        %v4203 = vpop.xlane.xlu0 %4202
        %4204 = vmax.xlane.f32.xlu0 %v4158
        %v4205 = vpop.xlane.xlu0 %4204
        %4206 = vmax.xlane.f32.xlu0 %v4161
        %v4207 = vpop.xlane.xlu0 %4206
        %4208 = vmax.xlane.f32.xlu0 %v4166
        %v4209 = vpop.xlane.xlu0 %4208
        %4210 = vmax.xlane.f32.xlu0 %v4169
        %v4211 = vpop.xlane.xlu0 %4210
        %4212 = vmax.xlane.f32.xlu0 %v4174
        %v4213 = vpop.xlane.xlu0 %4212
        %4214 = vmax.xlane.f32.xlu0 %v4177
        %v4215 = vpop.xlane.xlu0 %4214
        %4216 = vmax.xlane.f32.xlu0 %v4182
        %v4217 = vpop.xlane.xlu0 %4216
        %4218 = vmax.xlane.f32.xlu0 %v4185
        %v4219 = vpop.xlane.xlu0 %4218
        %v4220 = vsub.f32 %v4126, %v4189
        %v4221 = vsub.f32 %v4129, %v4191
        %v4222 = vsub.f32 %v4134, %v4193
        %v4223 = vsub.f32 %v4137, %v4195
        %v4224 = vsub.f32 %v4142, %v4197
        %v4225 = vsub.f32 %v4145, %v4199
        %v4226 = vsub.f32 %v4150, %v4201
        %v4227 = vsub.f32 %v4153, %v4203
        %v4228 = vsub.f32 %v4158, %v4205
        %v4229 = vsub.f32 %v4161, %v4207
        %v4230 = vsub.f32 %v4166, %v4209
        %v4231 = vsub.f32 %v4169, %v4211
        %v4232 = vsub.f32 %v4174, %v4213
        %v4233 = vsub.f32 %v4177, %v4215
        %v4234 = vsub.f32 %v4182, %v4217
        %v4235 = vsub.f32 %v4185, %v4219
        %v4236 = vmul.f32 %v4220, 1.442695
        %v4237 = vpow.pop %v4236
        %v4238 = vmul.f32 %v4221, 1.442695
        %v4239 = vpow.pop %v4238
        %v4240 = vmul.f32 %v4222, 1.442695
        %v4241 = vpow.pop %v4240
        %v4242 = vmul.f32 %v4223, 1.442695
        %v4243 = vpow.pop %v4242
        %v4244 = vmul.f32 %v4224, 1.442695
        %v4245 = vpow.pop %v4244
        %v4246 = vmul.f32 %v4225, 1.442695
        %v4247 = vpow.pop %v4246
        %v4248 = vmul.f32 %v4226, 1.442695
        %v4249 = vpow.pop %v4248
        %v4250 = vmul.f32 %v4227, 1.442695
        %v4251 = vpow.pop %v4250
        %v4252 = vmul.f32 %v4228, 1.442695
        %v4253 = vpow.pop %v4252
        %v4254 = vmul.f32 %v4229, 1.442695
        %v4255 = vpow.pop %v4254
        %v4256 = vmul.f32 %v4230, 1.442695
        %v4257 = vpow.pop %v4256
        %v4258 = vmul.f32 %v4231, 1.442695
        %v4259 = vpow.pop %v4258
        %v4260 = vmul.f32 %v4232, 1.442695
        %v4261 = vpow.pop %v4260
        %v4262 = vmul.f32 %v4233, 1.442695
        %v4263 = vpow.pop %v4262
        %v4264 = vmul.f32 %v4234, 1.442695
        %v4265 = vpow.pop %v4264
        %v4266 = vmul.f32 %v4235, 1.442695
        %v4267 = vpow.pop %v4266
        %4268 = vadd.xlane.f32.xlu0 %v4237
        %v4269 = vpop.xlane.xlu0 %4268
        %4270 = vadd.xlane.f32.xlu0 %v4239
        %v4271 = vpop.xlane.xlu0 %4270
        %4272 = vadd.xlane.f32.xlu0 %v4241
        %v4273 = vpop.xlane.xlu0 %4272
        %4274 = vadd.xlane.f32.xlu0 %v4243
        %v4275 = vpop.xlane.xlu0 %4274
        %4276 = vadd.xlane.f32.xlu0 %v4245
        %v4277 = vpop.xlane.xlu0 %4276
        %4278 = vadd.xlane.f32.xlu0 %v4247
        %v4279 = vpop.xlane.xlu0 %4278
        %4280 = vadd.xlane.f32.xlu0 %v4249
        %v4281 = vpop.xlane.xlu0 %4280
        %4282 = vadd.xlane.f32.xlu0 %v4251
        %v4283 = vpop.xlane.xlu0 %4282
        %4284 = vadd.xlane.f32.xlu0 %v4253
        %v4285 = vpop.xlane.xlu0 %4284
        %4286 = vadd.xlane.f32.xlu0 %v4255
        %v4287 = vpop.xlane.xlu0 %4286
        %4288 = vadd.xlane.f32.xlu0 %v4257
        %v4289 = vpop.xlane.xlu0 %4288
        %4290 = vadd.xlane.f32.xlu0 %v4259
        %v4291 = vpop.xlane.xlu0 %4290
        %4292 = vadd.xlane.f32.xlu0 %v4261
        %v4293 = vpop.xlane.xlu0 %4292
        %4294 = vadd.xlane.f32.xlu0 %v4263
        %v4295 = vpop.xlane.xlu0 %4294
        %4296 = vadd.xlane.f32.xlu0 %v4265
        %v4297 = vpop.xlane.xlu0 %4296
        %4298 = vadd.xlane.f32.xlu0 %v4267
        %v4299 = vpop.xlane.xlu0 %4298
        %v4300 = vrcp.pop %v4269
        %v4301 = vrcp.pop %v4271
        %v4302 = vrcp.pop %v4273
        %v4303 = vrcp.pop %v4275
        %v4304 = vrcp.pop %v4277
        %v4305 = vrcp.pop %v4279
        %v4306 = vrcp.pop %v4281
        %v4307 = vrcp.pop %v4283
        %v4308 = vrcp.pop %v4285
        %v4309 = vrcp.pop %v4287
        %v4310 = vrcp.pop %v4289
        %v4311 = vrcp.pop %v4291
        %v4312 = vrcp.pop %v4293
        %v4313 = vrcp.pop %v4295
        %v4314 = vrcp.pop %v4297
        %v4315 = vrcp.pop %v4299
        %v4316 = vpack.c.bf16 %v4239, %v4237
        %v4317 = vpack.c.bf16 %v4243, %v4241
        %v4318 = vpack.c.bf16 %v4247, %v4245
        %v4319 = vpack.c.bf16 %v4251, %v4249
        %v4320 = vpack.c.bf16 %v4255, %v4253
        %v4321 = vpack.c.bf16 %v4259, %v4257
        %v4322 = vpack.c.bf16 %v4263, %v4261
        %v4323 = vpack.c.bf16 %v4267, %v4265
        %4332 = vrot.lane.b32.xlu0 %v3987, 32
        %v4333 = vpop.permute.xlu0 %4332
        %4334 = vrot.lane.b32.xlu0 %v3988, 32
        %v4335 = vpop.permute.xlu0 %4334
        %4336 = vrot.lane.b32.xlu0 %v3989, 32
        %v4337 = vpop.permute.xlu0 %4336
        %4338 = vrot.lane.b32.xlu0 %v3990, 32
        %v4339 = vpop.permute.xlu0 %4338
        %4340 = vrot.lane.b32.xlu0 %v3991, 32
        %v4341 = vpop.permute.xlu0 %4340
        %4342 = vrot.lane.b32.xlu0 %v3992, 32
        %v4343 = vpop.permute.xlu0 %4342
        %4344 = vrot.lane.b32.xlu0 %v3993, 32
        %v4345 = vpop.permute.xlu0 %4344
        %4346 = vrot.lane.b32.xlu0 %v3994, 32
        %v4347 = vpop.permute.xlu0 %4346
        %4356 = vmatprep.subr.bf16.mxu0 0
        %4357 = vmatpush1.bf16.msra.mxu0 %v4333
        %4358 = vmatprep.subr.bf16.mxu0 0
        %4359 = vmatpush1.bf16.msra.mxu0 %v4335
        %4360 = vmatprep.subr.bf16.mxu0 0
        %4361 = vmatpush1.bf16.msra.mxu0 %v4337
        %4362 = vmatprep.subr.bf16.mxu0 0
        %4363 = vmatpush1.bf16.msra.mxu0 %v4339
        %4364 = vmatprep.subr.bf16.mxu0 0
        %4365 = vmatpush1.bf16.msra.mxu0 %v4341
        %4366 = vmatprep.subr.bf16.mxu0 0
        %4367 = vmatpush1.bf16.msra.mxu0 %v4343
        %4368 = vmatprep.subr.bf16.mxu0 0
        %4369 = vmatpush1.bf16.msra.mxu0 %v4345
        %4370 = vmatprep.subr.bf16.mxu0 0
        %4371 = vmatpush1.bf16.msra.mxu0 %v4347
        %4372 = vmatprep.subr.bf16.mxu0 0
        %4373 = vmatpush1.bf16.msra.mxu0 0
        %4374 = vmatprep.subr.bf16.mxu0 0
        %4375 = vmatpush1.bf16.msra.mxu0 0
        %4376 = vmatprep.subr.bf16.mxu0 0
        %4377 = vmatpush1.bf16.msra.mxu0 0
        %4378 = vmatprep.subr.bf16.mxu0 0
        %4379 = vmatpush1.bf16.msra.mxu0 0
        %4380 = vmatprep.subr.bf16.mxu0 0
        %4381 = vmatpush1.bf16.msra.mxu0 0
        %4382 = vmatprep.subr.bf16.mxu0 0
        %4383 = vmatpush1.bf16.msra.mxu0 0
        %4384 = vmatprep.subr.bf16.mxu0 0
        %4385 = vmatpush1.bf16.msra.mxu0 0
        %4386 = vmatprep.subr.bf16.mxu0 0
        %4387 = vmatpush1.bf16.msra.mxu0 0
        %4388 = vmatprep.mubr.bf16.mxu0 0
        %4389 = vmatmul.mubr.bf16.gmra.mrb[0].mxu0 %v4316
        %v4390 = vpop.f32.mrb[0].mxu0
        %v4391 = vadd.f32 0.0, %v4390
        %v4392 = vpop.f32.mrb[0].mxu0
        %v4393 = vpop.f32.mrb[0].mxu0
        %v4394 = vadd.f32 0.0, %v4393
        %v4395 = vpop.f32.mrb[0].mxu0
        %4396 = vmatprep.mubr.bf16.mxu0 0
        %4397 = vmatmul.mubr.bf16.gmra.mrb[0].mxu0 %v4317
        %v4398 = vpop.f32.mrb[0].mxu0
        %v4399 = vadd.f32 0.0, %v4398
        %v4400 = vpop.f32.mrb[0].mxu0
        %v4401 = vpop.f32.mrb[0].mxu0
        %v4402 = vadd.f32 0.0, %v4401
        %v4403 = vpop.f32.mrb[0].mxu0
        %4404 = vmatprep.mubr.bf16.mxu0 0
        %4405 = vmatmul.mubr.bf16.gmra.mrb[0].mxu0 %v4318
        %v4406 = vpop.f32.mrb[0].mxu0
        %v4407 = vadd.f32 0.0, %v4406
        %v4408 = vpop.f32.mrb[0].mxu0
        %v4409 = vpop.f32.mrb[0].mxu0
        %v4410 = vadd.f32 0.0, %v4409
        %v4411 = vpop.f32.mrb[0].mxu0
        %4412 = vmatprep.mubr.bf16.mxu0 0
        %4413 = vmatmul.mubr.bf16.gmra.mrb[0].mxu0 %v4319
        %v4414 = vpop.f32.mrb[0].mxu0
        %v4415 = vadd.f32 0.0, %v4414
        %v4416 = vpop.f32.mrb[0].mxu0
        %v4417 = vpop.f32.mrb[0].mxu0
        %v4418 = vadd.f32 0.0, %v4417
        %v4419 = vpop.f32.mrb[0].mxu0
        %4420 = vmatprep.mubr.bf16.mxu0 0
        %4421 = vmatmul.mubr.bf16.gmra.mrb[0].mxu0 %v4320
        %v4422 = vpop.f32.mrb[0].mxu0
        %v4423 = vadd.f32 0.0, %v4422
        %v4424 = vpop.f32.mrb[0].mxu0
        %v4425 = vpop.f32.mrb[0].mxu0
        %v4426 = vadd.f32 0.0, %v4425
        %v4427 = vpop.f32.mrb[0].mxu0
        %4428 = vmatprep.mubr.bf16.mxu0 0
        %4429 = vmatmul.mubr.bf16.gmra.mrb[0].mxu0 %v4321
        %v4430 = vpop.f32.mrb[0].mxu0
        %v4431 = vadd.f32 0.0, %v4430
        %v4432 = vpop.f32.mrb[0].mxu0
        %v4433 = vpop.f32.mrb[0].mxu0
        %v4434 = vadd.f32 0.0, %v4433
        %v4435 = vpop.f32.mrb[0].mxu0
        %4436 = vmatprep.mubr.bf16.mxu0 0
        %4437 = vmatmul.mubr.bf16.gmra.mrb[0].mxu0 %v4322
        %v4438 = vpop.f32.mrb[0].mxu0
        %v4439 = vadd.f32 0.0, %v4438
        %v4440 = vpop.f32.mrb[0].mxu0
        %v4441 = vpop.f32.mrb[0].mxu0
        %v4442 = vadd.f32 0.0, %v4441
        %v4443 = vpop.f32.mrb[0].mxu0
        %4444 = vmatprep.mubr.bf16.mxu0 0
        %4445 = vmatmul.mubr.bf16.gmra.mrb[0].mxu0 %v4323
        %v4446 = vpop.f32.mrb[0].mxu0
        %v4447 = vadd.f32 0.0, %v4446
        %v4448 = vpop.f32.mrb[0].mxu0
        %v4449 = vpop.f32.mrb[0].mxu0
        %v4450 = vadd.f32 0.0, %v4449
        %v4451 = vpop.f32.mrb[0].mxu0
        %4452 = vdwg.mxu0
        %v4453 = vmul.f32 %v4391, %v4300
        %v4454 = vmul.f32 %v4394, %v4301
        %v4455 = vmul.f32 %v4399, %v4302
        %v4456 = vmul.f32 %v4402, %v4303
        %v4457 = vmul.f32 %v4407, %v4304
        %v4458 = vmul.f32 %v4410, %v4305
        %v4459 = vmul.f32 %v4415, %v4306
        %v4460 = vmul.f32 %v4418, %v4307
        %v4461 = vmul.f32 %v4423, %v4308
        %v4462 = vmul.f32 %v4426, %v4309
        %v4463 = vmul.f32 %v4431, %v4310
        %v4464 = vmul.f32 %v4434, %v4311
        %v4465 = vmul.f32 %v4439, %v4312
        %v4466 = vmul.f32 %v4442, %v4313
        %v4467 = vmul.f32 %v4447, %v4314
        %v4468 = vmul.f32 %v4450, %v4315
        %v4469 = vpack.c.bf16 %v4454, %v4453
        %v4470 = vpack.c.bf16 %v4456, %v4455
        %v4471 = vpack.c.bf16 %v4458, %v4457
        %v4472 = vpack.c.bf16 %v4460, %v4459
        %v4473 = vpack.c.bf16 %v4462, %v4461
        %v4474 = vpack.c.bf16 %v4464, %v4463
        %v4475 = vpack.c.bf16 %v4466, %v4465
        %v4476 = vpack.c.bf16 %v4468, %v4467
        %4485 = vrot.lane.b32.xlu0 %v4469, 96
        %v4486 = vpop.permute.xlu0 %4485
        %4487 = vrot.lane.b32.xlu0 %v4470, 96
        %v4488 = vpop.permute.xlu0 %4487
        %4489 = vrot.lane.b32.xlu0 %v4471, 96
        %v4490 = vpop.permute.xlu0 %4489
        %4491 = vrot.lane.b32.xlu0 %v4472, 96
        %v4492 = vpop.permute.xlu0 %4491
        %4493 = vrot.lane.b32.xlu0 %v4473, 96
        %v4494 = vpop.permute.xlu0 %4493
        %4495 = vrot.lane.b32.xlu0 %v4474, 96
        %v4496 = vpop.permute.xlu0 %4495
        %4497 = vrot.lane.b32.xlu0 %v4475, 96
        %v4498 = vpop.permute.xlu0 %4497
        %4499 = vrot.lane.b32.xlu0 %v4476, 96
        %v4500 = vpop.permute.xlu0 %4499
        %vm4509 = vcmask 917248
        %4510 = vst.msk [vmem:[#allocation3] sm:$0xff] %vm4509, %v4486
        %4511 = vst.msk [vmem:[#allocation3 + $0x8] sm:$0xff] %vm4509, %v4488
        %4512 = vst.msk [vmem:[#allocation3 + $0x10] sm:$0xff] %vm4509, %v4490
        %4513 = vst.msk [vmem:[#allocation3 + $0x18] sm:$0xff] %vm4509, %v4492
        %4514 = vst.msk [vmem:[#allocation3 + $0x20] sm:$0xff] %vm4509, %v4494
        %4515 = vst.msk [vmem:[#allocation3 + $0x28] sm:$0xff] %vm4509, %v4496
        %4516 = vst.msk [vmem:[#allocation3 + $0x30] sm:$0xff] %vm4509, %v4498
        %4517 = vst.msk [vmem:[#allocation3 + $0x38] sm:$0xff] %vm4509, %v4500
        %v4518 = vld [vmem:[#allocation2] sm:$0xff]
        %v4519 = vld [vmem:[#allocation2 + $0x18] sm:$0xff]
        %v4520 = vld [vmem:[#allocation2 + $0x30] sm:$0xff]
        %v4521 = vld [vmem:[#allocation2 + $0x48] sm:$0xff]
        %v4522 = vld [vmem:[#allocation2 + $0x60] sm:$0xff]
        %v4523 = vld [vmem:[#allocation2 + $0x78] sm:$0xff]
        %v4524 = vld [vmem:[#allocation2 + $0x90] sm:$0xff]
        %v4525 = vld [vmem:[#allocation2 + $0xa8] sm:$0xff]
        %v4526 = vld [vmem:[#allocation2 + $0x8] sm:$0xff]
        %v4527 = vld [vmem:[#allocation2 + $0x20] sm:$0xff]
        %v4528 = vld [vmem:[#allocation2 + $0x38] sm:$0xff]
        %v4529 = vld [vmem:[#allocation2 + $0x50] sm:$0xff]
        %v4530 = vld [vmem:[#allocation2 + $0x68] sm:$0xff]
        %v4531 = vld [vmem:[#allocation2 + $0x80] sm:$0xff]
        %v4532 = vld [vmem:[#allocation2 + $0x98] sm:$0xff]
        %v4533 = vld [vmem:[#allocation2 + $0xb0] sm:$0xff]
        %v4534 = vld [vmem:[#allocation2 + $0x10] sm:$0xff]
        %v4535 = vld [vmem:[#allocation2 + $0x28] sm:$0xff]
        %v4536 = vld [vmem:[#allocation2 + $0x40] sm:$0xff]
        %v4537 = vld [vmem:[#allocation2 + $0x58] sm:$0xff]
        %v4538 = vld [vmem:[#allocation2 + $0x70] sm:$0xff]
        %v4539 = vld [vmem:[#allocation2 + $0x88] sm:$0xff]
        %v4540 = vld [vmem:[#allocation2 + $0xa0] sm:$0xff]
        %v4541 = vld [vmem:[#allocation2 + $0xb8] sm:$0xff]
        %4550 = vrot.lane.b32.xlu0 %v4518, 16
        %v4551 = vpop.permute.xlu0 %4550
        %4552 = vrot.lane.b32.xlu0 %v4519, 16
        %v4553 = vpop.permute.xlu0 %4552
        %4554 = vrot.lane.b32.xlu0 %v4520, 16
        %v4555 = vpop.permute.xlu0 %4554
        %4556 = vrot.lane.b32.xlu0 %v4521, 16
        %v4557 = vpop.permute.xlu0 %4556
        %4558 = vrot.lane.b32.xlu0 %v4522, 16
        %v4559 = vpop.permute.xlu0 %4558
        %4560 = vrot.lane.b32.xlu0 %v4523, 16
        %v4561 = vpop.permute.xlu0 %4560
        %4562 = vrot.lane.b32.xlu0 %v4524, 16
        %v4563 = vpop.permute.xlu0 %4562
        %4564 = vrot.lane.b32.xlu0 %v4525, 16
        %v4565 = vpop.permute.xlu0 %4564
        %4574 = vrot.lane.b32.xlu0 %v4526, 16
        %v4575 = vpop.permute.xlu0 %4574
        %4576 = vrot.lane.b32.xlu0 %v4527, 16
        %v4577 = vpop.permute.xlu0 %4576
        %4578 = vrot.lane.b32.xlu0 %v4528, 16
        %v4579 = vpop.permute.xlu0 %4578
        %4580 = vrot.lane.b32.xlu0 %v4529, 16
        %v4581 = vpop.permute.xlu0 %4580
        %4582 = vrot.lane.b32.xlu0 %v4530, 16
        %v4583 = vpop.permute.xlu0 %4582
        %4584 = vrot.lane.b32.xlu0 %v4531, 16
        %v4585 = vpop.permute.xlu0 %4584
        %4586 = vrot.lane.b32.xlu0 %v4532, 16
        %v4587 = vpop.permute.xlu0 %4586
        %4588 = vrot.lane.b32.xlu0 %v4533, 16
        %v4589 = vpop.permute.xlu0 %4588
        %v4591 = vsel %vm825, %v4551, 0
        %v4594 = vsel %vm825, %v4553, 0
        %v4597 = vsel %vm825, %v4555, 0
        %v4600 = vsel %vm825, %v4557, 0
        %v4603 = vsel %vm825, %v4559, 0
        %v4606 = vsel %vm825, %v4561, 0
        %v4609 = vsel %vm825, %v4563, 0
        %v4612 = vsel %vm825, %v4565, 0
        %v4615 = vsel %vm825, %v4575, 0
        %v4618 = vsel %vm825, %v4577, 0
        %v4621 = vsel %vm825, %v4579, 0
        %v4624 = vsel %vm825, %v4581, 0
        %v4627 = vsel %vm825, %v4583, 0
        %v4630 = vsel %vm825, %v4585, 0
        %v4633 = vsel %vm825, %v4587, 0
        %v4636 = vsel %vm825, %v4589, 0
        %4638 = vmatprep.subr.bf16.mxu0 0
        %4639 = vmatpush1.bf16.xpose.msra.mxu0 %v4615
        %4640 = vmatprep.subr.bf16.mxu0 0
        %4641 = vmatpush1.bf16.xpose.msra.mxu0 %v4618
        %4642 = vmatprep.subr.bf16.mxu0 0
        %4643 = vmatpush1.bf16.xpose.msra.mxu0 %v4621
        %4644 = vmatprep.subr.bf16.mxu0 0
        %4645 = vmatpush1.bf16.xpose.msra.mxu0 %v4624
        %4646 = vmatprep.subr.bf16.mxu0 0
        %4647 = vmatpush1.bf16.xpose.msra.mxu0 %v4627
        %4648 = vmatprep.subr.bf16.mxu0 0
        %4649 = vmatpush1.bf16.xpose.msra.mxu0 %v4630
        %4650 = vmatprep.subr.bf16.mxu0 0
        %4651 = vmatpush1.bf16.xpose.msra.mxu0 %v4633
        %4652 = vmatprep.subr.bf16.mxu0 0
        %4653 = vmatpush1.bf16.xpose.msra.mxu0 %v4636
        %4654 = vmatprep.subr.bf16.mxu0 0
        %4655 = vmatpush1.bf16.xpose.msra.mxu0 0
        %4656 = vmatprep.subr.bf16.mxu0 0
        %4657 = vmatpush1.bf16.xpose.msra.mxu0 0
        %4658 = vmatprep.subr.bf16.mxu0 0
        %4659 = vmatpush1.bf16.xpose.msra.mxu0 0
        %4660 = vmatprep.subr.bf16.mxu0 0
        %4661 = vmatpush1.bf16.xpose.msra.mxu0 0
        %4662 = vmatprep.subr.bf16.mxu0 0
        %4663 = vmatpush1.bf16.xpose.msra.mxu0 0
        %4664 = vmatprep.subr.bf16.mxu0 0
        %4665 = vmatpush1.bf16.xpose.msra.mxu0 0
        %4666 = vmatprep.subr.bf16.mxu0 0
        %4667 = vmatpush1.bf16.xpose.msra.mxu0 0
        %4668 = vmatprep.subr.bf16.mxu0 0
        %4669 = vmatpush1.bf16.xpose.msra.mxu0 0
        %4670 = vmatprep.mubr.bf16.mxu0 0
        %4671 = vmatmul.mubr.bf16.gmra.mrb[0].mxu0 %v4591
        %v4672 = vpop.f32.mrb[0].mxu0
        %v4673 = vadd.f32 0.0, %v4672
        %v4674 = vpop.f32.mrb[0].mxu0
        %v4675 = vpop.f32.mrb[0].mxu0
        %v4676 = vadd.f32 0.0, %v4675
        %v4677 = vpop.f32.mrb[0].mxu0
        %4678 = vmatprep.mubr.bf16.mxu0 0
        %4679 = vmatmul.mubr.bf16.gmra.mrb[0].mxu0 %v4594
        %v4680 = vpop.f32.mrb[0].mxu0
        %v4681 = vadd.f32 0.0, %v4680
        %v4682 = vpop.f32.mrb[0].mxu0
        %v4683 = vpop.f32.mrb[0].mxu0
        %v4684 = vadd.f32 0.0, %v4683
        %v4685 = vpop.f32.mrb[0].mxu0
        %4686 = vmatprep.mubr.bf16.mxu0 0
        %4687 = vmatmul.mubr.bf16.gmra.mrb[0].mxu0 %v4597
        %v4688 = vpop.f32.mrb[0].mxu0
        %v4689 = vadd.f32 0.0, %v4688
        %v4690 = vpop.f32.mrb[0].mxu0
        %v4691 = vpop.f32.mrb[0].mxu0
        %v4692 = vadd.f32 0.0, %v4691
        %v4693 = vpop.f32.mrb[0].mxu0
        %4694 = vmatprep.mubr.bf16.mxu0 0
        %4695 = vmatmul.mubr.bf16.gmra.mrb[0].mxu0 %v4600
        %v4696 = vpop.f32.mrb[0].mxu0
        %v4697 = vadd.f32 0.0, %v4696
        %v4698 = vpop.f32.mrb[0].mxu0
        %v4699 = vpop.f32.mrb[0].mxu0
        %v4700 = vadd.f32 0.0, %v4699
        %v4701 = vpop.f32.mrb[0].mxu0
        %4702 = vmatprep.mubr.bf16.mxu0 0
        %4703 = vmatmul.mubr.bf16.gmra.mrb[0].mxu0 %v4603
        %v4704 = vpop.f32.mrb[0].mxu0
        %v4705 = vadd.f32 0.0, %v4704
        %v4706 = vpop.f32.mrb[0].mxu0
        %v4707 = vpop.f32.mrb[0].mxu0
        %v4708 = vadd.f32 0.0, %v4707
        %v4709 = vpop.f32.mrb[0].mxu0
        %4710 = vmatprep.mubr.bf16.mxu0 0
        %4711 = vmatmul.mubr.bf16.gmra.mrb[0].mxu0 %v4606
        %v4712 = vpop.f32.mrb[0].mxu0
        %v4713 = vadd.f32 0.0, %v4712
        %v4714 = vpop.f32.mrb[0].mxu0
        %v4715 = vpop.f32.mrb[0].mxu0
        %v4716 = vadd.f32 0.0, %v4715
        %v4717 = vpop.f32.mrb[0].mxu0
        %4718 = vmatprep.mubr.bf16.mxu0 0
        %4719 = vmatmul.mubr.bf16.gmra.mrb[0].mxu0 %v4609
        %v4720 = vpop.f32.mrb[0].mxu0
        %v4721 = vadd.f32 0.0, %v4720
        %v4722 = vpop.f32.mrb[0].mxu0
        %v4723 = vpop.f32.mrb[0].mxu0
        %v4724 = vadd.f32 0.0, %v4723
        %v4725 = vpop.f32.mrb[0].mxu0
        %4726 = vmatprep.mubr.bf16.mxu0 0
        %4727 = vmatmul.mubr.bf16.gmra.mrb[0].mxu0 %v4612
        %v4728 = vpop.f32.mrb[0].mxu0
        %v4729 = vadd.f32 0.0, %v4728
        %v4730 = vpop.f32.mrb[0].mxu0
        %v4731 = vpop.f32.mrb[0].mxu0
        %v4732 = vadd.f32 0.0, %v4731
        %v4733 = vpop.f32.mrb[0].mxu0
        %4734 = vdwg.mxu0
        %4735 = vmax.xlane.f32.xlu0 %v4673
        %v4736 = vpop.xlane.xlu0 %4735
        %4737 = vmax.xlane.f32.xlu0 %v4676
        %v4738 = vpop.xlane.xlu0 %4737
        %4739 = vmax.xlane.f32.xlu0 %v4681
        %v4740 = vpop.xlane.xlu0 %4739
        %4741 = vmax.xlane.f32.xlu0 %v4684
        %v4742 = vpop.xlane.xlu0 %4741
        %4743 = vmax.xlane.f32.xlu0 %v4689
        %v4744 = vpop.xlane.xlu0 %4743
        %4745 = vmax.xlane.f32.xlu0 %v4692
        %v4746 = vpop.xlane.xlu0 %4745
        %4747 = vmax.xlane.f32.xlu0 %v4697
        %v4748 = vpop.xlane.xlu0 %4747
        %4749 = vmax.xlane.f32.xlu0 %v4700
        %v4750 = vpop.xlane.xlu0 %4749
        %4751 = vmax.xlane.f32.xlu0 %v4705
        %v4752 = vpop.xlane.xlu0 %4751
        %4753 = vmax.xlane.f32.xlu0 %v4708
        %v4754 = vpop.xlane.xlu0 %4753
        %4755 = vmax.xlane.f32.xlu0 %v4713
        %v4756 = vpop.xlane.xlu0 %4755
        %4757 = vmax.xlane.f32.xlu0 %v4716
        %v4758 = vpop.xlane.xlu0 %4757
        %4759 = vmax.xlane.f32.xlu0 %v4721
        %v4760 = vpop.xlane.xlu0 %4759
        %4761 = vmax.xlane.f32.xlu0 %v4724
        %v4762 = vpop.xlane.xlu0 %4761
        %4763 = vmax.xlane.f32.xlu0 %v4729
        %v4764 = vpop.xlane.xlu0 %4763
        %4765 = vmax.xlane.f32.xlu0 %v4732
        %v4766 = vpop.xlane.xlu0 %4765
        %v4767 = vsub.f32 %v4673, %v4736
        %v4768 = vsub.f32 %v4676, %v4738
        %v4769 = vsub.f32 %v4681, %v4740
        %v4770 = vsub.f32 %v4684, %v4742
        %v4771 = vsub.f32 %v4689, %v4744
        %v4772 = vsub.f32 %v4692, %v4746
        %v4773 = vsub.f32 %v4697, %v4748
        %v4774 = vsub.f32 %v4700, %v4750
        %v4775 = vsub.f32 %v4705, %v4752
        %v4776 = vsub.f32 %v4708, %v4754
        %v4777 = vsub.f32 %v4713, %v4756
        %v4778 = vsub.f32 %v4716, %v4758
        %v4779 = vsub.f32 %v4721, %v4760
        %v4780 = vsub.f32 %v4724, %v4762
        %v4781 = vsub.f32 %v4729, %v4764
        %v4782 = vsub.f32 %v4732, %v4766
        %v4783 = vmul.f32 %v4767, 1.442695
        %v4784 = vpow.pop %v4783
        %v4785 = vmul.f32 %v4768, 1.442695
        %v4786 = vpow.pop %v4785
        %v4787 = vmul.f32 %v4769, 1.442695
        %v4788 = vpow.pop %v4787
        %v4789 = vmul.f32 %v4770, 1.442695
        %v4790 = vpow.pop %v4789
        %v4791 = vmul.f32 %v4771, 1.442695
        %v4792 = vpow.pop %v4791
        %v4793 = vmul.f32 %v4772, 1.442695
        %v4794 = vpow.pop %v4793
        %v4795 = vmul.f32 %v4773, 1.442695
        %v4796 = vpow.pop %v4795
        %v4797 = vmul.f32 %v4774, 1.442695
        %v4798 = vpow.pop %v4797
        %v4799 = vmul.f32 %v4775, 1.442695
        %v4800 = vpow.pop %v4799
        %v4801 = vmul.f32 %v4776, 1.442695
        %v4802 = vpow.pop %v4801
        %v4803 = vmul.f32 %v4777, 1.442695
        %v4804 = vpow.pop %v4803
        %v4805 = vmul.f32 %v4778, 1.442695
        %v4806 = vpow.pop %v4805
        %v4807 = vmul.f32 %v4779, 1.442695
        %v4808 = vpow.pop %v4807
        %v4809 = vmul.f32 %v4780, 1.442695
        %v4810 = vpow.pop %v4809
        %v4811 = vmul.f32 %v4781, 1.442695
        %v4812 = vpow.pop %v4811
        %v4813 = vmul.f32 %v4782, 1.442695
        %v4814 = vpow.pop %v4813
        %4815 = vadd.xlane.f32.xlu0 %v4784
        %v4816 = vpop.xlane.xlu0 %4815
        %4817 = vadd.xlane.f32.xlu0 %v4786
        %v4818 = vpop.xlane.xlu0 %4817
        %4819 = vadd.xlane.f32.xlu0 %v4788
        %v4820 = vpop.xlane.xlu0 %4819
        %4821 = vadd.xlane.f32.xlu0 %v4790
        %v4822 = vpop.xlane.xlu0 %4821
        %4823 = vadd.xlane.f32.xlu0 %v4792
        %v4824 = vpop.xlane.xlu0 %4823
        %4825 = vadd.xlane.f32.xlu0 %v4794
        %v4826 = vpop.xlane.xlu0 %4825
        %4827 = vadd.xlane.f32.xlu0 %v4796
        %v4828 = vpop.xlane.xlu0 %4827
        %4829 = vadd.xlane.f32.xlu0 %v4798
        %v4830 = vpop.xlane.xlu0 %4829
        %4831 = vadd.xlane.f32.xlu0 %v4800
        %v4832 = vpop.xlane.xlu0 %4831
        %4833 = vadd.xlane.f32.xlu0 %v4802
        %v4834 = vpop.xlane.xlu0 %4833
        %4835 = vadd.xlane.f32.xlu0 %v4804
        %v4836 = vpop.xlane.xlu0 %4835
        %4837 = vadd.xlane.f32.xlu0 %v4806
        %v4838 = vpop.xlane.xlu0 %4837
        %4839 = vadd.xlane.f32.xlu0 %v4808
        %v4840 = vpop.xlane.xlu0 %4839
        %4841 = vadd.xlane.f32.xlu0 %v4810
        %v4842 = vpop.xlane.xlu0 %4841
        %4843 = vadd.xlane.f32.xlu0 %v4812
        %v4844 = vpop.xlane.xlu0 %4843
        %4845 = vadd.xlane.f32.xlu0 %v4814
        %v4846 = vpop.xlane.xlu0 %4845
        %v4847 = vrcp.pop %v4816
        %v4848 = vrcp.pop %v4818
        %v4849 = vrcp.pop %v4820
        %v4850 = vrcp.pop %v4822
        %v4851 = vrcp.pop %v4824
        %v4852 = vrcp.pop %v4826
        %v4853 = vrcp.pop %v4828
        %v4854 = vrcp.pop %v4830
        %v4855 = vrcp.pop %v4832
        %v4856 = vrcp.pop %v4834
        %v4857 = vrcp.pop %v4836
        %v4858 = vrcp.pop %v4838
        %v4859 = vrcp.pop %v4840
        %v4860 = vrcp.pop %v4842
        %v4861 = vrcp.pop %v4844
        %v4862 = vrcp.pop %v4846
        %v4863 = vpack.c.bf16 %v4786, %v4784
        %v4864 = vpack.c.bf16 %v4790, %v4788
        %v4865 = vpack.c.bf16 %v4794, %v4792
        %v4866 = vpack.c.bf16 %v4798, %v4796
        %v4867 = vpack.c.bf16 %v4802, %v4800
        %v4868 = vpack.c.bf16 %v4806, %v4804
        %v4869 = vpack.c.bf16 %v4810, %v4808
        %v4870 = vpack.c.bf16 %v4814, %v4812
        %4879 = vrot.lane.b32.xlu0 %v4534, 16
        %v4880 = vpop.permute.xlu0 %4879
        %4881 = vrot.lane.b32.xlu0 %v4535, 16
        %v4882 = vpop.permute.xlu0 %4881
        %4883 = vrot.lane.b32.xlu0 %v4536, 16
        %v4884 = vpop.permute.xlu0 %4883
        %4885 = vrot.lane.b32.xlu0 %v4537, 16
        %v4886 = vpop.permute.xlu0 %4885
        %4887 = vrot.lane.b32.xlu0 %v4538, 16
        %v4888 = vpop.permute.xlu0 %4887
        %4889 = vrot.lane.b32.xlu0 %v4539, 16
        %v4890 = vpop.permute.xlu0 %4889
        %4891 = vrot.lane.b32.xlu0 %v4540, 16
        %v4892 = vpop.permute.xlu0 %4891
        %4893 = vrot.lane.b32.xlu0 %v4541, 16
        %v4894 = vpop.permute.xlu0 %4893
        %4903 = vmatprep.subr.bf16.mxu0 0
        %4904 = vmatpush1.bf16.msra.mxu0 %v4880
        %4905 = vmatprep.subr.bf16.mxu0 0
        %4906 = vmatpush1.bf16.msra.mxu0 %v4882
        %4907 = vmatprep.subr.bf16.mxu0 0
        %4908 = vmatpush1.bf16.msra.mxu0 %v4884
        %4909 = vmatprep.subr.bf16.mxu0 0
        %4910 = vmatpush1.bf16.msra.mxu0 %v4886
        %4911 = vmatprep.subr.bf16.mxu0 0
        %4912 = vmatpush1.bf16.msra.mxu0 %v4888
        %4913 = vmatprep.subr.bf16.mxu0 0
        %4914 = vmatpush1.bf16.msra.mxu0 %v4890
        %4915 = vmatprep.subr.bf16.mxu0 0
        %4916 = vmatpush1.bf16.msra.mxu0 %v4892
        %4917 = vmatprep.subr.bf16.mxu0 0
        %4918 = vmatpush1.bf16.msra.mxu0 %v4894
        %4919 = vmatprep.subr.bf16.mxu0 0
        %4920 = vmatpush1.bf16.msra.mxu0 0
        %4921 = vmatprep.subr.bf16.mxu0 0
        %4922 = vmatpush1.bf16.msra.mxu0 0
        %4923 = vmatprep.subr.bf16.mxu0 0
        %4924 = vmatpush1.bf16.msra.mxu0 0
        %4925 = vmatprep.subr.bf16.mxu0 0
        %4926 = vmatpush1.bf16.msra.mxu0 0
        %4927 = vmatprep.subr.bf16.mxu0 0
        %4928 = vmatpush1.bf16.msra.mxu0 0
        %4929 = vmatprep.subr.bf16.mxu0 0
        %4930 = vmatpush1.bf16.msra.mxu0 0
        %4931 = vmatprep.subr.bf16.mxu0 0
        %4932 = vmatpush1.bf16.msra.mxu0 0
        %4933 = vmatprep.subr.bf16.mxu0 0
        %4934 = vmatpush1.bf16.msra.mxu0 0
        %4935 = vmatprep.mubr.bf16.mxu0 0
        %4936 = vmatmul.mubr.bf16.gmra.mrb[0].mxu0 %v4863
        %v4937 = vpop.f32.mrb[0].mxu0
        %v4938 = vadd.f32 0.0, %v4937
        %v4939 = vpop.f32.mrb[0].mxu0
        %v4940 = vpop.f32.mrb[0].mxu0
        %v4941 = vadd.f32 0.0, %v4940
        %v4942 = vpop.f32.mrb[0].mxu0
        %4943 = vmatprep.mubr.bf16.mxu0 0
        %4944 = vmatmul.mubr.bf16.gmra.mrb[0].mxu0 %v4864
        %v4945 = vpop.f32.mrb[0].mxu0
        %v4946 = vadd.f32 0.0, %v4945
        %v4947 = vpop.f32.mrb[0].mxu0
        %v4948 = vpop.f32.mrb[0].mxu0
        %v4949 = vadd.f32 0.0, %v4948
        %v4950 = vpop.f32.mrb[0].mxu0
        %4951 = vmatprep.mubr.bf16.mxu0 0
        %4952 = vmatmul.mubr.bf16.gmra.mrb[0].mxu0 %v4865
        %v4953 = vpop.f32.mrb[0].mxu0
        %v4954 = vadd.f32 0.0, %v4953
        %v4955 = vpop.f32.mrb[0].mxu0
        %v4956 = vpop.f32.mrb[0].mxu0
        %v4957 = vadd.f32 0.0, %v4956
        %v4958 = vpop.f32.mrb[0].mxu0
        %4959 = vmatprep.mubr.bf16.mxu0 0
        %4960 = vmatmul.mubr.bf16.gmra.mrb[0].mxu0 %v4866
        %v4961 = vpop.f32.mrb[0].mxu0
        %v4962 = vadd.f32 0.0, %v4961
        %v4963 = vpop.f32.mrb[0].mxu0
        %v4964 = vpop.f32.mrb[0].mxu0
        %v4965 = vadd.f32 0.0, %v4964
        %v4966 = vpop.f32.mrb[0].mxu0
        %4967 = vmatprep.mubr.bf16.mxu0 0
        %4968 = vmatmul.mubr.bf16.gmra.mrb[0].mxu0 %v4867
        %v4969 = vpop.f32.mrb[0].mxu0
        %v4970 = vadd.f32 0.0, %v4969
        %v4971 = vpop.f32.mrb[0].mxu0
        %v4972 = vpop.f32.mrb[0].mxu0
        %v4973 = vadd.f32 0.0, %v4972
        %v4974 = vpop.f32.mrb[0].mxu0
        %4975 = vmatprep.mubr.bf16.mxu0 0
        %4976 = vmatmul.mubr.bf16.gmra.mrb[0].mxu0 %v4868
        %v4977 = vpop.f32.mrb[0].mxu0
        %v4978 = vadd.f32 0.0, %v4977
        %v4979 = vpop.f32.mrb[0].mxu0
        %v4980 = vpop.f32.mrb[0].mxu0
        %v4981 = vadd.f32 0.0, %v4980
        %v4982 = vpop.f32.mrb[0].mxu0
        %4983 = vmatprep.mubr.bf16.mxu0 0
        %4984 = vmatmul.mubr.bf16.gmra.mrb[0].mxu0 %v4869
        %v4985 = vpop.f32.mrb[0].mxu0
        %v4986 = vadd.f32 0.0, %v4985
        %v4987 = vpop.f32.mrb[0].mxu0
        %v4988 = vpop.f32.mrb[0].mxu0
        %v4989 = vadd.f32 0.0, %v4988
        %v4990 = vpop.f32.mrb[0].mxu0
        %4991 = vmatprep.mubr.bf16.mxu0 0
        %4992 = vmatmul.mubr.bf16.gmra.mrb[0].mxu0 %v4870
        %v4993 = vpop.f32.mrb[0].mxu0
        %v4994 = vadd.f32 0.0, %v4993
        %v4995 = vpop.f32.mrb[0].mxu0
        %v4996 = vpop.f32.mrb[0].mxu0
        %v4997 = vadd.f32 0.0, %v4996
        %v4998 = vpop.f32.mrb[0].mxu0
        %4999 = vdwg.mxu0
        %v5000 = vmul.f32 %v4938, %v4847
        %v5001 = vmul.f32 %v4941, %v4848
        %v5002 = vmul.f32 %v4946, %v4849
        %v5003 = vmul.f32 %v4949, %v4850
        %v5004 = vmul.f32 %v4954, %v4851
        %v5005 = vmul.f32 %v4957, %v4852
        %v5006 = vmul.f32 %v4962, %v4853
        %v5007 = vmul.f32 %v4965, %v4854
        %v5008 = vmul.f32 %v4970, %v4855
        %v5009 = vmul.f32 %v4973, %v4856
        %v5010 = vmul.f32 %v4978, %v4857
        %v5011 = vmul.f32 %v4981, %v4858
        %v5012 = vmul.f32 %v4986, %v4859
        %v5013 = vmul.f32 %v4989, %v4860
        %v5014 = vmul.f32 %v4994, %v4861
        %v5015 = vmul.f32 %v4997, %v4862
        %v5016 = vpack.c.bf16 %v5001, %v5000
        %v5017 = vpack.c.bf16 %v5003, %v5002
        %v5018 = vpack.c.bf16 %v5005, %v5004
        %v5019 = vpack.c.bf16 %v5007, %v5006
        %v5020 = vpack.c.bf16 %v5009, %v5008
        %v5021 = vpack.c.bf16 %v5011, %v5010
        %v5022 = vpack.c.bf16 %v5013, %v5012
        %v5023 = vpack.c.bf16 %v5015, %v5014
        %5032 = vrot.lane.b32.xlu0 %v5016, 112
        %v5033 = vpop.permute.xlu0 %5032
        %5034 = vrot.lane.b32.xlu0 %v5017, 112
        %v5035 = vpop.permute.xlu0 %5034
        %5036 = vrot.lane.b32.xlu0 %v5018, 112
        %v5037 = vpop.permute.xlu0 %5036
        %5038 = vrot.lane.b32.xlu0 %v5019, 112
        %v5039 = vpop.permute.xlu0 %5038
        %5040 = vrot.lane.b32.xlu0 %v5020, 112
        %v5041 = vpop.permute.xlu0 %5040
        %5042 = vrot.lane.b32.xlu0 %v5021, 112
        %v5043 = vpop.permute.xlu0 %5042
        %5044 = vrot.lane.b32.xlu0 %v5022, 112
        %v5045 = vpop.permute.xlu0 %5044
        %5046 = vrot.lane.b32.xlu0 %v5023, 112
        %v5047 = vpop.permute.xlu0 %5046
        %vm5056 = vcmask 1048448
        %5057 = vst.msk [vmem:[#allocation3] sm:$0xff] %vm5056, %v5033
        %5058 = vst.msk [vmem:[#allocation3 + $0x8] sm:$0xff] %vm5056, %v5035
        %5059 = vst.msk [vmem:[#allocation3 + $0x10] sm:$0xff] %vm5056, %v5037
        %5060 = vst.msk [vmem:[#allocation3 + $0x18] sm:$0xff] %vm5056, %v5039
        %5061 = vst.msk [vmem:[#allocation3 + $0x20] sm:$0xff] %vm5056, %v5041
        %5062 = vst.msk [vmem:[#allocation3 + $0x28] sm:$0xff] %vm5056, %v5043
        %5063 = vst.msk [vmem:[#allocation3 + $0x30] sm:$0xff] %vm5056, %v5045
        %5064 = vst.msk [vmem:[#allocation3 + $0x38] sm:$0xff] %vm5056, %v5047
        %v5065 = vld [vmem:[#allocation3] sm:$0xff]
        %v5066 = vld [vmem:[#allocation3 + $0x8] sm:$0xff]
        %v5067 = vld [vmem:[#allocation3 + $0x10] sm:$0xff]
        %v5068 = vld [vmem:[#allocation3 + $0x18] sm:$0xff]
        %v5069 = vld [vmem:[#allocation3 + $0x20] sm:$0xff]
        %v5070 = vld [vmem:[#allocation3 + $0x28] sm:$0xff]
        %v5071 = vld [vmem:[#allocation3 + $0x30] sm:$0xff]
        %v5072 = vld [vmem:[#allocation3 + $0x38] sm:$0xff]
        %v5073 = vld [vmem:[#allocation9] sm:$0xf]
        %v5074 = vld [vmem:[#allocation9 + $0x4] sm:$0xf]
        %v5075 = vld [vmem:[#allocation9 + $0x8] sm:$0xf]
        %v5076 = vld [vmem:[#allocation9 + $0xc] sm:$0xf]
        %v5077 = vld [vmem:[#allocation9 + $0x10] sm:$0xf]
        %v5078 = vld [vmem:[#allocation9 + $0x14] sm:$0xf]
        %v5079 = vld [vmem:[#allocation9 + $0x18] sm:$0xf]
        %v5080 = vld [vmem:[#allocation9 + $0x1c] sm:$0xf]
        %v5081 = vld [vmem:[#allocation9 + $0x20] sm:$0xf]
        %v5082 = vld [vmem:[#allocation9 + $0x24] sm:$0xf]
        %v5083 = vld [vmem:[#allocation9 + $0x28] sm:$0xf]
        %v5084 = vld [vmem:[#allocation9 + $0x2c] sm:$0xf]
        %v5085 = vld [vmem:[#allocation9 + $0x30] sm:$0xf]
        %v5086 = vld [vmem:[#allocation9 + $0x34] sm:$0xf]
        %v5087 = vld [vmem:[#allocation9 + $0x38] sm:$0xf]
        %v5088 = vld [vmem:[#allocation9 + $0x3c] sm:$0xf]
        %v5089 = vld [vmem:[%s3] sm:$0x1]
        %v5091 = vlaneseq
        %v5092 = vshrl.u32 %v5091, 7
        %v5093 = vsub.s32 0, %v5092
        %v5094 = vrot.slane %v5089, %v5093
        %v5112 = vunpack.c.l.b16 %v5073
        %v5113 = vunpack.c.l.b16 %v5074
        %v5114 = vunpack.c.l.b16 %v5075
        %v5115 = vunpack.c.l.b16 %v5076
        %v5116 = vunpack.c.l.b16 %v5077
        %v5117 = vunpack.c.l.b16 %v5078
        %v5118 = vunpack.c.l.b16 %v5079
        %v5119 = vunpack.c.l.b16 %v5080
        %v5120 = vunpack.c.l.b16 %v5081
        %v5121 = vunpack.c.l.b16 %v5082
        %v5122 = vunpack.c.l.b16 %v5083
        %v5123 = vunpack.c.l.b16 %v5084
        %v5124 = vunpack.c.l.b16 %v5085
        %v5125 = vunpack.c.l.b16 %v5086
        %v5126 = vunpack.c.l.b16 %v5087
        %v5127 = vunpack.c.l.b16 %v5088
        %v5128 = vpack.c.b16 %v5113, %v5112
        %v5129 = vpack.c.b16 %v5115, %v5114
        %v5130 = vpack.c.b16 %v5117, %v5116
        %v5131 = vpack.c.b16 %v5119, %v5118
        %v5132 = vpack.c.b16 %v5121, %v5120
        %v5133 = vpack.c.b16 %v5123, %v5122
        %v5134 = vpack.c.b16 %v5125, %v5124
        %v5135 = vpack.c.b16 %v5127, %v5126
        %5144 = vmatprep.subr.bf16.mxu0 0
        %5145 = vmatpush1.bf16.xpose.msra.mxu0 %v5128
        %5146 = vmatprep.subr.bf16.mxu0 0
        %5147 = vmatpush1.bf16.xpose.msra.mxu0 %v5129
        %5148 = vmatprep.subr.bf16.mxu0 0
        %5149 = vmatpush1.bf16.xpose.msra.mxu0 %v5130
        %5150 = vmatprep.subr.bf16.mxu0 0
        %5151 = vmatpush1.bf16.xpose.msra.mxu0 %v5131
        %5152 = vmatprep.subr.bf16.mxu0 0
        %5153 = vmatpush1.bf16.xpose.msra.mxu0 %v5132
        %5154 = vmatprep.subr.bf16.mxu0 0
        %5155 = vmatpush1.bf16.xpose.msra.mxu0 %v5133
        %5156 = vmatprep.subr.bf16.mxu0 0
        %5157 = vmatpush1.bf16.xpose.msra.mxu0 %v5134
        %5158 = vmatprep.subr.bf16.mxu0 0
        %5159 = vmatpush1.bf16.xpose.msra.mxu0 %v5135
        %5160 = vmatprep.subr.bf16.mxu0 0
        %5161 = vmatpush1.bf16.xpose.msra.mxu0 0
        %5162 = vmatprep.subr.bf16.mxu0 0
        %5163 = vmatpush1.bf16.xpose.msra.mxu0 0
        %5164 = vmatprep.subr.bf16.mxu0 0
        %5165 = vmatpush1.bf16.xpose.msra.mxu0 0
        %5166 = vmatprep.subr.bf16.mxu0 0
        %5167 = vmatpush1.bf16.xpose.msra.mxu0 0
        %5168 = vmatprep.subr.bf16.mxu0 0
        %5169 = vmatpush1.bf16.xpose.msra.mxu0 0
        %5170 = vmatprep.subr.bf16.mxu0 0
        %5171 = vmatpush1.bf16.xpose.msra.mxu0 0
        %5172 = vmatprep.subr.bf16.mxu0 0
        %5173 = vmatpush1.bf16.xpose.msra.mxu0 0
        %5174 = vmatprep.subr.bf16.mxu0 0
        %5175 = vmatpush1.bf16.xpose.msra.mxu0 0
        %5176 = vmatprep.mubr.bf16.mxu0 0
        %5177 = vmatmul.mubr.bf16.gmra.mrb[0].mxu0 %v5065
        %v5178 = vpop.f32.mrb[0].mxu0
        %v5179 = vadd.f32 %v5094, %v5178
        %v5180 = vpop.f32.mrb[0].mxu0
        %v5181 = vpop.f32.mrb[0].mxu0
        %v5182 = vadd.f32 %v5094, %v5181
        %v5183 = vpop.f32.mrb[0].mxu0
        %5184 = vmatprep.mubr.bf16.mxu0 0
        %5185 = vmatmul.mubr.bf16.gmra.mrb[0].mxu0 %v5066
        %v5186 = vpop.f32.mrb[0].mxu0
        %v5187 = vadd.f32 %v5094, %v5186
        %v5188 = vpop.f32.mrb[0].mxu0
        %v5189 = vpop.f32.mrb[0].mxu0
        %v5190 = vadd.f32 %v5094, %v5189
        %v5191 = vpop.f32.mrb[0].mxu0
        %5192 = vmatprep.mubr.bf16.mxu0 0
        %5193 = vmatmul.mubr.bf16.gmra.mrb[0].mxu0 %v5067
        %v5194 = vpop.f32.mrb[0].mxu0
        %v5195 = vadd.f32 %v5094, %v5194
        %v5196 = vpop.f32.mrb[0].mxu0
        %v5197 = vpop.f32.mrb[0].mxu0
        %v5198 = vadd.f32 %v5094, %v5197
        %v5199 = vpop.f32.mrb[0].mxu0
        %5200 = vmatprep.mubr.bf16.mxu0 0
        %5201 = vmatmul.mubr.bf16.gmra.mrb[0].mxu0 %v5068
        %v5202 = vpop.f32.mrb[0].mxu0
        %v5203 = vadd.f32 %v5094, %v5202
        %v5204 = vpop.f32.mrb[0].mxu0
        %v5205 = vpop.f32.mrb[0].mxu0
        %v5206 = vadd.f32 %v5094, %v5205
        %v5207 = vpop.f32.mrb[0].mxu0
        %5208 = vmatprep.mubr.bf16.mxu0 0
        %5209 = vmatmul.mubr.bf16.gmra.mrb[0].mxu0 %v5069
        %v5210 = vpop.f32.mrb[0].mxu0
        %v5211 = vadd.f32 %v5094, %v5210
        %v5212 = vpop.f32.mrb[0].mxu0
        %v5213 = vpop.f32.mrb[0].mxu0
        %v5214 = vadd.f32 %v5094, %v5213
        %v5215 = vpop.f32.mrb[0].mxu0
        %5216 = vmatprep.mubr.bf16.mxu0 0
        %5217 = vmatmul.mubr.bf16.gmra.mrb[0].mxu0 %v5070
        %v5218 = vpop.f32.mrb[0].mxu0
        %v5219 = vadd.f32 %v5094, %v5218
        %v5220 = vpop.f32.mrb[0].mxu0
        %v5221 = vpop.f32.mrb[0].mxu0
        %v5222 = vadd.f32 %v5094, %v5221
        %v5223 = vpop.f32.mrb[0].mxu0
        %5224 = vmatprep.mubr.bf16.mxu0 0
        %5225 = vmatmul.mubr.bf16.gmra.mrb[0].mxu0 %v5071
        %v5226 = vpop.f32.mrb[0].mxu0
        %v5227 = vadd.f32 %v5094, %v5226
        %v5228 = vpop.f32.mrb[0].mxu0
        %v5229 = vpop.f32.mrb[0].mxu0
        %v5230 = vadd.f32 %v5094, %v5229
        %v5231 = vpop.f32.mrb[0].mxu0
        %5232 = vmatprep.mubr.bf16.mxu0 0
        %5233 = vmatmul.mubr.bf16.gmra.mrb[0].mxu0 %v5072
        %v5234 = vpop.f32.mrb[0].mxu0
        %v5235 = vadd.f32 %v5094, %v5234
        %v5236 = vpop.f32.mrb[0].mxu0
        %v5237 = vpop.f32.mrb[0].mxu0
        %v5238 = vadd.f32 %v5094, %v5237
        %v5239 = vpop.f32.mrb[0].mxu0
        %5240 = vdwg.mxu0
        %5241 = vst [vmem:[%s244] sm:$0xff] %v5179
        %5242 = vst [vmem:[%s244 + $0x8] sm:$0xff] %v5182
        %5243 = vst [vmem:[%s244 + $0x10] sm:$0xff] %v5187
        %5244 = vst [vmem:[%s244 + $0x18] sm:$0xff] %v5190
        %5245 = vst [vmem:[%s244 + $0x20] sm:$0xff] %v5195
        %5246 = vst [vmem:[%s244 + $0x28] sm:$0xff] %v5198
        %5247 = vst [vmem:[%s244 + $0x30] sm:$0xff] %v5203
        %5248 = vst [vmem:[%s244 + $0x38] sm:$0xff] %v5206
        %5249 = vst [vmem:[%s244 + $0x40] sm:$0xff] %v5211
        %5250 = vst [vmem:[%s244 + $0x48] sm:$0xff] %v5214
        %5251 = vst [vmem:[%s244 + $0x50] sm:$0xff] %v5219
        %5252 = vst [vmem:[%s244 + $0x58] sm:$0xff] %v5222
        %5253 = vst [vmem:[%s244 + $0x60] sm:$0xff] %v5227
        %5254 = vst [vmem:[%s244 + $0x68] sm:$0xff] %v5230
        %5255 = vst [vmem:[%s244 + $0x70] sm:$0xff] %v5235
        %5256 = vst [vmem:[%s244 + $0x78] sm:$0xff] %v5238
        %s5257 = sand.u32 %s119, 1
        %s5258 = scalar_lea.sflag [#allocation6], %s5257
        %s5259 = sand.u32 %s119, 1
        %s5260 = smul.addr %s5259, 128
        %s5261 = scalar_lea.vmem [#allocation10], %s5260
        // Predicated region
        $region49: #{tpu_custom_call.1} parent=35 // pred_check
          %p5262 = pneg %p129
        $region50: #{tpu_custom_call.1} parent=35 // pred_check_branch
          %5264 = sbr.rel (%p5262) target = $region52
        $region51: #{tpu_custom_call.1} parent=35 // pred_region
          %s5266 = ssub.s32 2048, 2048
          %5267 = vsyncadd %s5258, %s5266
          %s5268 = smul.addr %s22, 16
          %s5269 = smul.addr %s5268, 128
          %s5270 = scalar_lea.hbm %s4, %s5269
          %s5271 = sshll.u32 %s5261, 4
          %s5272 = int_to_ptr.vmem [resolvable:$true] %s5271
          %5277 = dma.vmem_to_hbm [thread:$0]  %s5272, 2048, %s5270, %s5258, 128, 128, 8
        $region52: #{tpu_custom_call.1} parent=35 // pred_fallthru
          _
      $region36: #{tpu_custom_call.1} parent=5 // pred_fallthru
        _
      %p5278 = scmp.le.s32.totalorder 2, %s17
      // Predicated region
      $region53: #{tpu_custom_call.1} parent=5 // pred_check
        %p5279 = pneg %p5278
      $region54: #{tpu_custom_call.1} parent=5 // pred_check_branch
        %5281 = sbr.rel (%p5279) target = $region56
      $region55: #{tpu_custom_call.1} parent=5 // pred_region
        %s5282 = ssub.s32 %s17, 2
        // Predicated region
        $region57: #{tpu_custom_call.1} parent=55 // pred_check
          %p5283 = pneg %p135
        $region58: #{tpu_custom_call.1} parent=55 // pred_check_branch
          %5285 = sbr.rel (%p5283) target = $region60
        $region59: #{tpu_custom_call.1} parent=55 // pred_region
          %s5286 = sand.u32 %s120, 1
          %s5287 = scalar_lea.sflag [#allocation6], %s5286
          %s5288 = sand.u32 %s120, 1
          %s5289 = smul.addr %s5288, 128
          %s5290 = scalar_lea.vmem [#allocation10], %s5289
          %5291 = dma.done %s5287, 2048
        $region60: #{tpu_custom_call.1} parent=55 // pred_fallthru
          _
      $region56: #{tpu_custom_call.1} parent=5 // pred_fallthru
        _
    $region6: #{tpu_custom_call.1} parent=1 // loop_footer
      %s21 = sadd.s32 1, %s17
    $region7: #{tpu_custom_call.1} parent=1 // loop_footer_branch
      %16 = sbr.rel target = $region3
    $region8: #{tpu_custom_call.1} parent=1 // loop_exit
      _
    %5292 = vsyncpa [#allocation5], 1
    %s5293 = scalar_lea.sflag [#allocation5], 1
    %5294 = vsyncpa %s5293, 1
    %5295 = vsyncpa [#allocation8], 1
    %5296 = vsyncpa [#allocation6], 1
    %s5297 = scalar_lea.sflag [#allocation6], 1
    %5298 = vsyncpa %s5297, 1

</llo_original>
